<compile_context>
chip_gen: v5e
topology: v5e:2x2
jax: 0.10.0
libtpu: 0.0.40
codegen_flags: <defaults>
</compile_context>

<pallas_src>
import functools

import numpy as np
import jax
import jax.numpy as jnp
from jax.experimental import pallas as pl
from jax.experimental.pallas import tpu as pltpu


# ----------------------------- fused Pallas kernel ---------------------------

def _dqn_fused_kernel(x_ref, band_ref, bc_ref, w1_ref, s1_ref, b1_ref,
                      w2_ref, b2_ref, w3_ref, b3_ref, o_ref,
                      conv_acc, conv_scr, acc_ref,
                      *, batch, oh, ow, cout, rows_per_chunk):
    """One grid step == one K-chunk (rows_per_chunk conv-output rows) of fc1.

    x_ref    : (3, OH*B, W*Cin)        bf16  dy-shifted image views, rows (h,b)
    band_ref : (3, W*Cin, OW*Cout)     bf16  banded conv weights (one per dy)
    bc_ref   : (1, OW*Cout)            f32   conv bias tiled over OW positions
    w1_ref   : (rows_per_chunk, OW*Cout, 128) int8  streamed fc1 K-chunk
    s1_ref   : (1, 128)                f32   per-output-column dequant scales
    b1/w2/b2/w3/b3                     f32   small dense layers (w3/b3 padded to 128)
    o_ref    : (B, 128)                f32   lane-dense padded output
    conv_acc : (OH*B, OW*Cout)         f32   conv accumulator (step-0 only)
    conv_scr : (n_chunks, rows_per_chunk*B, OW*Cout) bf16  conv act, VMEM resident
    acc_ref  : (B, 128)                f32   fc1 accumulator (unscaled)
    """
    n_chunks = oh // rows_per_chunk
    rb = rows_per_chunk * batch
    k = pl.program_id(0)

    # ---- step 0: full conv (3 banded bf16 matmuls) + bias + ReLU, kept in VMEM
    @pl.when(k == 0)
    def _():
        acc_ref[...] = jnp.zeros_like(acc_ref)
        conv_acc[...] = jnp.dot(x_ref[0], band_ref[0],
                                preferred_element_type=jnp.float32)
        conv_acc[...] += jnp.dot(x_ref[1], band_ref[1],
                                 preferred_element_type=jnp.float32)
        conv_acc[...] += jnp.dot(x_ref[2], band_ref[2],
                                 preferred_element_type=jnp.float32)
        conv_act = jnp.maximum(conv_acc[...] + bc_ref[...], 0.0
                               ).astype(jnp.bfloat16)               # (OH*B, OW*Cout)
        for n in range(n_chunks):
            conv_scr[n, :, :] = conv_act[n * rb:(n + 1) * rb, :]

    # ---- every step: accumulate this chunk's fc1 contribution ----------------
    # TODO(synk): with a lane-aligned activation layout the rows_per_chunk tiny
    # M=B dots could be merged into one wide-K dot; at OW*Cout=448 (not a
    # multiple of 128) the required re-layout costs more than it saves.
    chunk_act = conv_scr[k]                                         # (rb, OW*Cout) bf16
    fc1_part = jnp.zeros((batch, 128), jnp.float32)
    for r in range(rows_per_chunk):
        hb = chunk_act[r * batch:(r + 1) * batch, :]                # (B, OW*Cout) bf16
        # int8 -> f32 -> bf16 is exact for |q| <= 127; int8 only halves the HBM
        # stream, the MXU runs bf16 x bf16 with f32 accumulation.
        w_r = w1_ref[r].astype(jnp.float32).astype(jnp.bfloat16)    # (OW*Cout, 128)
        fc1_part = fc1_part + jnp.dot(hb, w_r,
                                      preferred_element_type=jnp.float32)
    acc_ref[...] += fc1_part

    # ---- last step: dequant scale -> fc2 -> ReLU -> fc3 ----------------------
    @pl.when(k == n_chunks - 1)
    def _():
        h1 = jnp.maximum(acc_ref[...] * s1_ref[...] + b1_ref[...], 0.0)
        h2 = jnp.maximum(
            jnp.dot(h1, w2_ref[...], preferred_element_type=jnp.float32)
            + b2_ref[...], 0.0)
        o_ref[...] = (
            jnp.dot(h2, w3_ref[...], preferred_element_type=jnp.float32)
            + b3_ref[...])


# ------------------------------ JAX wrapper ----------------------------------

def _pick_rows_per_chunk(oh):
    """fc1 K-chunk depth (== grid length), tuned per TPU generation."""
    try:
        kind = jax.devices()[0].device_kind.lower()
    except Exception:  # pragma: no cover - defensive, keep a safe default
        kind = ""
    if "v7" in kind or "7x" in kind:
        rpc = oh          # single grid step: per-step overhead > w1 DMA @ 3.2 TB/s
    elif "v5e" in kind or "v5 lite" in kind or "v5lite" in kind:
        rpc = 2           # more chunks -> overlap the w1 DMA @ ~0.82 TB/s
    else:
        rpc = 7           # v6e and default
    rpc = max(1, min(rpc, oh))
    while oh % rpc:
        rpc -= 1
    return rpc


def dqn_forward(x_nchw, kernel_params, *, num_actions, rows_per_chunk=None):
    band, bc_row, w1_q, s1_row, b1, w2, b2, w3p, b3p = kernel_params
    B, Cin, H, W = x_nchw.shape
    OH, OW = H - 2, W - 2
    Cout = band.shape[2] // OW
    if rows_per_chunk is None:
        rows_per_chunk = _pick_rows_per_chunk(OH)
    assert OH % rows_per_chunk == 0
    n_chunks = OH // rows_per_chunk

    # layout glue (tiny, ~10 KB): NCHW -> rows (h, b), cols (w, c); the three
    # dy-shifted views are pre-stacked so the kernel only does leading-index
    # loads (no non-tile-aligned sublane slices in step 0).
    x2d = jnp.transpose(x_nchw.astype(jnp.float32), (2, 0, 3, 1)).reshape(
        H * B, W * Cin)
    x3 = jnp.stack([x2d[dy * B: dy * B + OH * B, :] for dy in range(3)],
                   axis=0).astype(jnp.bfloat16)                     # (3, OH*B, W*Cin)

    kernel = functools.partial(
        _dqn_fused_kernel, batch=B, oh=OH, ow=OW, cout=Cout,
        rows_per_chunk=rows_per_chunk)

    out_padded = pl.pallas_call(
        kernel,
        out_shape=jax.ShapeDtypeStruct((B, 128), jnp.float32),
        grid_spec=pltpu.PrefetchScalarGridSpec(
            num_scalar_prefetch=0,
            grid=(n_chunks,),
            in_specs=[
                pl.BlockSpec((3, OH * B, W * Cin), lambda k: (0, 0, 0)),      # x (bf16)
                pl.BlockSpec((3, W * Cin, OW * Cout), lambda k: (0, 0, 0)),   # band (bf16)
                pl.BlockSpec((1, OW * Cout), lambda k: (0, 0)),               # conv bias
                pl.BlockSpec((rows_per_chunk, OW * Cout, 128),
                             lambda k: (k, 0, 0)),                            # w1 (int8, streamed)
                pl.BlockSpec((1, 128), lambda k: (0, 0)),                     # s1 (dequant scale)
                pl.BlockSpec((1, 128), lambda k: (0, 0)),                     # b1
                pl.BlockSpec((128, 64), lambda k: (0, 0)),                    # w2
                pl.BlockSpec((1, 64), lambda k: (0, 0)),                      # b2
                pl.BlockSpec((64, 128), lambda k: (0, 0)),                    # w3 (padded)
                pl.BlockSpec((1, 128), lambda k: (0, 0)),                     # b3 (padded)
            ],
            out_specs=pl.BlockSpec((B, 128), lambda k: (0, 0)),
            scratch_shapes=[
                pltpu.VMEM((OH * B, OW * Cout), jnp.float32),                 # conv accumulator
                pltpu.VMEM((n_chunks, rows_per_chunk * B, OW * Cout),
                           jnp.bfloat16),                                     # conv activation
                pltpu.VMEM((B, 128), jnp.float32),                            # fc1 accumulator
            ],
        ),
        compiler_params=pltpu.CompilerParams(
            # must stay sequential: scratch refs carry state across grid steps.
            dimension_semantics=("arbitrary",)),
    )(x3, band, bc_row, w1_q, s1_row, b1, w2, b2, w3p, b3p)

    return out_padded[:, :num_actions]


# --------------------------- parameter creation ------------------------------

def init_params(key, input_shape, num_actions):
    """Returns (torch_layout_params, kernel_layout_params)."""
    cin, H, W = input_shape
    OH, OW = H - 2, W - 2
    COUT = 32
    k = jax.random.split(key, 8)

    # torch-layout parameters (exact nn.Module shapes)
    wc_t = jax.random.normal(k[0], (COUT, cin, 3, 3), jnp.float32) * 0.05   # (O,I,kh,kw)
    bc_t = jax.random.normal(k[1], (COUT,), jnp.float32) * 0.05
    w1_t = jax.random.normal(k[2], (128, COUT * OH * OW), jnp.float32) * 0.02
    b1_t = jax.random.normal(k[3], (128,), jnp.float32) * 0.02
    w2_t = jax.random.normal(k[4], (64, 128), jnp.float32) * 0.05
    b2_t = jax.random.normal(k[5], (64,), jnp.float32) * 0.05
    w3_t = jax.random.normal(k[6], (num_actions, 64), jnp.float32) * 0.05
    b3_t = jax.random.normal(k[7], (num_actions,), jnp.float32) * 0.05
    torch_params = (wc_t, bc_t, w1_t, b1_t, w2_t, b2_t, w3_t, b3_t)

    # banded conv weights: band[dy, w_in*Cin + c, w*Cout + o] = wc_t[o, c, dy, w_in - w]
    wc_np = np.asarray(wc_t)
    band = np.zeros((3, W * cin, OW * COUT), np.float32)
    for dy in range(3):
        for dx in range(3):
            blk = wc_np[:, :, dy, dx].T                              # (cin, Cout)
            for w in range(OW):
                band[dy, (w + dx) * cin:(w + dx + 1) * cin,
                     w * COUT:(w + 1) * COUT] = blk
    band = jnp.asarray(band, jnp.bfloat16)                           # bf16 HBM stream
    bc_row = jnp.tile(bc_t.reshape(1, COUT), (1, OW))                # (1, OW*Cout) f32

    # fc1: torch flattens the conv output in (c, h, w) order; the kernel consumes
    # one (OW*Cout, 128) K-chunk per conv-output row h.  Stored int8 with a
    # per-output-column f32 scale (applied once to the finished f32 accumulator).
    w1_k = (jnp.transpose(w1_t.reshape(128, COUT, OH, OW), (2, 3, 1, 0))
            .reshape(OH, OW * COUT, 128))                            # (OH, OW*Cout, 128) f32
    s1 = jnp.maximum(jnp.max(jnp.abs(w1_k), axis=(0, 1)) / 127.0, 1e-12)   # (128,)
    w1_q = jnp.round(w1_k / s1).astype(jnp.int8)                     # (OH, OW*Cout, 128) int8
    s1_row = s1.reshape(1, 128).astype(jnp.float32)

    b1 = b1_t.reshape(1, 128)
    w2 = w2_t.T
    b2 = b2_t.reshape(1, 64)
    # fc3 zero-padded to 128 output lanes (lane-dense store); wrapper slices back.
    w3p = jnp.zeros((64, 128), jnp.float32).at[:, :num_actions].set(w3_t.T)
    b3p = jnp.zeros((1, 128), jnp.float32).at[0, :num_actions].set(b3_t)
    kernel_params = (band, bc_row, w1_q, s1_row, b1, w2, b2, w3p, b3p)
    return torch_params, kernel_params


# --------------------------- pure-JAX reference ------------------------------

def ref_forward(x_nchw, torch_params):
    wc_t, bc_t, w1_t, b1_t, w2_t, b2_t, w3_t, b3_t = torch_params
    y = jax.lax.conv_general_dilated(
        x_nchw.astype(jnp.float32), wc_t, (1, 1), 'VALID',
        dimension_numbers=('NCHW', 'OIHW', 'NCHW'))
    y = jax.nn.relu(y + bc_t.reshape(1, -1, 1, 1))
    y = y.reshape(y.shape[0], -1)                     # (C,H,W)-flatten, like torch
    y = jax.nn.relu(y @ w1_t.T + b1_t)
    y = jax.nn.relu(y @ w2_t.T + b2_t)
    return y @ w3_t.T + b3_t


# ----------------------------------- main ------------------------------------

if __name__ == "__main__":
    input_shape = (4, 16, 16)     # (C, H, W) as in the nn.Module ctor
    num_actions = 6
    batch = 2

    key = jax.random.PRNGKey(0)
    kx, kp = jax.random.split(key)
    x = jax.random.normal(kx, (batch,) + input_shape, jnp.float32)   # NCHW

    torch_params, kernel_params = init_params(kp, input_shape, num_actions)

    fwd = jax.jit(functools.partial(dqn_forward, num_actions=num_actions))
    out = jax.block_until_ready(fwd(x, kernel_params))

    ref = ref_forward(x, torch_params)
    assert out.shape == (batch, num_actions)
    # fc1 runs with int8 weights (per-column scales) + bf16 activations, conv in
    # bf16, all with f32 accumulation -> looser tolerance than pure f32.
    assert jnp.allclose(out, ref, atol=3e-2, rtol=3e-2), "mismatch vs reference"

    print("KERNEL_OK")
</pallas_src>

<mosaic_0001>
module attributes {stable_mosaic.version = 11 : i64} {
  func.func @_dqn_fused_kernel(%arg0: i32, %arg1: memref<3x28x64xbf16, #tpu.memory_space<vmem>>, %arg2: memref<3x64x448xbf16, #tpu.memory_space<vmem>>, %arg3: memref<1x448xf32, #tpu.memory_space<vmem>>, %arg4: memref<7x448x128xi8, #tpu.memory_space<vmem>>, %arg5: memref<1x128xf32, #tpu.memory_space<vmem>>, %arg6: memref<1x128xf32, #tpu.memory_space<vmem>>, %arg7: memref<128x64xf32, #tpu.memory_space<vmem>>, %arg8: memref<1x64xf32, #tpu.memory_space<vmem>>, %arg9: memref<64x128xf32, #tpu.memory_space<vmem>>, %arg10: memref<1x128xf32, #tpu.memory_space<vmem>>, %arg11: memref<2x128xf32, #tpu.memory_space<vmem>>, %arg12: memref<28x448xf32, #tpu.memory_space<vmem>>, %arg13: memref<2x14x448xbf16, #tpu.memory_space<vmem>>, %arg14: memref<2x128xf32, #tpu.memory_space<vmem>>) attributes {dimension_semantics = [#tpu.dimension_semantics<arbitrary>], iteration_bounds = array<i64: 2>, scalar_prefetch = 0 : i64, scratch_operands = 3 : i64, tpu.core_type = #tpu.core_type<tc>, window_params = [{pipeline_mode = #tpu.pipeline_mode<synchronous>, transform_indices = @transform_0, window_bounds = array<i64: 3, 28, 64>}, {pipeline_mode = #tpu.pipeline_mode<synchronous>, transform_indices = @transform_1, window_bounds = array<i64: 3, 64, 448>}, {pipeline_mode = #tpu.pipeline_mode<synchronous>, transform_indices = @transform_2, window_bounds = array<i64: 1, 448>}, {transform_indices = @transform_3, window_bounds = array<i64: 7, 448, 128>}, {pipeline_mode = #tpu.pipeline_mode<synchronous>, transform_indices = @transform_4, window_bounds = array<i64: 1, 128>}, {pipeline_mode = #tpu.pipeline_mode<synchronous>, transform_indices = @transform_5, window_bounds = array<i64: 1, 128>}, {pipeline_mode = #tpu.pipeline_mode<synchronous>, transform_indices = @transform_6, window_bounds = array<i64: 128, 64>}, {pipeline_mode = #tpu.pipeline_mode<synchronous>, transform_indices = @transform_7, window_bounds = array<i64: 1, 64>}, {pipeline_mode = #tpu.pipeline_mode<synchronous>, transform_indices = @transform_8, window_bounds = array<i64: 64, 128>}, {pipeline_mode = #tpu.pipeline_mode<synchronous>, transform_indices = @transform_9, window_bounds = array<i64: 1, 128>}, {pipeline_mode = #tpu.pipeline_mode<synchronous>, transform_indices = @transform_10, window_bounds = array<i64: 2, 128>}]} {
    %c0_i32 = arith.constant 0 : i32
    %0 = arith.cmpi eq, %arg0, %c0_i32 : i32
    %1 = arith.extui %0 : i1 to i32
    %c0_i32_0 = arith.constant 0 : i32
    %2 = arith.cmpi ne, %1, %c0_i32_0 : i32
    scf.if %2 {
      %cst_29 = arith.constant 0.000000e+00 : f32
      %62 = vector.broadcast %cst_29 : f32 to vector<2x128xf32>
      %c0_30 = arith.constant 0 : index
      %c0_31 = arith.constant 0 : index
      %63 = vector.load %arg14[%c0_30, %c0_31] : memref<2x128xf32, #tpu.memory_space<vmem>>, vector<2x128xf32>
      tpu.vector_store %arg14[%c0_30, %c0_31], %62 {strides = array<i32>} : memref<2x128xf32, #tpu.memory_space<vmem>>, vector<2x128xf32>,
      %c0_32 = arith.constant 0 : index
      %c0_33 = arith.constant 0 : index
      %c0_34 = arith.constant 0 : index
      %64 = vector.load %arg1[%c0_32, %c0_33, %c0_34] : memref<3x28x64xbf16, #tpu.memory_space<vmem>>, vector<1x28x64xbf16>
      %65 = vector.shape_cast %64 : vector<1x28x64xbf16> to vector<28x64xbf16>
      %c0_35 = arith.constant 0 : index
      %c0_36 = arith.constant 0 : index
      %c0_37 = arith.constant 0 : index
      %66 = vector.load %arg2[%c0_35, %c0_36, %c0_37] : memref<3x64x448xbf16, #tpu.memory_space<vmem>>, vector<1x64x448xbf16>
      %67 = vector.shape_cast %66 : vector<1x64x448xbf16> to vector<64x448xbf16>
      %cst_38 = arith.constant dense<0.000000e+00> : vector<28x448xf32>
      %68 = tpu.matmul %65, %67, %cst_38 {dimension_numbers = #tpu.dot_dimension_numbers<[1], [0], [0], [1], [0, 0, 1, 1], [], []>} : vector<28x64xbf16>, vector<64x448xbf16>, vector<28x448xf32> -> vector<28x448xf32>
      %c0_39 = arith.constant 0 : index
      %c0_40 = arith.constant 0 : index
      %69 = vector.load %arg12[%c0_39, %c0_40] : memref<28x448xf32, #tpu.memory_space<vmem>>, vector<28x448xf32>
      tpu.vector_store %arg12[%c0_39, %c0_40], %68 {strides = array<i32>} : memref<28x448xf32, #tpu.memory_space<vmem>>, vector<28x448xf32>,
      %c0_41 = arith.constant 0 : index
      %c0_42 = arith.constant 0 : index
      %70 = vector.load %arg12[%c0_41, %c0_42] : memref<28x448xf32, #tpu.memory_space<vmem>>, vector<28x448xf32>
      %c1_43 = arith.constant 1 : index
      %c0_44 = arith.constant 0 : index
      %c0_45 = arith.constant 0 : index
      %71 = vector.load %arg1[%c1_43, %c0_44, %c0_45] : memref<3x28x64xbf16, #tpu.memory_space<vmem>>, vector<1x28x64xbf16>
      %72 = vector.shape_cast %71 : vector<1x28x64xbf16> to vector<28x64xbf16>
      %c1_46 = arith.constant 1 : index
      %c0_47 = arith.constant 0 : index
      %c0_48 = arith.constant 0 : index
      %73 = vector.load %arg2[%c1_46, %c0_47, %c0_48] : memref<3x64x448xbf16, #tpu.memory_space<vmem>>, vector<1x64x448xbf16>
      %74 = vector.shape_cast %73 : vector<1x64x448xbf16> to vector<64x448xbf16>
      %cst_49 = arith.constant dense<0.000000e+00> : vector<28x448xf32>
      %75 = tpu.matmul %72, %74, %cst_49 {dimension_numbers = #tpu.dot_dimension_numbers<[1], [0], [0], [1], [0, 0, 1, 1], [], []>} : vector<28x64xbf16>, vector<64x448xbf16>, vector<28x448xf32> -> vector<28x448xf32>
      %76 = arith.addf %70, %75 : vector<28x448xf32>
      %c0_50 = arith.constant 0 : index
      %c0_51 = arith.constant 0 : index
      %77 = vector.load %arg12[%c0_50, %c0_51] : memref<28x448xf32, #tpu.memory_space<vmem>>, vector<28x448xf32>
      tpu.vector_store %arg12[%c0_50, %c0_51], %76 {strides = array<i32>} : memref<28x448xf32, #tpu.memory_space<vmem>>, vector<28x448xf32>,
      %c0_52 = arith.constant 0 : index
      %c0_53 = arith.constant 0 : index
      %78 = vector.load %arg12[%c0_52, %c0_53] : memref<28x448xf32, #tpu.memory_space<vmem>>, vector<28x448xf32>
      %c2_54 = arith.constant 2 : index
      %c0_55 = arith.constant 0 : index
      %c0_56 = arith.constant 0 : index
      %79 = vector.load %arg1[%c2_54, %c0_55, %c0_56] : memref<3x28x64xbf16, #tpu.memory_space<vmem>>, vector<1x28x64xbf16>
      %80 = vector.shape_cast %79 : vector<1x28x64xbf16> to vector<28x64xbf16>
      %c2_57 = arith.constant 2 : index
      %c0_58 = arith.constant 0 : index
      %c0_59 = arith.constant 0 : index
      %81 = vector.load %arg2[%c2_57, %c0_58, %c0_59] : memref<3x64x448xbf16, #tpu.memory_space<vmem>>, vector<1x64x448xbf16>
      %82 = vector.shape_cast %81 : vector<1x64x448xbf16> to vector<64x448xbf16>
      %cst_60 = arith.constant dense<0.000000e+00> : vector<28x448xf32>
      %83 = tpu.matmul %80, %82, %cst_60 {dimension_numbers = #tpu.dot_dimension_numbers<[1], [0], [0], [1], [0, 0, 1, 1], [], []>} : vector<28x64xbf16>, vector<64x448xbf16>, vector<28x448xf32> -> vector<28x448xf32>
      %84 = arith.addf %78, %83 : vector<28x448xf32>
      %c0_61 = arith.constant 0 : index
      %c0_62 = arith.constant 0 : index
      %85 = vector.load %arg12[%c0_61, %c0_62] : memref<28x448xf32, #tpu.memory_space<vmem>>, vector<28x448xf32>
      tpu.vector_store %arg12[%c0_61, %c0_62], %84 {strides = array<i32>} : memref<28x448xf32, #tpu.memory_space<vmem>>, vector<28x448xf32>,
      %c0_63 = arith.constant 0 : index
      %c0_64 = arith.constant 0 : index
      %86 = vector.load %arg12[%c0_63, %c0_64] : memref<28x448xf32, #tpu.memory_space<vmem>>, vector<28x448xf32>
      %c0_65 = arith.constant 0 : index
      %c0_66 = arith.constant 0 : index
      %87 = vector.load %arg3[%c0_65, %c0_66] : memref<1x448xf32, #tpu.memory_space<vmem>>, vector<1x448xf32>
      %88 = vector.broadcast %87 : vector<1x448xf32> to vector<28x448xf32>
      %89 = arith.addf %86, %88 : vector<28x448xf32>
      %cst_67 = arith.constant 0.000000e+00 : f32
      %90 = vector.broadcast %cst_67 : f32 to vector<28x448xf32>
      %91 = arith.maximumf %89, %90 : vector<28x448xf32>
      %92 = arith.truncf %91 : vector<28x448xf32> to vector<28x448xbf16>
      %93 = vector.extract_strided_slice %92 {offsets = [0, 0], sizes = [14, 448], strides = [1, 1]} : vector<28x448xbf16> to vector<14x448xbf16>
      %c0_68 = arith.constant 0 : index
      %c0_69 = arith.constant 0 : index
      %c0_70 = arith.constant 0 : index
      %94 = vector.load %arg13[%c0_68, %c0_69, %c0_70] : memref<2x14x448xbf16, #tpu.memory_space<vmem>>, vector<1x14x448xbf16>
      %95 = vector.shape_cast %94 : vector<1x14x448xbf16> to vector<14x448xbf16>
      %96 = vector.shape_cast %93 : vector<14x448xbf16> to vector<1x14x448xbf16>
      tpu.vector_store %arg13[%c0_68, %c0_69, %c0_70], %96 {strides = array<i32>} : memref<2x14x448xbf16, #tpu.memory_space<vmem>>, vector<1x14x448xbf16>,
      %97 = vector.extract_strided_slice %92 {offsets = [14, 0], sizes = [14, 448], strides = [1, 1]} : vector<28x448xbf16> to vector<14x448xbf16>
      %c1_71 = arith.constant 1 : index
      %c0_72 = arith.constant 0 : index
      %c0_73 = arith.constant 0 : index
      %98 = vector.load %arg13[%c1_71, %c0_72, %c0_73] : memref<2x14x448xbf16, #tpu.memory_space<vmem>>, vector<1x14x448xbf16>
      %99 = vector.shape_cast %98 : vector<1x14x448xbf16> to vector<14x448xbf16>
      %100 = vector.shape_cast %97 : vector<14x448xbf16> to vector<1x14x448xbf16>
      tpu.vector_store %arg13[%c1_71, %c0_72, %c0_73], %100 {strides = array<i32>} : memref<2x14x448xbf16, #tpu.memory_space<vmem>>, vector<1x14x448xbf16>,
    } else {
    }
    %3 = arith.index_cast %arg0 : i32 to index
    %c0 = arith.constant 0 : index
    %c0_1 = arith.constant 0 : index
    %4 = vector.load %arg13[%3, %c0, %c0_1] : memref<2x14x448xbf16, #tpu.memory_space<vmem>>, vector<1x14x448xbf16>
    %5 = vector.shape_cast %4 : vector<1x14x448xbf16> to vector<14x448xbf16>
    %cst = arith.constant 0.000000e+00 : f32
    %6 = vector.broadcast %cst : f32 to vector<2x128xf32>
    %7 = vector.extract_strided_slice %5 {offsets = [0, 0], sizes = [2, 448], strides = [1, 1]} : vector<14x448xbf16> to vector<2x448xbf16>
    %c0_2 = arith.constant 0 : index
    %c0_3 = arith.constant 0 : index
    %c0_4 = arith.constant 0 : index
    %8 = vector.load %arg4[%c0_2, %c0_3, %c0_4] : memref<7x448x128xi8, #tpu.memory_space<vmem>>, vector<1x448x128xi8>
    %9 = vector.shape_cast %8 : vector<1x448x128xi8> to vector<448x128xi8>
    %10 = arith.sitofp %9 : vector<448x128xi8> to vector<448x128xf32>
    %11 = arith.truncf %10 : vector<448x128xf32> to vector<448x128xbf16>
    %cst_5 = arith.constant dense<0.000000e+00> : vector<2x128xf32>
    %12 = tpu.matmul %7, %11, %cst_5 {dimension_numbers = #tpu.dot_dimension_numbers<[1], [0], [0], [1], [0, 0, 1, 1], [], []>} : vector<2x448xbf16>, vector<448x128xbf16>, vector<2x128xf32> -> vector<2x128xf32>
    %13 = arith.addf %6, %12 : vector<2x128xf32>
    %14 = vector.extract_strided_slice %5 {offsets = [2, 0], sizes = [2, 448], strides = [1, 1]} : vector<14x448xbf16> to vector<2x448xbf16>
    %c1 = arith.constant 1 : index
    %c0_6 = arith.constant 0 : index
    %c0_7 = arith.constant 0 : index
    %15 = vector.load %arg4[%c1, %c0_6, %c0_7] : memref<7x448x128xi8, #tpu.memory_space<vmem>>, vector<1x448x128xi8>
    %16 = vector.shape_cast %15 : vector<1x448x128xi8> to vector<448x128xi8>
    %17 = arith.sitofp %16 : vector<448x128xi8> to vector<448x128xf32>
    %18 = arith.truncf %17 : vector<448x128xf32> to vector<448x128xbf16>
    %cst_8 = arith.constant dense<0.000000e+00> : vector<2x128xf32>
    %19 = tpu.matmul %14, %18, %cst_8 {dimension_numbers = #tpu.dot_dimension_numbers<[1], [0], [0], [1], [0, 0, 1, 1], [], []>} : vector<2x448xbf16>, vector<448x128xbf16>, vector<2x128xf32> -> vector<2x128xf32>
    %20 = arith.addf %13, %19 : vector<2x128xf32>
    %21 = vector.extract_strided_slice %5 {offsets = [4, 0], sizes = [2, 448], strides = [1, 1]} : vector<14x448xbf16> to vector<2x448xbf16>
    %c2 = arith.constant 2 : index
    %c0_9 = arith.constant 0 : index
    %c0_10 = arith.constant 0 : index
    %22 = vector.load %arg4[%c2, %c0_9, %c0_10] : memref<7x448x128xi8, #tpu.memory_space<vmem>>, vector<1x448x128xi8>
    %23 = vector.shape_cast %22 : vector<1x448x128xi8> to vector<448x128xi8>
    %24 = arith.sitofp %23 : vector<448x128xi8> to vector<448x128xf32>
    %25 = arith.truncf %24 : vector<448x128xf32> to vector<448x128xbf16>
    %cst_11 = arith.constant dense<0.000000e+00> : vector<2x128xf32>
    %26 = tpu.matmul %21, %25, %cst_11 {dimension_numbers = #tpu.dot_dimension_numbers<[1], [0], [0], [1], [0, 0, 1, 1], [], []>} : vector<2x448xbf16>, vector<448x128xbf16>, vector<2x128xf32> -> vector<2x128xf32>
    %27 = arith.addf %20, %26 : vector<2x128xf32>
    %28 = vector.extract_strided_slice %5 {offsets = [6, 0], sizes = [2, 448], strides = [1, 1]} : vector<14x448xbf16> to vector<2x448xbf16>
    %c3 = arith.constant 3 : index
    %c0_12 = arith.constant 0 : index
    %c0_13 = arith.constant 0 : index
    %29 = vector.load %arg4[%c3, %c0_12, %c0_13] : memref<7x448x128xi8, #tpu.memory_space<vmem>>, vector<1x448x128xi8>
    %30 = vector.shape_cast %29 : vector<1x448x128xi8> to vector<448x128xi8>
    %31 = arith.sitofp %30 : vector<448x128xi8> to vector<448x128xf32>
    %32 = arith.truncf %31 : vector<448x128xf32> to vector<448x128xbf16>
    %cst_14 = arith.constant dense<0.000000e+00> : vector<2x128xf32>
    %33 = tpu.matmul %28, %32, %cst_14 {dimension_numbers = #tpu.dot_dimension_numbers<[1], [0], [0], [1], [0, 0, 1, 1], [], []>} : vector<2x448xbf16>, vector<448x128xbf16>, vector<2x128xf32> -> vector<2x128xf32>
    %34 = arith.addf %27, %33 : vector<2x128xf32>
    %35 = vector.extract_strided_slice %5 {offsets = [8, 0], sizes = [2, 448], strides = [1, 1]} : vector<14x448xbf16> to vector<2x448xbf16>
    %c4 = arith.constant 4 : index
    %c0_15 = arith.constant 0 : index
    %c0_16 = arith.constant 0 : index
    %36 = vector.load %arg4[%c4, %c0_15, %c0_16] : memref<7x448x128xi8, #tpu.memory_space<vmem>>, vector<1x448x128xi8>
    %37 = vector.shape_cast %36 : vector<1x448x128xi8> to vector<448x128xi8>
    %38 = arith.sitofp %37 : vector<448x128xi8> to vector<448x128xf32>
    %39 = arith.truncf %38 : vector<448x128xf32> to vector<448x128xbf16>
    %cst_17 = arith.constant dense<0.000000e+00> : vector<2x128xf32>
    %40 = tpu.matmul %35, %39, %cst_17 {dimension_numbers = #tpu.dot_dimension_numbers<[1], [0], [0], [1], [0, 0, 1, 1], [], []>} : vector<2x448xbf16>, vector<448x128xbf16>, vector<2x128xf32> -> vector<2x128xf32>
    %41 = arith.addf %34, %40 : vector<2x128xf32>
    %42 = vector.extract_strided_slice %5 {offsets = [10, 0], sizes = [2, 448], strides = [1, 1]} : vector<14x448xbf16> to vector<2x448xbf16>
    %c5 = arith.constant 5 : index
    %c0_18 = arith.constant 0 : index
    %c0_19 = arith.constant 0 : index
    %43 = vector.load %arg4[%c5, %c0_18, %c0_19] : memref<7x448x128xi8, #tpu.memory_space<vmem>>, vector<1x448x128xi8>
    %44 = vector.shape_cast %43 : vector<1x448x128xi8> to vector<448x128xi8>
    %45 = arith.sitofp %44 : vector<448x128xi8> to vector<448x128xf32>
    %46 = arith.truncf %45 : vector<448x128xf32> to vector<448x128xbf16>
    %cst_20 = arith.constant dense<0.000000e+00> : vector<2x128xf32>
    %47 = tpu.matmul %42, %46, %cst_20 {dimension_numbers = #tpu.dot_dimension_numbers<[1], [0], [0], [1], [0, 0, 1, 1], [], []>} : vector<2x448xbf16>, vector<448x128xbf16>, vector<2x128xf32> -> vector<2x128xf32>
    %48 = arith.addf %41, %47 : vector<2x128xf32>
    %49 = vector.extract_strided_slice %5 {offsets = [12, 0], sizes = [2, 448], strides = [1, 1]} : vector<14x448xbf16> to vector<2x448xbf16>
    %c6 = arith.constant 6 : index
    %c0_21 = arith.constant 0 : index
    %c0_22 = arith.constant 0 : index
    %50 = vector.load %arg4[%c6, %c0_21, %c0_22] : memref<7x448x128xi8, #tpu.memory_space<vmem>>, vector<1x448x128xi8>
    %51 = vector.shape_cast %50 : vector<1x448x128xi8> to vector<448x128xi8>
    %52 = arith.sitofp %51 : vector<448x128xi8> to vector<448x128xf32>
    %53 = arith.truncf %52 : vector<448x128xf32> to vector<448x128xbf16>
    %cst_23 = arith.constant dense<0.000000e+00> : vector<2x128xf32>
    %54 = tpu.matmul %49, %53, %cst_23 {dimension_numbers = #tpu.dot_dimension_numbers<[1], [0], [0], [1], [0, 0, 1, 1], [], []>} : vector<2x448xbf16>, vector<448x128xbf16>, vector<2x128xf32> -> vector<2x128xf32>
    %55 = arith.addf %48, %54 : vector<2x128xf32>
    %c0_24 = arith.constant 0 : index
    %c0_25 = arith.constant 0 : index
    %56 = vector.load %arg14[%c0_24, %c0_25] : memref<2x128xf32, #tpu.memory_space<vmem>>, vector<2x128xf32>
    %57 = arith.addf %56, %55 : vector<2x128xf32>
    %c0_26 = arith.constant 0 : index
    %c0_27 = arith.constant 0 : index
    %58 = vector.load %arg14[%c0_26, %c0_27] : memref<2x128xf32, #tpu.memory_space<vmem>>, vector<2x128xf32>
    tpu.vector_store %arg14[%c0_26, %c0_27], %57 {strides = array<i32>} : memref<2x128xf32, #tpu.memory_space<vmem>>, vector<2x128xf32>,
    %c1_i32 = arith.constant 1 : i32
    %59 = arith.cmpi eq, %arg0, %c1_i32 : i32
    %60 = arith.extui %59 : i1 to i32
    %c0_i32_28 = arith.constant 0 : i32
    %61 = arith.cmpi ne, %60, %c0_i32_28 : i32
    scf.if %61 {
      %c0_29 = arith.constant 0 : index
      %c0_30 = arith.constant 0 : index
      %62 = vector.load %arg14[%c0_29, %c0_30] : memref<2x128xf32, #tpu.memory_space<vmem>>, vector<2x128xf32>
      %c0_31 = arith.constant 0 : index
      %c0_32 = arith.constant 0 : index
      %63 = vector.load %arg5[%c0_31, %c0_32] : memref<1x128xf32, #tpu.memory_space<vmem>>, vector<1x128xf32>
      %64 = vector.broadcast %63 : vector<1x128xf32> to vector<2x128xf32>
      %65 = arith.mulf %62, %64 : vector<2x128xf32>
      %c0_33 = arith.constant 0 : index
      %c0_34 = arith.constant 0 : index
      %66 = vector.load %arg6[%c0_33, %c0_34] : memref<1x128xf32, #tpu.memory_space<vmem>>, vector<1x128xf32>
      %67 = vector.broadcast %66 : vector<1x128xf32> to vector<2x128xf32>
      %68 = arith.addf %65, %67 : vector<2x128xf32>
      %cst_35 = arith.constant 0.000000e+00 : f32
      %69 = vector.broadcast %cst_35 : f32 to vector<2x128xf32>
      %70 = arith.maximumf %68, %69 : vector<2x128xf32>
      %c0_36 = arith.constant 0 : index
      %c0_37 = arith.constant 0 : index
      %71 = vector.load %arg7[%c0_36, %c0_37] : memref<128x64xf32, #tpu.memory_space<vmem>>, vector<128x64xf32>
      %cst_38 = arith.constant dense<0.000000e+00> : vector<2x64xf32>
      %72 = tpu.matmul %70, %71, %cst_38 {dimension_numbers = #tpu.dot_dimension_numbers<[1], [0], [0], [1], [0, 0, 1, 1], [], []>} : vector<2x128xf32>, vector<128x64xf32>, vector<2x64xf32> -> vector<2x64xf32>
      %c0_39 = arith.constant 0 : index
      %c0_40 = arith.constant 0 : index
      %73 = vector.load %arg8[%c0_39, %c0_40] : memref<1x64xf32, #tpu.memory_space<vmem>>, vector<1x64xf32>
      %74 = vector.broadcast %73 : vector<1x64xf32> to vector<2x64xf32>
      %75 = arith.addf %72, %74 : vector<2x64xf32>
      %cst_41 = arith.constant 0.000000e+00 : f32
      %76 = vector.broadcast %cst_41 : f32 to vector<2x64xf32>
      %77 = arith.maximumf %75, %76 : vector<2x64xf32>
      %c0_42 = arith.constant 0 : index
      %c0_43 = arith.constant 0 : index
      %78 = vector.load %arg9[%c0_42, %c0_43] : memref<64x128xf32, #tpu.memory_space<vmem>>, vector<64x128xf32>
      %cst_44 = arith.constant dense<0.000000e+00> : vector<2x128xf32>
      %79 = tpu.matmul %77, %78, %cst_44 {dimension_numbers = #tpu.dot_dimension_numbers<[1], [0], [0], [1], [0, 0, 1, 1], [], []>} : vector<2x64xf32>, vector<64x128xf32>, vector<2x128xf32> -> vector<2x128xf32>
      %c0_45 = arith.constant 0 : index
      %c0_46 = arith.constant 0 : index
      %80 = vector.load %arg10[%c0_45, %c0_46] : memref<1x128xf32, #tpu.memory_space<vmem>>, vector<1x128xf32>
      %81 = vector.broadcast %80 : vector<1x128xf32> to vector<2x128xf32>
      %82 = arith.addf %79, %81 : vector<2x128xf32>
      %c0_47 = arith.constant 0 : index
      %c0_48 = arith.constant 0 : index
      %83 = vector.load %arg11[%c0_47, %c0_48] : memref<2x128xf32, #tpu.memory_space<vmem>>, vector<2x128xf32>
      tpu.vector_store %arg11[%c0_47, %c0_48], %82 {strides = array<i32>} : memref<2x128xf32, #tpu.memory_space<vmem>>, vector<2x128xf32>,
    } else {
    }
    return
  }
  func.func @transform_0(%arg0: i32) -> (i32, i32, i32) {
    %c0_i32 = arith.constant 0 : i32
    %c0_i32_0 = arith.constant 0 : i32
    %c0_i32_1 = arith.constant 0 : i32
    %c0_i32_2 = arith.constant 0 : i32
    return %c0_i32, %c0_i32_0, %c0_i32_1 : i32, i32, i32
  }
  func.func @transform_1(%arg0: i32) -> (i32, i32, i32) {
    %c0_i32 = arith.constant 0 : i32
    %c0_i32_0 = arith.constant 0 : i32
    %c0_i32_1 = arith.constant 0 : i32
    %c0_i32_2 = arith.constant 0 : i32
    return %c0_i32, %c0_i32_0, %c0_i32_1 : i32, i32, i32
  }
  func.func @transform_2(%arg0: i32) -> (i32, i32) {
    %c0_i32 = arith.constant 0 : i32
    %c0_i32_0 = arith.constant 0 : i32
    %c0_i32_1 = arith.constant 0 : i32
    return %c0_i32, %c0_i32_0 : i32, i32
  }
  func.func @transform_3(%arg0: i32) -> (i32, i32, i32) {
    %c0_i32 = arith.constant 0 : i32
    %c0_i32_0 = arith.constant 0 : i32
    %c0_i32_1 = arith.constant 0 : i32
    return %arg0, %c0_i32, %c0_i32_0 : i32, i32, i32
  }
  func.func @transform_4(%arg0: i32) -> (i32, i32) {
    %c0_i32 = arith.constant 0 : i32
    %c0_i32_0 = arith.constant 0 : i32
    %c0_i32_1 = arith.constant 0 : i32
    return %c0_i32, %c0_i32_0 : i32, i32
  }
  func.func @transform_5(%arg0: i32) -> (i32, i32) {
    %c0_i32 = arith.constant 0 : i32
    %c0_i32_0 = arith.constant 0 : i32
    %c0_i32_1 = arith.constant 0 : i32
    return %c0_i32, %c0_i32_0 : i32, i32
  }
  func.func @transform_6(%arg0: i32) -> (i32, i32) {
    %c0_i32 = arith.constant 0 : i32
    %c0_i32_0 = arith.constant 0 : i32
    %c0_i32_1 = arith.constant 0 : i32
    return %c0_i32, %c0_i32_0 : i32, i32
  }
  func.func @transform_7(%arg0: i32) -> (i32, i32) {
    %c0_i32 = arith.constant 0 : i32
    %c0_i32_0 = arith.constant 0 : i32
    %c0_i32_1 = arith.constant 0 : i32
    return %c0_i32, %c0_i32_0 : i32, i32
  }
  func.func @transform_8(%arg0: i32) -> (i32, i32) {
    %c0_i32 = arith.constant 0 : i32
    %c0_i32_0 = arith.constant 0 : i32
    %c0_i32_1 = arith.constant 0 : i32
    return %c0_i32, %c0_i32_0 : i32, i32
  }
  func.func @transform_9(%arg0: i32) -> (i32, i32) {
    %c0_i32 = arith.constant 0 : i32
    %c0_i32_0 = arith.constant 0 : i32
    %c0_i32_1 = arith.constant 0 : i32
    return %c0_i32, %c0_i32_0 : i32, i32
  }
  func.func @transform_10(%arg0: i32) -> (i32, i32) {
    %c0_i32 = arith.constant 0 : i32
    %c0_i32_0 = arith.constant 0 : i32
    %c0_i32_1 = arith.constant 0 : i32
    return %c0_i32, %c0_i32_0 : i32, i32
  }
}

</mosaic_0001>

<llo_original>
// kernel: dqn_forward.1
$region0: #{dqn_forward.1}
  #allocation0 [shape = 'u32[]', space=smem, size = 0x4, offset = 0x4, fixed_abs, tag = 'smem constant byte address 0x4 - core index']
  #allocation1 [shape = 'u32[72,128]{1,0:T(1,128)}', space=vmem, size = 0x9000, scoped, tag = 'internal scratch']
  #allocation2 [shape = 'f32[28,448]{1,0:T(8,128)}', space=vmem, size = 0x10000, scoped, tag = 'scratch operand']
  #allocation3 [shape = 'bf16[2,14,448]{2,1,0:T(8,128)(2,1)}', space=vmem, size = 0x8000, scoped, tag = 'scratch operand']
  #allocation4 [shape = 'f32[2,128]{1,0:T(2,128)}', space=vmem, size = 0x400, scoped, tag = 'scratch operand']
  %s0 = inlined_call_operand.vmem [shape: bf16[3,28,64], index: 0, kind: input, shape index: {}]
  %s1 = inlined_call_operand.vmem [shape: bf16[3,64,448], index: 1, kind: input, shape index: {}]
  %s2 = inlined_call_operand.vmem [shape: f32[1,448], index: 2, kind: input, shape index: {}]
  %s3 = inlined_call_operand.hbm [shape: s8[14,448,128], index: 3, kind: input, shape index: {}]
  %s4 = inlined_call_operand.vmem [shape: f32[1,128], index: 4, kind: input, shape index: {}]
  %s5 = inlined_call_operand.vmem [shape: f32[1,128], index: 5, kind: input, shape index: {}]
  %s6 = inlined_call_operand.vmem [shape: f32[128,64], index: 6, kind: input, shape index: {}]
  %s7 = inlined_call_operand.vmem [shape: f32[1,64], index: 7, kind: input, shape index: {}]
  %s8 = inlined_call_operand.vmem [shape: f32[64,128], index: 8, kind: input, shape index: {}]
  %s9 = inlined_call_operand.vmem [shape: f32[1,128], index: 9, kind: input, shape index: {}]
  %s10 = inlined_call_operand.hbm [shape: f32[2,128], index: 10, kind: output, shape index: {}]
  %s11 = sld [smem:[#allocation0]]
  $region85: #{dqn_forward.1} parent=0
    _
  %s13 = ssub.s32 1, %s11
  %s14 = scalar_select 0, %s13, %s11
  $region1: #{dqn_forward.1} parent=0
    #allocation5 [shape = 'u8[802816]{0}', space=vmem, size = 0xc4000, scoped, tag = 'input window, operand 3']
    #allocation6 [shape = 's32[2]{0}', space=sflag, size = 0x8, scoped, tag = 'scoped memory for dqn_forward.1']
    #allocation7 [shape = 's32[2]{0}', space=sflag, size = 0x8, scoped, tag = 'scoped memory for dqn_forward.1']
    #allocation8 [shape = 'u8[1024]{0}', space=vmem, size = 0x400, scoped, tag = 'output window, operand 0, single buffered']
    %15 = vsyncpa [#allocation6], 0
    %s16 = scalar_lea.sflag [#allocation6], 1
    %17 = vsyncpa %s16, 0
    %18 = vsyncpa [#allocation7], 0
    loop: start=0, step=1, limit=4
    $region2: #{dqn_forward.1} parent=1 // loop_pre_header
      _
    $region3: #{dqn_forward.1} parent=1 // loop_header
      %s20 = sphi 0, %s24
      %p21 = scmp.ge.s32.totalorder %s20, 4
      %s28 = sphi 0, %s28
      %s30 = sphi 0, %s28
      %s31 = sphi 0, %s30
      %s45 = sphi 0, %s31
      %s49 = sphi 0, %s49
      %s51 = sphi 0, %s49
      %s52 = sphi 0, %s51
      %s66 = sphi 0, %s52
      %s70 = sphi 0, %s70
      %s72 = sphi 0, %s70
      %s73 = sphi 0, %s72
      %s87 = sphi 0, %s73
      %s93 = sphi 0, %s95
      %s96 = sphi 0, %s93
      %s97 = sphi 0, %s96
      %s113 = sphi 0, %s97
      %s117 = sphi 0, %s117
      %s119 = sphi 0, %s117
      %s120 = sphi 0, %s119
      %s134 = sphi 0, %s120
      %s138 = sphi 0, %s138
      %s140 = sphi 0, %s138
      %s141 = sphi 0, %s140
      %s155 = sphi 0, %s141
      %s159 = sphi 0, %s159
      %s161 = sphi 0, %s159
      %s162 = sphi 0, %s161
      %s176 = sphi 0, %s162
      %s180 = sphi 0, %s180
      %s182 = sphi 0, %s180
      %s183 = sphi 0, %s182
      %s197 = sphi 0, %s183
      %s201 = sphi 0, %s201
      %s203 = sphi 0, %s201
      %s204 = sphi 0, %s203
      %s218 = sphi 0, %s204
      %s222 = sphi 0, %s222
      %s224 = sphi 0, %s222
      %s225 = sphi 0, %s224
      %s239 = sphi 0, %s225
      %s243 = sphi 0, %s243
      %s245 = sphi 0, %s243
      %s246 = sphi 0, %s245
      %s260 = sphi 0, %s246
    $region4: #{dqn_forward.1} parent=1 // loop_header_branch
      %23 = sbr.rel (%p21) target = $region8
    $region5: #{dqn_forward.1} parent=1 // loop_body
      %s25 = ssub.s32 %s20, 1
      %s26 = ssub.s32 %s20, 2
      %s27 = sadd.s32 %s20, 1
      %s29 = sadd.s32 %s28, 1
      %p32 = scmp.eq.s32.totalorder %s20, 1
      %p33 = scmp.ne.s32.totalorder %s28, %s30
      %p34 = scmp.eq.s32.totalorder %s20, 0
      %p35 = por %p33, %p34
      %p36 = scmp.ne.s32.totalorder %s28, %s30
      %p37 = scmp.eq.s32.totalorder %s25, 1
      %p38 = por %p36, %p37
      %p39 = scmp.ne.s32.totalorder %s30, %s31
      %p40 = scmp.eq.s32.totalorder %s25, 0
      %p41 = por %p39, %p40
      %p42 = scmp.ne.s32.totalorder %s30, %s31
      %p43 = scmp.eq.s32.totalorder %s26, 1
      %p44 = por %p42, %p43
      %p46 = scmp.ne.s32.totalorder %s31, %s45
      %p47 = scmp.eq.s32.totalorder %s26, 0
      %p48 = por %p46, %p47
      %s50 = sadd.s32 %s49, 1
      %p53 = scmp.eq.s32.totalorder %s20, 1
      %p54 = scmp.ne.s32.totalorder %s49, %s51
      %p55 = scmp.eq.s32.totalorder %s20, 0
      %p56 = por %p54, %p55
      %p57 = scmp.ne.s32.totalorder %s49, %s51
      %p58 = scmp.eq.s32.totalorder %s25, 1
      %p59 = por %p57, %p58
      %p60 = scmp.ne.s32.totalorder %s51, %s52
      %p61 = scmp.eq.s32.totalorder %s25, 0
      %p62 = por %p60, %p61
      %p63 = scmp.ne.s32.totalorder %s51, %s52
      %p64 = scmp.eq.s32.totalorder %s26, 1
      %p65 = por %p63, %p64
      %p67 = scmp.ne.s32.totalorder %s52, %s66
      %p68 = scmp.eq.s32.totalorder %s26, 0
      %p69 = por %p67, %p68
      %s71 = sadd.s32 %s70, 1
      %p74 = scmp.eq.s32.totalorder %s20, 1
      %p75 = scmp.ne.s32.totalorder %s70, %s72
      %p76 = scmp.eq.s32.totalorder %s20, 0
      %p77 = por %p75, %p76
      %p78 = scmp.ne.s32.totalorder %s70, %s72
      %p79 = scmp.eq.s32.totalorder %s25, 1
      %p80 = por %p78, %p79
      %p81 = scmp.ne.s32.totalorder %s72, %s73
      %p82 = scmp.eq.s32.totalorder %s25, 0
      %p83 = por %p81, %p82
      %p84 = scmp.ne.s32.totalorder %s72, %s73
      %p85 = scmp.eq.s32.totalorder %s26, 1
      %p86 = por %p84, %p85
      %p88 = scmp.ne.s32.totalorder %s73, %s87
      %p89 = scmp.eq.s32.totalorder %s26, 0
      %p90 = por %p88, %p89
      %s91 = ssub.s32 %s20, %s27
      %p92 = scmp.eq.s32.totalorder %s91, 0
      %s94 = sadd.s32 %s93, 1
      %s95 = scalar_select %p92, %s93, %s94
      %p98 = pneg %p92
      %p99 = scmp.eq.s32.totalorder %s20, 1
      %p100 = por %p98, %p99
      %p101 = scmp.ne.s32.totalorder %s93, %s96
      %p102 = scmp.eq.s32.totalorder %s20, 0
      %p103 = por %p101, %p102
      %p104 = scmp.ne.s32.totalorder %s93, %s96
      %p105 = scmp.eq.s32.totalorder %s25, 1
      %p106 = por %p104, %p105
      %p107 = scmp.ne.s32.totalorder %s96, %s97
      %p108 = scmp.eq.s32.totalorder %s25, 0
      %p109 = por %p107, %p108
      %p110 = scmp.ne.s32.totalorder %s96, %s97
      %p111 = scmp.eq.s32.totalorder %s26, 1
      %p112 = por %p110, %p111
      %p114 = scmp.ne.s32.totalorder %s97, %s113
      %p115 = scmp.eq.s32.totalorder %s26, 0
      %p116 = por %p114, %p115
      %s118 = sadd.s32 %s117, 1
      %p121 = scmp.eq.s32.totalorder %s20, 1
      %p122 = scmp.ne.s32.totalorder %s117, %s119
      %p123 = scmp.eq.s32.totalorder %s20, 0
      %p124 = por %p122, %p123
      %p125 = scmp.ne.s32.totalorder %s117, %s119
      %p126 = scmp.eq.s32.totalorder %s25, 1
      %p127 = por %p125, %p126
      %p128 = scmp.ne.s32.totalorder %s119, %s120
      %p129 = scmp.eq.s32.totalorder %s25, 0
      %p130 = por %p128, %p129
      %p131 = scmp.ne.s32.totalorder %s119, %s120
      %p132 = scmp.eq.s32.totalorder %s26, 1
      %p133 = por %p131, %p132
      %p135 = scmp.ne.s32.totalorder %s120, %s134
      %p136 = scmp.eq.s32.totalorder %s26, 0
      %p137 = por %p135, %p136
      %s139 = sadd.s32 %s138, 1
      %p142 = scmp.eq.s32.totalorder %s20, 1
      %p143 = scmp.ne.s32.totalorder %s138, %s140
      %p144 = scmp.eq.s32.totalorder %s20, 0
      %p145 = por %p143, %p144
      %p146 = scmp.ne.s32.totalorder %s138, %s140
      %p147 = scmp.eq.s32.totalorder %s25, 1
      %p148 = por %p146, %p147
      %p149 = scmp.ne.s32.totalorder %s140, %s141
      %p150 = scmp.eq.s32.totalorder %s25, 0
      %p151 = por %p149, %p150
      %p152 = scmp.ne.s32.totalorder %s140, %s141
      %p153 = scmp.eq.s32.totalorder %s26, 1
      %p154 = por %p152, %p153
      %p156 = scmp.ne.s32.totalorder %s141, %s155
      %p157 = scmp.eq.s32.totalorder %s26, 0
      %p158 = por %p156, %p157
      %s160 = sadd.s32 %s159, 1
      %p163 = scmp.eq.s32.totalorder %s20, 1
      %p164 = scmp.ne.s32.totalorder %s159, %s161
      %p165 = scmp.eq.s32.totalorder %s20, 0
      %p166 = por %p164, %p165
      %p167 = scmp.ne.s32.totalorder %s159, %s161
      %p168 = scmp.eq.s32.totalorder %s25, 1
      %p169 = por %p167, %p168
      %p170 = scmp.ne.s32.totalorder %s161, %s162
      %p171 = scmp.eq.s32.totalorder %s25, 0
      %p172 = por %p170, %p171
      %p173 = scmp.ne.s32.totalorder %s161, %s162
      %p174 = scmp.eq.s32.totalorder %s26, 1
      %p175 = por %p173, %p174
      %p177 = scmp.ne.s32.totalorder %s162, %s176
      %p178 = scmp.eq.s32.totalorder %s26, 0
      %p179 = por %p177, %p178
      %s181 = sadd.s32 %s180, 1
      %p184 = scmp.eq.s32.totalorder %s20, 1
      %p185 = scmp.ne.s32.totalorder %s180, %s182
      %p186 = scmp.eq.s32.totalorder %s20, 0
      %p187 = por %p185, %p186
      %p188 = scmp.ne.s32.totalorder %s180, %s182
      %p189 = scmp.eq.s32.totalorder %s25, 1
      %p190 = por %p188, %p189
      %p191 = scmp.ne.s32.totalorder %s182, %s183
      %p192 = scmp.eq.s32.totalorder %s25, 0
      %p193 = por %p191, %p192
      %p194 = scmp.ne.s32.totalorder %s182, %s183
      %p195 = scmp.eq.s32.totalorder %s26, 1
      %p196 = por %p194, %p195
      %p198 = scmp.ne.s32.totalorder %s183, %s197
      %p199 = scmp.eq.s32.totalorder %s26, 0
      %p200 = por %p198, %p199
      %s202 = sadd.s32 %s201, 1
      %p205 = scmp.eq.s32.totalorder %s20, 1
      %p206 = scmp.ne.s32.totalorder %s201, %s203
      %p207 = scmp.eq.s32.totalorder %s20, 0
      %p208 = por %p206, %p207
      %p209 = scmp.ne.s32.totalorder %s201, %s203
      %p210 = scmp.eq.s32.totalorder %s25, 1
      %p211 = por %p209, %p210
      %p212 = scmp.ne.s32.totalorder %s203, %s204
      %p213 = scmp.eq.s32.totalorder %s25, 0
      %p214 = por %p212, %p213
      %p215 = scmp.ne.s32.totalorder %s203, %s204
      %p216 = scmp.eq.s32.totalorder %s26, 1
      %p217 = por %p215, %p216
      %p219 = scmp.ne.s32.totalorder %s204, %s218
      %p220 = scmp.eq.s32.totalorder %s26, 0
      %p221 = por %p219, %p220
      %s223 = sadd.s32 %s222, 1
      %p226 = scmp.eq.s32.totalorder %s20, 1
      %p227 = scmp.ne.s32.totalorder %s222, %s224
      %p228 = scmp.eq.s32.totalorder %s20, 0
      %p229 = por %p227, %p228
      %p230 = scmp.ne.s32.totalorder %s222, %s224
      %p231 = scmp.eq.s32.totalorder %s25, 1
      %p232 = por %p230, %p231
      %p233 = scmp.ne.s32.totalorder %s224, %s225
      %p234 = scmp.eq.s32.totalorder %s25, 0
      %p235 = por %p233, %p234
      %p236 = scmp.ne.s32.totalorder %s224, %s225
      %p237 = scmp.eq.s32.totalorder %s26, 1
      %p238 = por %p236, %p237
      %p240 = scmp.ne.s32.totalorder %s225, %s239
      %p241 = scmp.eq.s32.totalorder %s26, 0
      %p242 = por %p240, %p241
      %s244 = sadd.s32 %s243, 1
      %p247 = scmp.eq.s32.totalorder %s20, 1
      %p248 = scmp.ne.s32.totalorder %s243, %s245
      %p249 = scmp.eq.s32.totalorder %s20, 0
      %p250 = por %p248, %p249
      %p251 = scmp.ne.s32.totalorder %s243, %s245
      %p252 = scmp.eq.s32.totalorder %s25, 1
      %p253 = por %p251, %p252
      %p254 = scmp.ne.s32.totalorder %s245, %s246
      %p255 = scmp.eq.s32.totalorder %s25, 0
      %p256 = por %p254, %p255
      %p257 = scmp.ne.s32.totalorder %s245, %s246
      %p258 = scmp.eq.s32.totalorder %s26, 1
      %p259 = por %p257, %p258
      %p261 = scmp.ne.s32.totalorder %s246, %s260
      %p262 = scmp.eq.s32.totalorder %s26, 0
      %p263 = por %p261, %p262
      %p264 = scmp.le.s32.totalorder 1, %s20
      %p265 = scmp.lt.s32.totalorder %s20, 3
      %p266 = pnand %p264, %p265
      %p267 = pneg %p266
      // Predicated region
      $region9: #{dqn_forward.1} parent=5 // pred_check
        _
      $region10: #{dqn_forward.1} parent=5 // pred_check_branch
        %269 = sbr.rel (%p266) target = $region12
      $region11: #{dqn_forward.1} parent=5 // pred_region
        %s270 = ssub.s32 %s20, 1
        // Predicated region
        $region13: #{dqn_forward.1} parent=11 // pred_check
          %p271 = pneg %p41
        $region14: #{dqn_forward.1} parent=11 // pred_check_branch
          %273 = sbr.rel (%p271) target = $region16
        $region15: #{dqn_forward.1} parent=11 // pred_region
          _
        $region16: #{dqn_forward.1} parent=11 // pred_fallthru
          _
        // Predicated region
        $region17: #{dqn_forward.1} parent=11 // pred_check
          %p274 = pneg %p62
        $region18: #{dqn_forward.1} parent=11 // pred_check_branch
          %276 = sbr.rel (%p274) target = $region20
        $region19: #{dqn_forward.1} parent=11 // pred_region
          _
        $region20: #{dqn_forward.1} parent=11 // pred_fallthru
          _
        // Predicated region
        $region21: #{dqn_forward.1} parent=11 // pred_check
          %p277 = pneg %p83
        $region22: #{dqn_forward.1} parent=11 // pred_check_branch
          %279 = sbr.rel (%p277) target = $region24
        $region23: #{dqn_forward.1} parent=11 // pred_region
          _
        $region24: #{dqn_forward.1} parent=11 // pred_fallthru
          _
        // Predicated region
        $region25: #{dqn_forward.1} parent=11 // pred_check
          %p280 = pneg %p130
        $region26: #{dqn_forward.1} parent=11 // pred_check_branch
          %282 = sbr.rel (%p280) target = $region28
        $region27: #{dqn_forward.1} parent=11 // pred_region
          _
        $region28: #{dqn_forward.1} parent=11 // pred_fallthru
          _
        // Predicated region
        $region29: #{dqn_forward.1} parent=11 // pred_check
          %p283 = pneg %p151
        $region30: #{dqn_forward.1} parent=11 // pred_check_branch
          %285 = sbr.rel (%p283) target = $region32
        $region31: #{dqn_forward.1} parent=11 // pred_region
          _
        $region32: #{dqn_forward.1} parent=11 // pred_fallthru
          _
        // Predicated region
        $region33: #{dqn_forward.1} parent=11 // pred_check
          %p286 = pneg %p172
        $region34: #{dqn_forward.1} parent=11 // pred_check_branch
          %288 = sbr.rel (%p286) target = $region36
        $region35: #{dqn_forward.1} parent=11 // pred_region
          _
        $region36: #{dqn_forward.1} parent=11 // pred_fallthru
          _
        // Predicated region
        $region37: #{dqn_forward.1} parent=11 // pred_check
          %p289 = pneg %p193
        $region38: #{dqn_forward.1} parent=11 // pred_check_branch
          %291 = sbr.rel (%p289) target = $region40
        $region39: #{dqn_forward.1} parent=11 // pred_region
          _
        $region40: #{dqn_forward.1} parent=11 // pred_fallthru
          _
        // Predicated region
        $region41: #{dqn_forward.1} parent=11 // pred_check
          %p292 = pneg %p214
        $region42: #{dqn_forward.1} parent=11 // pred_check_branch
          %294 = sbr.rel (%p292) target = $region44
        $region43: #{dqn_forward.1} parent=11 // pred_region
          _
        $region44: #{dqn_forward.1} parent=11 // pred_fallthru
          _
        // Predicated region
        $region45: #{dqn_forward.1} parent=11 // pred_check
          %p295 = pneg %p235
        $region46: #{dqn_forward.1} parent=11 // pred_check_branch
          %297 = sbr.rel (%p295) target = $region48
        $region47: #{dqn_forward.1} parent=11 // pred_region
          _
        $region48: #{dqn_forward.1} parent=11 // pred_fallthru
          _
      $region12: #{dqn_forward.1} parent=5 // pred_fallthru
        _
      %p298 = scmp.lt.s32.totalorder %s20, 2
      // Predicated region
      $region49: #{dqn_forward.1} parent=5 // pred_check
        %p299 = pneg %p298
      $region50: #{dqn_forward.1} parent=5 // pred_check_branch
        %301 = sbr.rel (%p299) target = $region52
      $region51: #{dqn_forward.1} parent=5 // pred_region
        // Predicated region
        $region53: #{dqn_forward.1} parent=51 // pred_check
          %p302 = pneg %p103
        $region54: #{dqn_forward.1} parent=51 // pred_check_branch
          %304 = sbr.rel (%p302) target = $region56
        $region55: #{dqn_forward.1} parent=51 // pred_region
          %s305 = sand.u32 %s93, 1
          %s306 = scalar_lea.sflag [#allocation6], %s305
          %s307 = sand.u32 %s93, 1
          %s308 = smul.addr %s307, 784
          %s309 = scalar_lea.vmem [#allocation5], %s308
          %s310 = smul.u32 7, %s20
          %312 = vsyncadd %s306, 0
          %s313 = smul.addr %s310, 14
          %s314 = smul.addr %s313, 8
          %s315 = scalar_lea.hbm %s3, %s314
          %s316 = sshll.u32 %s315, 4
          %s317 = int_to_ptr.hbm [resolvable:$true] %s316
          %s318 = sshll.u32 %s309, 4
          %s319 = int_to_ptr.vmem [resolvable:$true] %s318
          %324 = dma.hbm_to_vmem [thread:$0]  %s317, 12544, %s319, %s306, 128, 128, 8
        $region56: #{dqn_forward.1} parent=51 // pred_fallthru
          _
      $region52: #{dqn_forward.1} parent=5 // pred_fallthru
        _
      %p325 = scmp.le.s32.totalorder 1, %s20
      %p326 = scmp.lt.s32.totalorder %s20, 3
      %p327 = pnand %p325, %p326
      %p328 = pneg %p327
      // Predicated region
      $region57: #{dqn_forward.1} parent=5 // pred_check
        _
      $region58: #{dqn_forward.1} parent=5 // pred_check_branch
        %330 = sbr.rel (%p327) target = $region60
      $region59: #{dqn_forward.1} parent=5 // pred_region
        %s331 = ssub.s32 %s20, 1
        %s332 = sand.u32 %s96, 1
        %s333 = scalar_lea.sflag [#allocation6], %s332
        %s334 = sand.u32 %s96, 1
        %s335 = smul.addr %s334, 784
        %s336 = scalar_lea.vmem [#allocation5], %s335
        // Predicated region
        $region61: #{dqn_forward.1} parent=59 // pred_check
          %p337 = pneg %p109
        $region62: #{dqn_forward.1} parent=59 // pred_check_branch
          %339 = sbr.rel (%p337) target = $region64
        $region63: #{dqn_forward.1} parent=59 // pred_region
          %341 = dma.done %s333, 12544
        $region64: #{dqn_forward.1} parent=59 // pred_fallthru
          _
        %p342 = pneg %p41
        %p343 = pneg %p38
        %p344 = pneg %p62
        %p345 = pneg %p59
        %p346 = pneg %p83
        %p347 = pneg %p80
        %s348 = sand.u32 %s96, 1
        %s349 = scalar_lea.sflag [#allocation6], %s348
        %s350 = sand.u32 %s96, 1
        %s351 = smul.addr %s350, 784
        %s352 = scalar_lea.vmem [#allocation5], %s351
        %p353 = pneg %p109
        %p354 = pneg %p106
        %p355 = pneg %p130
        %p356 = pneg %p127
        %p357 = pneg %p151
        %p358 = pneg %p148
        %p359 = pneg %p172
        %p360 = pneg %p169
        %p361 = pneg %p193
        %p362 = pneg %p190
        %p363 = pneg %p214
        %p364 = pneg %p211
        %p365 = pneg %p235
        %p366 = pneg %p232
        %p367 = pneg %p256
        %p368 = pneg %p253
        %s369 = smul.u32 7, %s25
        %p371 = scmp.eq.s32.totalorder %s25, 0
        // Predicated region
        $region65: #{dqn_forward.1} parent=59 // pred_check
          %p372 = pneg %p371
        $region66: #{dqn_forward.1} parent=59 // pred_check_branch
          %374 = sbr.rel (%p372) target = $region68
        $region67: #{dqn_forward.1} parent=59 // pred_region
          %375 = vst [vmem:[#allocation4] sm:$0x3] 0.0
          %v376 = vld [vmem:[%s0] sm:$0xf]
          %v377 = vld [vmem:[%s0 + $0x4] sm:$0xf]
          %v378 = vld [vmem:[%s0 + $0x8] sm:$0xf]
          %v379 = vld [vmem:[%s0 + $0xc] sm:$0x3]
          %v380 = vld [vmem:[%s1] sm:$0xff]
          %v381 = vld [vmem:[%s1 + $0x8] sm:$0xff]
          %v382 = vld [vmem:[%s1 + $0x10] sm:$0xff]
          %v383 = vld [vmem:[%s1 + $0x18] sm:$0xff]
          %v384 = vld [vmem:[%s1 + $0x20] sm:$0xff]
          %v385 = vld [vmem:[%s1 + $0x28] sm:$0xff]
          %v386 = vld [vmem:[%s1 + $0x30] sm:$0xff]
          %v387 = vld [vmem:[%s1 + $0x38] sm:$0xff]
          %v388 = vld [vmem:[%s1 + $0x40] sm:$0xff]
          %v389 = vld [vmem:[%s1 + $0x48] sm:$0xff]
          %v390 = vld [vmem:[%s1 + $0x50] sm:$0xff]
          %v391 = vld [vmem:[%s1 + $0x58] sm:$0xff]
          %v392 = vld [vmem:[%s1 + $0x60] sm:$0xff]
          %v393 = vld [vmem:[%s1 + $0x68] sm:$0xff]
          %v394 = vld [vmem:[%s1 + $0x70] sm:$0xff]
          %v395 = vld [vmem:[%s1 + $0x78] sm:$0xff]
          %v400 = vunpack.c.l.b16 %v376
          %v401 = vunpack.c.l.b16 %v377
          %v402 = vunpack.c.l.b16 %v378
          %v403 = vunpack.c.l.b16 %v379
          %v404 = vpack.c.b16 %v401, %v400
          %v405 = vpack.c.b16 %v403, %v402
          %v422 = vunpack.c.l.b16 %v380
          %v423 = vunpack.c.h.b16 %v380
          %v424 = vunpack.c.l.b16 %v381
          %v425 = vunpack.c.h.b16 %v381
          %v426 = vunpack.c.l.b16 %v382
          %v427 = vunpack.c.h.b16 %v382
          %v428 = vunpack.c.l.b16 %v383
          %v429 = vunpack.c.h.b16 %v383
          %v430 = vunpack.c.l.b16 %v384
          %v431 = vunpack.c.h.b16 %v384
          %v432 = vunpack.c.l.b16 %v385
          %v433 = vunpack.c.h.b16 %v385
          %v434 = vunpack.c.l.b16 %v386
          %v435 = vunpack.c.h.b16 %v386
          %v436 = vunpack.c.l.b16 %v387
          %v437 = vunpack.c.h.b16 %v387
          %v438 = vunpack.c.l.b16 %v388
          %v439 = vunpack.c.h.b16 %v388
          %v440 = vunpack.c.l.b16 %v389
          %v441 = vunpack.c.h.b16 %v389
          %v442 = vunpack.c.l.b16 %v390
          %v443 = vunpack.c.h.b16 %v390
          %v444 = vunpack.c.l.b16 %v391
          %v445 = vunpack.c.h.b16 %v391
          %v446 = vunpack.c.l.b16 %v392
          %v447 = vunpack.c.h.b16 %v392
          %v448 = vunpack.c.l.b16 %v393
          %v449 = vunpack.c.h.b16 %v393
          %v450 = vunpack.c.l.b16 %v394
          %v451 = vunpack.c.h.b16 %v394
          %v452 = vunpack.c.l.b16 %v395
          %v453 = vunpack.c.h.b16 %v395
          %v454 = vpack.c.b16 %v426, %v422
          %v455 = vpack.c.b16 %v427, %v423
          %v456 = vpack.c.b16 %v428, %v424
          %v457 = vpack.c.b16 %v429, %v425
          %v458 = vpack.c.b16 %v434, %v430
          %v459 = vpack.c.b16 %v435, %v431
          %v460 = vpack.c.b16 %v436, %v432
          %v461 = vpack.c.b16 %v437, %v433
          %v462 = vpack.c.b16 %v442, %v438
          %v463 = vpack.c.b16 %v443, %v439
          %v464 = vpack.c.b16 %v444, %v440
          %v465 = vpack.c.b16 %v445, %v441
          %v466 = vpack.c.b16 %v450, %v446
          %v467 = vpack.c.b16 %v451, %v447
          %v468 = vpack.c.b16 %v452, %v448
          %v469 = vpack.c.b16 %v453, %v449
          %vm486 = vcmask 523264
          %v488 = vsel %vm486, %v404, 0
          %v491 = vsel %vm486, %v405, 0
          %493 = vmatpush.bf16.msra.mxu0 0
          %494 = vmatpush.bf16.msra.mxu0 0
          %495 = vmatpush.bf16.msra.mxu0 0
          %496 = vmatpush.bf16.msra.mxu0 0
          %497 = vmatpush.bf16.msra.mxu0 %v466
          %498 = vmatpush.bf16.msra.mxu0 %v462
          %499 = vmatpush.bf16.msra.mxu0 %v458
          %500 = vmatpush.bf16.msra.mxu0 %v454
          %501 = vmatmul.bf16.gmra.mxu0 %v488
          %v502 = vpop.f32.mrf.mxu0
          %v503 = vadd.f32 0.0, %v502
          %v504 = vpop.f32.mrf.mxu0
          %v505 = vadd.f32 0.0, %v504
          %506 = vmatmul.bf16.gmra.mxu0 %v491
          %v507 = vpop.f32.mrf.mxu0
          %v508 = vadd.f32 0.0, %v507
          %v509 = vpop.f32.mrf.mxu0
          %v510 = vadd.f32 0.0, %v509
          %511 = vdwg.mxu0
          %512 = vmatpush.bf16.msra.mxu0 0
          %513 = vmatpush.bf16.msra.mxu0 0
          %514 = vmatpush.bf16.msra.mxu0 0
          %515 = vmatpush.bf16.msra.mxu0 0
          %516 = vmatpush.bf16.msra.mxu0 %v467
          %517 = vmatpush.bf16.msra.mxu0 %v463
          %518 = vmatpush.bf16.msra.mxu0 %v459
          %519 = vmatpush.bf16.msra.mxu0 %v455
          %520 = vmatmul.bf16.gmra.mxu0 %v488
          %v521 = vpop.f32.mrf.mxu0
          %v522 = vadd.f32 0.0, %v521
          %v523 = vpop.f32.mrf.mxu0
          %v524 = vadd.f32 0.0, %v523
          %525 = vmatmul.bf16.gmra.mxu0 %v491
          %v526 = vpop.f32.mrf.mxu0
          %v527 = vadd.f32 0.0, %v526
          %v528 = vpop.f32.mrf.mxu0
          %v529 = vadd.f32 0.0, %v528
          %530 = vdwg.mxu0
          %531 = vmatpush.bf16.msra.mxu0 0
          %532 = vmatpush.bf16.msra.mxu0 0
          %533 = vmatpush.bf16.msra.mxu0 0
          %534 = vmatpush.bf16.msra.mxu0 0
          %535 = vmatpush.bf16.msra.mxu0 %v468
          %536 = vmatpush.bf16.msra.mxu0 %v464
          %537 = vmatpush.bf16.msra.mxu0 %v460
          %538 = vmatpush.bf16.msra.mxu0 %v456
          %539 = vmatmul.bf16.gmra.mxu0 %v488
          %v540 = vpop.f32.mrf.mxu0
          %v541 = vadd.f32 0.0, %v540
          %v542 = vpop.f32.mrf.mxu0
          %v543 = vadd.f32 0.0, %v542
          %544 = vmatmul.bf16.gmra.mxu0 %v491
          %v545 = vpop.f32.mrf.mxu0
          %v546 = vadd.f32 0.0, %v545
          %v547 = vpop.f32.mrf.mxu0
          %v548 = vadd.f32 0.0, %v547
          %549 = vdwg.mxu0
          %550 = vmatpush.bf16.msra.mxu0 0
          %551 = vmatpush.bf16.msra.mxu0 0
          %552 = vmatpush.bf16.msra.mxu0 0
          %553 = vmatpush.bf16.msra.mxu0 0
          %554 = vmatpush.bf16.msra.mxu0 %v469
          %555 = vmatpush.bf16.msra.mxu0 %v465
          %556 = vmatpush.bf16.msra.mxu0 %v461
          %557 = vmatpush.bf16.msra.mxu0 %v457
          %558 = vmatmul.bf16.gmra.mxu0 %v488
          %v559 = vpop.f32.mrf.mxu0
          %v560 = vadd.f32 0.0, %v559
          %v561 = vpop.f32.mrf.mxu0
          %v562 = vadd.f32 0.0, %v561
          %563 = vmatmul.bf16.gmra.mxu0 %v491
          %v564 = vpop.f32.mrf.mxu0
          %v565 = vadd.f32 0.0, %v564
          %v566 = vpop.f32.mrf.mxu0
          %v567 = vadd.f32 0.0, %v566
          %568 = vdwg.mxu0
          %569 = vst [vmem:[#allocation2] sm:$0xff] %v503
          %570 = vst [vmem:[#allocation2 + $0x8] sm:$0xff] %v522
          %571 = vst [vmem:[#allocation2 + $0x10] sm:$0xff] %v541
          %572 = vst.msk [vmem:[#allocation2 + $0x18] sm:$0xff] %vm486, %v560
          %573 = vst [vmem:[#allocation2 + $0x20] sm:$0xff] %v505
          %574 = vst [vmem:[#allocation2 + $0x28] sm:$0xff] %v524
          %575 = vst [vmem:[#allocation2 + $0x30] sm:$0xff] %v543
          %576 = vst.msk [vmem:[#allocation2 + $0x38] sm:$0xff] %vm486, %v562
          %577 = vst [vmem:[#allocation2 + $0x40] sm:$0xff] %v508
          %578 = vst [vmem:[#allocation2 + $0x48] sm:$0xff] %v527
          %579 = vst [vmem:[#allocation2 + $0x50] sm:$0xff] %v546
          %580 = vst.msk [vmem:[#allocation2 + $0x58] sm:$0xff] %vm486, %v565
          %581 = vst [vmem:[#allocation2 + $0x60] sm:$0xf] %v510
          %582 = vst [vmem:[#allocation2 + $0x68] sm:$0xf] %v529
          %583 = vst [vmem:[#allocation2 + $0x70] sm:$0xf] %v548
          %vm584 = vcmask 519168
          %585 = vst.msk [vmem:[#allocation2 + $0x78] sm:$0xf] %vm584, %v567
          %v586 = vld [vmem:[#allocation2] sm:$0xff]
          %v587 = vld [vmem:[#allocation2 + $0x8] sm:$0xff]
          %v588 = vld [vmem:[#allocation2 + $0x10] sm:$0xff]
          %v589 = vld [vmem:[#allocation2 + $0x18] sm:$0xff]
          %v590 = vld [vmem:[#allocation2 + $0x20] sm:$0xff]
          %v591 = vld [vmem:[#allocation2 + $0x28] sm:$0xff]
          %v592 = vld [vmem:[#allocation2 + $0x30] sm:$0xff]
          %v593 = vld [vmem:[#allocation2 + $0x38] sm:$0xff]
          %v594 = vld [vmem:[#allocation2 + $0x40] sm:$0xff]
          %v595 = vld [vmem:[#allocation2 + $0x48] sm:$0xff]
          %v596 = vld [vmem:[#allocation2 + $0x50] sm:$0xff]
          %v597 = vld [vmem:[#allocation2 + $0x58] sm:$0xff]
          %v598 = vld [vmem:[#allocation2 + $0x60] sm:$0xf]
          %v599 = vld [vmem:[#allocation2 + $0x68] sm:$0xf]
          %v600 = vld [vmem:[#allocation2 + $0x70] sm:$0xf]
          %v601 = vld [vmem:[#allocation2 + $0x78] sm:$0xf]
          %s602 = scalar_lea.vmem %s0, 16
          %v603 = vld [vmem:[%s602] sm:$0xf]
          %v604 = vld [vmem:[%s602 + $0x4] sm:$0xf]
          %v605 = vld [vmem:[%s602 + $0x8] sm:$0xf]
          %v606 = vld [vmem:[%s602 + $0xc] sm:$0x3]
          %s607 = scalar_lea.vmem %s1, 128
          %v608 = vld [vmem:[%s607] sm:$0xff]
          %v609 = vld [vmem:[%s607 + $0x8] sm:$0xff]
          %v610 = vld [vmem:[%s607 + $0x10] sm:$0xff]
          %v611 = vld [vmem:[%s607 + $0x18] sm:$0xff]
          %v612 = vld [vmem:[%s607 + $0x20] sm:$0xff]
          %v613 = vld [vmem:[%s607 + $0x28] sm:$0xff]
          %v614 = vld [vmem:[%s607 + $0x30] sm:$0xff]
          %v615 = vld [vmem:[%s607 + $0x38] sm:$0xff]
          %v616 = vld [vmem:[%s607 + $0x40] sm:$0xff]
          %v617 = vld [vmem:[%s607 + $0x48] sm:$0xff]
          %v618 = vld [vmem:[%s607 + $0x50] sm:$0xff]
          %v619 = vld [vmem:[%s607 + $0x58] sm:$0xff]
          %v620 = vld [vmem:[%s607 + $0x60] sm:$0xff]
          %v621 = vld [vmem:[%s607 + $0x68] sm:$0xff]
          %v622 = vld [vmem:[%s607 + $0x70] sm:$0xff]
          %v623 = vld [vmem:[%s607 + $0x78] sm:$0xff]
          %v628 = vunpack.c.l.b16 %v603
          %v629 = vunpack.c.l.b16 %v604
          %v630 = vunpack.c.l.b16 %v605
          %v631 = vunpack.c.l.b16 %v606
          %v632 = vpack.c.b16 %v629, %v628
          %v633 = vpack.c.b16 %v631, %v630
          %v650 = vunpack.c.l.b16 %v608
          %v651 = vunpack.c.h.b16 %v608
          %v652 = vunpack.c.l.b16 %v609
          %v653 = vunpack.c.h.b16 %v609
          %v654 = vunpack.c.l.b16 %v610
          %v655 = vunpack.c.h.b16 %v610
          %v656 = vunpack.c.l.b16 %v611
          %v657 = vunpack.c.h.b16 %v611
          %v658 = vunpack.c.l.b16 %v612
          %v659 = vunpack.c.h.b16 %v612
          %v660 = vunpack.c.l.b16 %v613
          %v661 = vunpack.c.h.b16 %v613
          %v662 = vunpack.c.l.b16 %v614
          %v663 = vunpack.c.h.b16 %v614
          %v664 = vunpack.c.l.b16 %v615
          %v665 = vunpack.c.h.b16 %v615
          %v666 = vunpack.c.l.b16 %v616
          %v667 = vunpack.c.h.b16 %v616
          %v668 = vunpack.c.l.b16 %v617
          %v669 = vunpack.c.h.b16 %v617
          %v670 = vunpack.c.l.b16 %v618
          %v671 = vunpack.c.h.b16 %v618
          %v672 = vunpack.c.l.b16 %v619
          %v673 = vunpack.c.h.b16 %v619
          %v674 = vunpack.c.l.b16 %v620
          %v675 = vunpack.c.h.b16 %v620
          %v676 = vunpack.c.l.b16 %v621
          %v677 = vunpack.c.h.b16 %v621
          %v678 = vunpack.c.l.b16 %v622
          %v679 = vunpack.c.h.b16 %v622
          %v680 = vunpack.c.l.b16 %v623
          %v681 = vunpack.c.h.b16 %v623
          %v682 = vpack.c.b16 %v654, %v650
          %v683 = vpack.c.b16 %v655, %v651
          %v684 = vpack.c.b16 %v656, %v652
          %v685 = vpack.c.b16 %v657, %v653
          %v686 = vpack.c.b16 %v662, %v658
          %v687 = vpack.c.b16 %v663, %v659
          %v688 = vpack.c.b16 %v664, %v660
          %v689 = vpack.c.b16 %v665, %v661
          %v690 = vpack.c.b16 %v670, %v666
          %v691 = vpack.c.b16 %v671, %v667
          %v692 = vpack.c.b16 %v672, %v668
          %v693 = vpack.c.b16 %v673, %v669
          %v694 = vpack.c.b16 %v678, %v674
          %v695 = vpack.c.b16 %v679, %v675
          %v696 = vpack.c.b16 %v680, %v676
          %v697 = vpack.c.b16 %v681, %v677
          %v715 = vsel %vm486, %v632, 0
          %v718 = vsel %vm486, %v633, 0
          %720 = vmatpush.bf16.msra.mxu0 0
          %721 = vmatpush.bf16.msra.mxu0 0
          %722 = vmatpush.bf16.msra.mxu0 0
          %723 = vmatpush.bf16.msra.mxu0 0
          %724 = vmatpush.bf16.msra.mxu0 %v694
          %725 = vmatpush.bf16.msra.mxu0 %v690
          %726 = vmatpush.bf16.msra.mxu0 %v686
          %727 = vmatpush.bf16.msra.mxu0 %v682
          %728 = vmatmul.bf16.gmra.mxu0 %v715
          %v729 = vpop.f32.mrf.mxu0
          %v730 = vadd.f32 0.0, %v729
          %v731 = vpop.f32.mrf.mxu0
          %v732 = vadd.f32 0.0, %v731
          %733 = vmatmul.bf16.gmra.mxu0 %v718
          %v734 = vpop.f32.mrf.mxu0
          %v735 = vadd.f32 0.0, %v734
          %v736 = vpop.f32.mrf.mxu0
          %v737 = vadd.f32 0.0, %v736
          %738 = vdwg.mxu0
          %739 = vmatpush.bf16.msra.mxu0 0
          %740 = vmatpush.bf16.msra.mxu0 0
          %741 = vmatpush.bf16.msra.mxu0 0
          %742 = vmatpush.bf16.msra.mxu0 0
          %743 = vmatpush.bf16.msra.mxu0 %v695
          %744 = vmatpush.bf16.msra.mxu0 %v691
          %745 = vmatpush.bf16.msra.mxu0 %v687
          %746 = vmatpush.bf16.msra.mxu0 %v683
          %747 = vmatmul.bf16.gmra.mxu0 %v715
          %v748 = vpop.f32.mrf.mxu0
          %v749 = vadd.f32 0.0, %v748
          %v750 = vpop.f32.mrf.mxu0
          %v751 = vadd.f32 0.0, %v750
          %752 = vmatmul.bf16.gmra.mxu0 %v718
          %v753 = vpop.f32.mrf.mxu0
          %v754 = vadd.f32 0.0, %v753
          %v755 = vpop.f32.mrf.mxu0
          %v756 = vadd.f32 0.0, %v755
          %757 = vdwg.mxu0
          %758 = vmatpush.bf16.msra.mxu0 0
          %759 = vmatpush.bf16.msra.mxu0 0
          %760 = vmatpush.bf16.msra.mxu0 0
          %761 = vmatpush.bf16.msra.mxu0 0
          %762 = vmatpush.bf16.msra.mxu0 %v696
          %763 = vmatpush.bf16.msra.mxu0 %v692
          %764 = vmatpush.bf16.msra.mxu0 %v688
          %765 = vmatpush.bf16.msra.mxu0 %v684
          %766 = vmatmul.bf16.gmra.mxu0 %v715
          %v767 = vpop.f32.mrf.mxu0
          %v768 = vadd.f32 0.0, %v767
          %v769 = vpop.f32.mrf.mxu0
          %v770 = vadd.f32 0.0, %v769
          %771 = vmatmul.bf16.gmra.mxu0 %v718
          %v772 = vpop.f32.mrf.mxu0
          %v773 = vadd.f32 0.0, %v772
          %v774 = vpop.f32.mrf.mxu0
          %v775 = vadd.f32 0.0, %v774
          %776 = vdwg.mxu0
          %777 = vmatpush.bf16.msra.mxu0 0
          %778 = vmatpush.bf16.msra.mxu0 0
          %779 = vmatpush.bf16.msra.mxu0 0
          %780 = vmatpush.bf16.msra.mxu0 0
          %781 = vmatpush.bf16.msra.mxu0 %v697
          %782 = vmatpush.bf16.msra.mxu0 %v693
          %783 = vmatpush.bf16.msra.mxu0 %v689
          %784 = vmatpush.bf16.msra.mxu0 %v685
          %785 = vmatmul.bf16.gmra.mxu0 %v715
          %v786 = vpop.f32.mrf.mxu0
          %v787 = vadd.f32 0.0, %v786
          %v788 = vpop.f32.mrf.mxu0
          %v789 = vadd.f32 0.0, %v788
          %790 = vmatmul.bf16.gmra.mxu0 %v718
          %v791 = vpop.f32.mrf.mxu0
          %v792 = vadd.f32 0.0, %v791
          %v793 = vpop.f32.mrf.mxu0
          %v794 = vadd.f32 0.0, %v793
          %795 = vdwg.mxu0
          %v796 = vadd.f32 %v586, %v730
          %v797 = vadd.f32 %v587, %v749
          %v798 = vadd.f32 %v588, %v768
          %v799 = vadd.f32 %v589, %v787
          %v800 = vadd.f32 %v590, %v732
          %v801 = vadd.f32 %v591, %v751
          %v802 = vadd.f32 %v592, %v770
          %v803 = vadd.f32 %v593, %v789
          %v804 = vadd.f32 %v594, %v735
          %v805 = vadd.f32 %v595, %v754
          %v806 = vadd.f32 %v596, %v773
          %v807 = vadd.f32 %v597, %v792
          %v808 = vadd.f32 %v598, %v737
          %v809 = vadd.f32 %v599, %v756
          %v810 = vadd.f32 %v600, %v775
          %v811 = vadd.f32 %v601, %v794
          %812 = vst [vmem:[#allocation2] sm:$0xff] %v796
          %813 = vst [vmem:[#allocation2 + $0x8] sm:$0xff] %v797
          %814 = vst [vmem:[#allocation2 + $0x10] sm:$0xff] %v798
          %815 = vst.msk [vmem:[#allocation2 + $0x18] sm:$0xff] %vm486, %v799
          %816 = vst [vmem:[#allocation2 + $0x20] sm:$0xff] %v800
          %817 = vst [vmem:[#allocation2 + $0x28] sm:$0xff] %v801
          %818 = vst [vmem:[#allocation2 + $0x30] sm:$0xff] %v802
          %819 = vst.msk [vmem:[#allocation2 + $0x38] sm:$0xff] %vm486, %v803
          %820 = vst [vmem:[#allocation2 + $0x40] sm:$0xff] %v804
          %821 = vst [vmem:[#allocation2 + $0x48] sm:$0xff] %v805
          %822 = vst [vmem:[#allocation2 + $0x50] sm:$0xff] %v806
          %823 = vst.msk [vmem:[#allocation2 + $0x58] sm:$0xff] %vm486, %v807
          %824 = vst [vmem:[#allocation2 + $0x60] sm:$0xf] %v808
          %825 = vst [vmem:[#allocation2 + $0x68] sm:$0xf] %v809
          %826 = vst [vmem:[#allocation2 + $0x70] sm:$0xf] %v810
          %827 = vst.msk [vmem:[#allocation2 + $0x78] sm:$0xf] %vm584, %v811
          %v828 = vld [vmem:[#allocation2] sm:$0xff]
          %v829 = vld [vmem:[#allocation2 + $0x8] sm:$0xff]
          %v830 = vld [vmem:[#allocation2 + $0x10] sm:$0xff]
          %v831 = vld [vmem:[#allocation2 + $0x18] sm:$0xff]
          %v832 = vld [vmem:[#allocation2 + $0x20] sm:$0xff]
          %v833 = vld [vmem:[#allocation2 + $0x28] sm:$0xff]
          %v834 = vld [vmem:[#allocation2 + $0x30] sm:$0xff]
          %v835 = vld [vmem:[#allocation2 + $0x38] sm:$0xff]
          %v836 = vld [vmem:[#allocation2 + $0x40] sm:$0xff]
          %v837 = vld [vmem:[#allocation2 + $0x48] sm:$0xff]
          %v838 = vld [vmem:[#allocation2 + $0x50] sm:$0xff]
          %v839 = vld [vmem:[#allocation2 + $0x58] sm:$0xff]
          %v840 = vld [vmem:[#allocation2 + $0x60] sm:$0xf]
          %v841 = vld [vmem:[#allocation2 + $0x68] sm:$0xf]
          %v842 = vld [vmem:[#allocation2 + $0x70] sm:$0xf]
          %v843 = vld [vmem:[#allocation2 + $0x78] sm:$0xf]
          %s844 = scalar_lea.vmem %s0, 32
          %v845 = vld [vmem:[%s844] sm:$0xf]
          %v846 = vld [vmem:[%s844 + $0x4] sm:$0xf]
          %v847 = vld [vmem:[%s844 + $0x8] sm:$0xf]
          %v848 = vld [vmem:[%s844 + $0xc] sm:$0x3]
          %s849 = scalar_lea.vmem %s1, 256
          %v850 = vld [vmem:[%s849] sm:$0xff]
          %v851 = vld [vmem:[%s849 + $0x8] sm:$0xff]
          %v852 = vld [vmem:[%s849 + $0x10] sm:$0xff]
          %v853 = vld [vmem:[%s849 + $0x18] sm:$0xff]
          %v854 = vld [vmem:[%s849 + $0x20] sm:$0xff]
          %v855 = vld [vmem:[%s849 + $0x28] sm:$0xff]
          %v856 = vld [vmem:[%s849 + $0x30] sm:$0xff]
          %v857 = vld [vmem:[%s849 + $0x38] sm:$0xff]
          %v858 = vld [vmem:[%s849 + $0x40] sm:$0xff]
          %v859 = vld [vmem:[%s849 + $0x48] sm:$0xff]
          %v860 = vld [vmem:[%s849 + $0x50] sm:$0xff]
          %v861 = vld [vmem:[%s849 + $0x58] sm:$0xff]
          %v862 = vld [vmem:[%s849 + $0x60] sm:$0xff]
          %v863 = vld [vmem:[%s849 + $0x68] sm:$0xff]
          %v864 = vld [vmem:[%s849 + $0x70] sm:$0xff]
          %v865 = vld [vmem:[%s849 + $0x78] sm:$0xff]
          %v870 = vunpack.c.l.b16 %v845
          %v871 = vunpack.c.l.b16 %v846
          %v872 = vunpack.c.l.b16 %v847
          %v873 = vunpack.c.l.b16 %v848
          %v874 = vpack.c.b16 %v871, %v870
          %v875 = vpack.c.b16 %v873, %v872
          %v892 = vunpack.c.l.b16 %v850
          %v893 = vunpack.c.h.b16 %v850
          %v894 = vunpack.c.l.b16 %v851
          %v895 = vunpack.c.h.b16 %v851
          %v896 = vunpack.c.l.b16 %v852
          %v897 = vunpack.c.h.b16 %v852
          %v898 = vunpack.c.l.b16 %v853
          %v899 = vunpack.c.h.b16 %v853
          %v900 = vunpack.c.l.b16 %v854
          %v901 = vunpack.c.h.b16 %v854
          %v902 = vunpack.c.l.b16 %v855
          %v903 = vunpack.c.h.b16 %v855
          %v904 = vunpack.c.l.b16 %v856
          %v905 = vunpack.c.h.b16 %v856
          %v906 = vunpack.c.l.b16 %v857
          %v907 = vunpack.c.h.b16 %v857
          %v908 = vunpack.c.l.b16 %v858
          %v909 = vunpack.c.h.b16 %v858
          %v910 = vunpack.c.l.b16 %v859
          %v911 = vunpack.c.h.b16 %v859
          %v912 = vunpack.c.l.b16 %v860
          %v913 = vunpack.c.h.b16 %v860
          %v914 = vunpack.c.l.b16 %v861
          %v915 = vunpack.c.h.b16 %v861
          %v916 = vunpack.c.l.b16 %v862
          %v917 = vunpack.c.h.b16 %v862
          %v918 = vunpack.c.l.b16 %v863
          %v919 = vunpack.c.h.b16 %v863
          %v920 = vunpack.c.l.b16 %v864
          %v921 = vunpack.c.h.b16 %v864
          %v922 = vunpack.c.l.b16 %v865
          %v923 = vunpack.c.h.b16 %v865
          %v924 = vpack.c.b16 %v896, %v892
          %v925 = vpack.c.b16 %v897, %v893
          %v926 = vpack.c.b16 %v898, %v894
          %v927 = vpack.c.b16 %v899, %v895
          %v928 = vpack.c.b16 %v904, %v900
          %v929 = vpack.c.b16 %v905, %v901
          %v930 = vpack.c.b16 %v906, %v902
          %v931 = vpack.c.b16 %v907, %v903
          %v932 = vpack.c.b16 %v912, %v908
          %v933 = vpack.c.b16 %v913, %v909
          %v934 = vpack.c.b16 %v914, %v910
          %v935 = vpack.c.b16 %v915, %v911
          %v936 = vpack.c.b16 %v920, %v916
          %v937 = vpack.c.b16 %v921, %v917
          %v938 = vpack.c.b16 %v922, %v918
          %v939 = vpack.c.b16 %v923, %v919
          %v957 = vsel %vm486, %v874, 0
          %v960 = vsel %vm486, %v875, 0
          %962 = vmatpush.bf16.msra.mxu0 0
          %963 = vmatpush.bf16.msra.mxu0 0
          %964 = vmatpush.bf16.msra.mxu0 0
          %965 = vmatpush.bf16.msra.mxu0 0
          %966 = vmatpush.bf16.msra.mxu0 %v936
          %967 = vmatpush.bf16.msra.mxu0 %v932
          %968 = vmatpush.bf16.msra.mxu0 %v928
          %969 = vmatpush.bf16.msra.mxu0 %v924
          %970 = vmatmul.bf16.gmra.mxu0 %v957
          %v971 = vpop.f32.mrf.mxu0
          %v972 = vadd.f32 0.0, %v971
          %v973 = vpop.f32.mrf.mxu0
          %v974 = vadd.f32 0.0, %v973
          %975 = vmatmul.bf16.gmra.mxu0 %v960
          %v976 = vpop.f32.mrf.mxu0
          %v977 = vadd.f32 0.0, %v976
          %v978 = vpop.f32.mrf.mxu0
          %v979 = vadd.f32 0.0, %v978
          %980 = vdwg.mxu0
          %981 = vmatpush.bf16.msra.mxu0 0
          %982 = vmatpush.bf16.msra.mxu0 0
          %983 = vmatpush.bf16.msra.mxu0 0
          %984 = vmatpush.bf16.msra.mxu0 0
          %985 = vmatpush.bf16.msra.mxu0 %v937
          %986 = vmatpush.bf16.msra.mxu0 %v933
          %987 = vmatpush.bf16.msra.mxu0 %v929
          %988 = vmatpush.bf16.msra.mxu0 %v925
          %989 = vmatmul.bf16.gmra.mxu0 %v957
          %v990 = vpop.f32.mrf.mxu0
          %v991 = vadd.f32 0.0, %v990
          %v992 = vpop.f32.mrf.mxu0
          %v993 = vadd.f32 0.0, %v992
          %994 = vmatmul.bf16.gmra.mxu0 %v960
          %v995 = vpop.f32.mrf.mxu0
          %v996 = vadd.f32 0.0, %v995
          %v997 = vpop.f32.mrf.mxu0
          %v998 = vadd.f32 0.0, %v997
          %999 = vdwg.mxu0
          %1000 = vmatpush.bf16.msra.mxu0 0
          %1001 = vmatpush.bf16.msra.mxu0 0
          %1002 = vmatpush.bf16.msra.mxu0 0
          %1003 = vmatpush.bf16.msra.mxu0 0
          %1004 = vmatpush.bf16.msra.mxu0 %v938
          %1005 = vmatpush.bf16.msra.mxu0 %v934
          %1006 = vmatpush.bf16.msra.mxu0 %v930
          %1007 = vmatpush.bf16.msra.mxu0 %v926
          %1008 = vmatmul.bf16.gmra.mxu0 %v957
          %v1009 = vpop.f32.mrf.mxu0
          %v1010 = vadd.f32 0.0, %v1009
          %v1011 = vpop.f32.mrf.mxu0
          %v1012 = vadd.f32 0.0, %v1011
          %1013 = vmatmul.bf16.gmra.mxu0 %v960
          %v1014 = vpop.f32.mrf.mxu0
          %v1015 = vadd.f32 0.0, %v1014
          %v1016 = vpop.f32.mrf.mxu0
          %v1017 = vadd.f32 0.0, %v1016
          %1018 = vdwg.mxu0
          %1019 = vmatpush.bf16.msra.mxu0 0
          %1020 = vmatpush.bf16.msra.mxu0 0
          %1021 = vmatpush.bf16.msra.mxu0 0
          %1022 = vmatpush.bf16.msra.mxu0 0
          %1023 = vmatpush.bf16.msra.mxu0 %v939
          %1024 = vmatpush.bf16.msra.mxu0 %v935
          %1025 = vmatpush.bf16.msra.mxu0 %v931
          %1026 = vmatpush.bf16.msra.mxu0 %v927
          %1027 = vmatmul.bf16.gmra.mxu0 %v957
          %v1028 = vpop.f32.mrf.mxu0
          %v1029 = vadd.f32 0.0, %v1028
          %v1030 = vpop.f32.mrf.mxu0
          %v1031 = vadd.f32 0.0, %v1030
          %1032 = vmatmul.bf16.gmra.mxu0 %v960
          %v1033 = vpop.f32.mrf.mxu0
          %v1034 = vadd.f32 0.0, %v1033
          %v1035 = vpop.f32.mrf.mxu0
          %v1036 = vadd.f32 0.0, %v1035
          %1037 = vdwg.mxu0
          %v1038 = vadd.f32 %v828, %v972
          %v1039 = vadd.f32 %v829, %v991
          %v1040 = vadd.f32 %v830, %v1010
          %v1041 = vadd.f32 %v831, %v1029
          %v1042 = vadd.f32 %v832, %v974
          %v1043 = vadd.f32 %v833, %v993
          %v1044 = vadd.f32 %v834, %v1012
          %v1045 = vadd.f32 %v835, %v1031
          %v1046 = vadd.f32 %v836, %v977
          %v1047 = vadd.f32 %v837, %v996
          %v1048 = vadd.f32 %v838, %v1015
          %v1049 = vadd.f32 %v839, %v1034
          %v1050 = vadd.f32 %v840, %v979
          %v1051 = vadd.f32 %v841, %v998
          %v1052 = vadd.f32 %v842, %v1017
          %v1053 = vadd.f32 %v843, %v1036
          %1054 = vst [vmem:[#allocation2] sm:$0xff] %v1038
          %1055 = vst [vmem:[#allocation2 + $0x8] sm:$0xff] %v1039
          %1056 = vst [vmem:[#allocation2 + $0x10] sm:$0xff] %v1040
          %1057 = vst.msk [vmem:[#allocation2 + $0x18] sm:$0xff] %vm486, %v1041
          %1058 = vst [vmem:[#allocation2 + $0x20] sm:$0xff] %v1042
          %1059 = vst [vmem:[#allocation2 + $0x28] sm:$0xff] %v1043
          %1060 = vst [vmem:[#allocation2 + $0x30] sm:$0xff] %v1044
          %1061 = vst.msk [vmem:[#allocation2 + $0x38] sm:$0xff] %vm486, %v1045
          %1062 = vst [vmem:[#allocation2 + $0x40] sm:$0xff] %v1046
          %1063 = vst [vmem:[#allocation2 + $0x48] sm:$0xff] %v1047
          %1064 = vst [vmem:[#allocation2 + $0x50] sm:$0xff] %v1048
          %1065 = vst.msk [vmem:[#allocation2 + $0x58] sm:$0xff] %vm486, %v1049
          %1066 = vst [vmem:[#allocation2 + $0x60] sm:$0xf] %v1050
          %1067 = vst [vmem:[#allocation2 + $0x68] sm:$0xf] %v1051
          %1068 = vst [vmem:[#allocation2 + $0x70] sm:$0xf] %v1052
          %1069 = vst.msk [vmem:[#allocation2 + $0x78] sm:$0xf] %vm584, %v1053
          %v1070 = vld [vmem:[#allocation2] sm:$0xff]
          %v1071 = vld [vmem:[#allocation2 + $0x8] sm:$0xff]
          %v1072 = vld [vmem:[#allocation2 + $0x10] sm:$0xff]
          %v1073 = vld [vmem:[#allocation2 + $0x18] sm:$0xff]
          %v1074 = vld [vmem:[#allocation2 + $0x20] sm:$0xff]
          %v1075 = vld [vmem:[#allocation2 + $0x28] sm:$0xff]
          %v1076 = vld [vmem:[#allocation2 + $0x30] sm:$0xff]
          %v1077 = vld [vmem:[#allocation2 + $0x38] sm:$0xff]
          %v1078 = vld [vmem:[#allocation2 + $0x40] sm:$0xff]
          %v1079 = vld [vmem:[#allocation2 + $0x48] sm:$0xff]
          %v1080 = vld [vmem:[#allocation2 + $0x50] sm:$0xff]
          %v1081 = vld [vmem:[#allocation2 + $0x58] sm:$0xff]
          %v1082 = vld [vmem:[#allocation2 + $0x60] sm:$0xf]
          %v1083 = vld [vmem:[#allocation2 + $0x68] sm:$0xf]
          %v1084 = vld [vmem:[#allocation2 + $0x70] sm:$0xf]
          %v1085 = vld [vmem:[#allocation2 + $0x78] sm:$0xf]
          %v1086 = vld [vmem:[%s2] sm:$0xf]
          %v1088 = vperm.slane %v1086, 0
          %v1089 = vperm.slane %v1086, 1
          %v1090 = vperm.slane %v1086, 2
          %v1091 = vperm.slane %v1086, 3
          %v1096 = vadd.f32 %v1070, %v1088
          %v1097 = vadd.f32 %v1071, %v1089
          %v1098 = vadd.f32 %v1072, %v1090
          %v1099 = vadd.f32 %v1073, %v1091
          %v1100 = vadd.f32 %v1074, %v1088
          %v1101 = vadd.f32 %v1075, %v1089
          %v1102 = vadd.f32 %v1076, %v1090
          %v1103 = vadd.f32 %v1077, %v1091
          %v1104 = vadd.f32 %v1078, %v1088
          %v1105 = vadd.f32 %v1079, %v1089
          %v1106 = vadd.f32 %v1080, %v1090
          %v1107 = vadd.f32 %v1081, %v1091
          %v1108 = vadd.f32 %v1082, %v1088
          %v1109 = vadd.f32 %v1083, %v1089
          %v1110 = vadd.f32 %v1084, %v1090
          %v1111 = vadd.f32 %v1085, %v1091
          %v1112 = vmax.f32 %v1096, 0.0
          %v1113 = vmax.f32 %v1097, 0.0
          %v1114 = vmax.f32 %v1098, 0.0
          %v1115 = vmax.f32 %v1099, 0.0
          %v1116 = vmax.f32 %v1100, 0.0
          %v1117 = vmax.f32 %v1101, 0.0
          %v1118 = vmax.f32 %v1102, 0.0
          %v1119 = vmax.f32 %v1103, 0.0
          %v1120 = vmax.f32 %v1104, 0.0
          %v1121 = vmax.f32 %v1105, 0.0
          %v1122 = vmax.f32 %v1106, 0.0
          %v1123 = vmax.f32 %v1107, 0.0
          %v1124 = vmax.f32 %v1108, 0.0
          %v1125 = vmax.f32 %v1109, 0.0
          %v1126 = vmax.f32 %v1110, 0.0
          %v1127 = vmax.f32 %v1111, 0.0
          %v1128 = vpack.c.bf16 %v1113, %v1112
          %v1129 = vpack.c.bf16 %v1115, %v1114
          %v1130 = vpack.c.bf16 %v1117, %v1116
          %v1131 = vpack.c.bf16 %v1119, %v1118
          %v1132 = vpack.c.bf16 %v1121, %v1120
          %v1133 = vpack.c.bf16 %v1123, %v1122
          %v1134 = vpack.c.bf16 %v1125, %v1124
          %v1135 = vpack.c.bf16 %v1127, %v1126
          %1136 = vst [vmem:[#allocation3] sm:$0xff] %v1128
          %vm1137 = vcmask 1043456
          %vm1138 = vcmask 523268
          %vm1139 = vmor %vm1138, %vm1137
          %1140 = vst.msk [vmem:[#allocation3 + $0x8] sm:$0xff] %vm1139, %v1129
          %1141 = vst [vmem:[#allocation3 + $0x10] sm:$0x77] %v1130
          %vm1142 = vcmask 1042432
          %vm1143 = vcmask 522244
          %vm1144 = vmor %vm1143, %vm1142
          %1145 = vst.msk [vmem:[#allocation3 + $0x18] sm:$0x77] %vm1144, %v1131
          %vm1152 = vcmask 1040384
          %vm1153 = vcmask 1044484
          %vm1154 = vmor %vm1152, %vm1153
          %v1155 = vrot.slane %v1130, 7
          %v1156 = vrot.slane %v1155, 4
          %v1157 = vrot.slane %v1132, 7
          %v1158 = vsel %vm1154, %v1156, %v1157
          %v1159 = vrot.slane %v1131, 7
          %v1160 = vrot.slane %v1159, 4
          %v1161 = vrot.slane %v1133, 7
          %v1162 = vsel %vm1154, %v1160, %v1161
          %v1163 = vrot.slane %v1157, 4
          %v1164 = vrot.slane %v1134, 7
          %v1165 = vsel %vm1154, %v1163, %v1164
          %v1166 = vrot.slane %v1161, 4
          %v1167 = vrot.slane %v1135, 7
          %v1168 = vsel %vm1154, %v1166, %v1167
          %s1173 = scalar_lea.vmem [#allocation3], 32
          %1174 = vst [vmem:[%s1173] sm:$0xff] %v1158
          %1175 = vst.msk [vmem:[%s1173 + $0x8] sm:$0xff] %vm1139, %v1162
          %1176 = vst [vmem:[%s1173 + $0x10] sm:$0x77] %v1165
          %1177 = vst.msk [vmem:[%s1173 + $0x18] sm:$0x77] %vm1144, %v1168
        $region68: #{dqn_forward.1} parent=59 // pred_fallthru
          _
        %s1178 = smul.u32 %s25, 8
        %s1179 = smul.addr %s1178, 4
        %s1180 = scalar_lea.vmem [#allocation3], %s1179
        %v1181 = vld [vmem:[%s1180] sm:$0xff]
        %v1182 = vld [vmem:[%s1180 + $0x8] sm:$0xff]
        %v1183 = vld [vmem:[%s1180 + $0x10] sm:$0x77]
        %v1184 = vld [vmem:[%s1180 + $0x18] sm:$0x77]
        %v1185 = vld [vmem:[%s336] sm:$0xff]
        %v1186 = vld [vmem:[%s336 + $0x8] sm:$0xff]
        %v1187 = vld [vmem:[%s336 + $0x10] sm:$0xff]
        %v1188 = vld [vmem:[%s336 + $0x18] sm:$0xff]
        %v1189 = vld [vmem:[%s336 + $0x20] sm:$0xff]
        %v1190 = vld [vmem:[%s336 + $0x28] sm:$0xff]
        %v1191 = vld [vmem:[%s336 + $0x30] sm:$0xff]
        %v1192 = vld [vmem:[%s336 + $0x38] sm:$0xff]
        %v1193 = vld [vmem:[%s336 + $0x40] sm:$0xff]
        %v1194 = vld [vmem:[%s336 + $0x48] sm:$0xff]
        %v1195 = vld [vmem:[%s336 + $0x50] sm:$0xff]
        %v1196 = vld [vmem:[%s336 + $0x58] sm:$0xff]
        %v1197 = vld [vmem:[%s336 + $0x60] sm:$0xff]
        %v1198 = vld [vmem:[%s336 + $0x68] sm:$0xff]
        %v1199 = vunpack.c.0.s8 %v1185
        %v1200 = vunpack.c.1.s8 %v1185
        %v1201 = vunpack.c.2.s8 %v1185
        %v1202 = vunpack.c.3.s8 %v1185
        %v1203 = vunpack.c.0.s8 %v1186
        %v1204 = vunpack.c.1.s8 %v1186
        %v1205 = vunpack.c.2.s8 %v1186
        %v1206 = vunpack.c.3.s8 %v1186
        %v1207 = vunpack.c.0.s8 %v1187
        %v1208 = vunpack.c.1.s8 %v1187
        %v1209 = vunpack.c.2.s8 %v1187
        %v1210 = vunpack.c.3.s8 %v1187
        %v1211 = vunpack.c.0.s8 %v1188
        %v1212 = vunpack.c.1.s8 %v1188
        %v1213 = vunpack.c.2.s8 %v1188
        %v1214 = vunpack.c.3.s8 %v1188
        %v1215 = vunpack.c.0.s8 %v1189
        %v1216 = vunpack.c.1.s8 %v1189
        %v1217 = vunpack.c.2.s8 %v1189
        %v1218 = vunpack.c.3.s8 %v1189
        %v1219 = vunpack.c.0.s8 %v1190
        %v1220 = vunpack.c.1.s8 %v1190
        %v1221 = vunpack.c.2.s8 %v1190
        %v1222 = vunpack.c.3.s8 %v1190
        %v1223 = vunpack.c.0.s8 %v1191
        %v1224 = vunpack.c.1.s8 %v1191
        %v1225 = vunpack.c.2.s8 %v1191
        %v1226 = vunpack.c.3.s8 %v1191
        %v1227 = vunpack.c.0.s8 %v1192
        %v1228 = vunpack.c.1.s8 %v1192
        %v1229 = vunpack.c.2.s8 %v1192
        %v1230 = vunpack.c.3.s8 %v1192
        %v1231 = vunpack.c.0.s8 %v1193
        %v1232 = vunpack.c.1.s8 %v1193
        %v1233 = vunpack.c.2.s8 %v1193
        %v1234 = vunpack.c.3.s8 %v1193
        %v1235 = vunpack.c.0.s8 %v1194
        %v1236 = vunpack.c.1.s8 %v1194
        %v1237 = vunpack.c.2.s8 %v1194
        %v1238 = vunpack.c.3.s8 %v1194
        %v1239 = vunpack.c.0.s8 %v1195
        %v1240 = vunpack.c.1.s8 %v1195
        %v1241 = vunpack.c.2.s8 %v1195
        %v1242 = vunpack.c.3.s8 %v1195
        %v1243 = vunpack.c.0.s8 %v1196
        %v1244 = vunpack.c.1.s8 %v1196
        %v1245 = vunpack.c.2.s8 %v1196
        %v1246 = vunpack.c.3.s8 %v1196
        %v1247 = vunpack.c.0.s8 %v1197
        %v1248 = vunpack.c.1.s8 %v1197
        %v1249 = vunpack.c.2.s8 %v1197
        %v1250 = vunpack.c.3.s8 %v1197
        %v1251 = vunpack.c.0.s8 %v1198
        %v1252 = vunpack.c.1.s8 %v1198
        %v1253 = vunpack.c.2.s8 %v1198
        %v1254 = vunpack.c.3.s8 %v1198
        %v1255 = vcvt.s32.f32 %v1199
        %v1256 = vcvt.s32.f32 %v1200
        %v1257 = vcvt.s32.f32 %v1201
        %v1258 = vcvt.s32.f32 %v1202
        %v1259 = vcvt.s32.f32 %v1203
        %v1260 = vcvt.s32.f32 %v1204
        %v1261 = vcvt.s32.f32 %v1205
        %v1262 = vcvt.s32.f32 %v1206
        %v1263 = vcvt.s32.f32 %v1207
        %v1264 = vcvt.s32.f32 %v1208
        %v1265 = vcvt.s32.f32 %v1209
        %v1266 = vcvt.s32.f32 %v1210
        %v1267 = vcvt.s32.f32 %v1211
        %v1268 = vcvt.s32.f32 %v1212
        %v1269 = vcvt.s32.f32 %v1213
        %v1270 = vcvt.s32.f32 %v1214
        %v1271 = vcvt.s32.f32 %v1215
        %v1272 = vcvt.s32.f32 %v1216
        %v1273 = vcvt.s32.f32 %v1217
        %v1274 = vcvt.s32.f32 %v1218
        %v1275 = vcvt.s32.f32 %v1219
        %v1276 = vcvt.s32.f32 %v1220
        %v1277 = vcvt.s32.f32 %v1221
        %v1278 = vcvt.s32.f32 %v1222
        %v1279 = vcvt.s32.f32 %v1223
        %v1280 = vcvt.s32.f32 %v1224
        %v1281 = vcvt.s32.f32 %v1225
        %v1282 = vcvt.s32.f32 %v1226
        %v1283 = vcvt.s32.f32 %v1227
        %v1284 = vcvt.s32.f32 %v1228
        %v1285 = vcvt.s32.f32 %v1229
        %v1286 = vcvt.s32.f32 %v1230
        %v1287 = vcvt.s32.f32 %v1231
        %v1288 = vcvt.s32.f32 %v1232
        %v1289 = vcvt.s32.f32 %v1233
        %v1290 = vcvt.s32.f32 %v1234
        %v1291 = vcvt.s32.f32 %v1235
        %v1292 = vcvt.s32.f32 %v1236
        %v1293 = vcvt.s32.f32 %v1237
        %v1294 = vcvt.s32.f32 %v1238
        %v1295 = vcvt.s32.f32 %v1239
        %v1296 = vcvt.s32.f32 %v1240
        %v1297 = vcvt.s32.f32 %v1241
        %v1298 = vcvt.s32.f32 %v1242
        %v1299 = vcvt.s32.f32 %v1243
        %v1300 = vcvt.s32.f32 %v1244
        %v1301 = vcvt.s32.f32 %v1245
        %v1302 = vcvt.s32.f32 %v1246
        %v1303 = vcvt.s32.f32 %v1247
        %v1304 = vcvt.s32.f32 %v1248
        %v1305 = vcvt.s32.f32 %v1249
        %v1306 = vcvt.s32.f32 %v1250
        %v1307 = vcvt.s32.f32 %v1251
        %v1308 = vcvt.s32.f32 %v1252
        %v1309 = vcvt.s32.f32 %v1253
        %v1310 = vcvt.s32.f32 %v1254
        %v1311 = vpack.c.bf16 %v1256, %v1255
        %v1312 = vpack.c.bf16 %v1258, %v1257
        %v1313 = vpack.c.bf16 %v1260, %v1259
        %v1314 = vpack.c.bf16 %v1262, %v1261
        %v1315 = vpack.c.bf16 %v1264, %v1263
        %v1316 = vpack.c.bf16 %v1266, %v1265
        %v1317 = vpack.c.bf16 %v1268, %v1267
        %v1318 = vpack.c.bf16 %v1270, %v1269
        %v1319 = vpack.c.bf16 %v1272, %v1271
        %v1320 = vpack.c.bf16 %v1274, %v1273
        %v1321 = vpack.c.bf16 %v1276, %v1275
        %v1322 = vpack.c.bf16 %v1278, %v1277
        %v1323 = vpack.c.bf16 %v1280, %v1279
        %v1324 = vpack.c.bf16 %v1282, %v1281
        %v1325 = vpack.c.bf16 %v1284, %v1283
        %v1326 = vpack.c.bf16 %v1286, %v1285
        %v1327 = vpack.c.bf16 %v1288, %v1287
        %v1328 = vpack.c.bf16 %v1290, %v1289
        %v1329 = vpack.c.bf16 %v1292, %v1291
        %v1330 = vpack.c.bf16 %v1294, %v1293
        %v1331 = vpack.c.bf16 %v1296, %v1295
        %v1332 = vpack.c.bf16 %v1298, %v1297
        %v1333 = vpack.c.bf16 %v1300, %v1299
        %v1334 = vpack.c.bf16 %v1302, %v1301
        %v1335 = vpack.c.bf16 %v1304, %v1303
        %v1336 = vpack.c.bf16 %v1306, %v1305
        %v1337 = vpack.c.bf16 %v1308, %v1307
        %v1338 = vpack.c.bf16 %v1310, %v1309
        %s1339 = scalar_lea.vmem %s336, 112 [#allocation5]
        %v1340 = vld [vmem:[%s1339] sm:$0xff]
        %v1341 = vld [vmem:[%s1339 + $0x8] sm:$0xff]
        %v1342 = vld [vmem:[%s1339 + $0x10] sm:$0xff]
        %v1343 = vld [vmem:[%s1339 + $0x18] sm:$0xff]
        %v1344 = vld [vmem:[%s1339 + $0x20] sm:$0xff]
        %v1345 = vld [vmem:[%s1339 + $0x28] sm:$0xff]
        %v1346 = vld [vmem:[%s1339 + $0x30] sm:$0xff]
        %v1347 = vld [vmem:[%s1339 + $0x38] sm:$0xff]
        %v1348 = vld [vmem:[%s1339 + $0x40] sm:$0xff]
        %v1349 = vld [vmem:[%s1339 + $0x48] sm:$0xff]
        %v1350 = vld [vmem:[%s1339 + $0x50] sm:$0xff]
        %v1351 = vld [vmem:[%s1339 + $0x58] sm:$0xff]
        %v1352 = vld [vmem:[%s1339 + $0x60] sm:$0xff]
        %v1353 = vld [vmem:[%s1339 + $0x68] sm:$0xff]
        %v1354 = vunpack.c.0.s8 %v1340
        %v1355 = vunpack.c.1.s8 %v1340
        %v1356 = vunpack.c.2.s8 %v1340
        %v1357 = vunpack.c.3.s8 %v1340
        %v1358 = vunpack.c.0.s8 %v1341
        %v1359 = vunpack.c.1.s8 %v1341
        %v1360 = vunpack.c.2.s8 %v1341
        %v1361 = vunpack.c.3.s8 %v1341
        %v1362 = vunpack.c.0.s8 %v1342
        %v1363 = vunpack.c.1.s8 %v1342
        %v1364 = vunpack.c.2.s8 %v1342
        %v1365 = vunpack.c.3.s8 %v1342
        %v1366 = vunpack.c.0.s8 %v1343
        %v1367 = vunpack.c.1.s8 %v1343
        %v1368 = vunpack.c.2.s8 %v1343
        %v1369 = vunpack.c.3.s8 %v1343
        %v1370 = vunpack.c.0.s8 %v1344
        %v1371 = vunpack.c.1.s8 %v1344
        %v1372 = vunpack.c.2.s8 %v1344
        %v1373 = vunpack.c.3.s8 %v1344
        %v1374 = vunpack.c.0.s8 %v1345
        %v1375 = vunpack.c.1.s8 %v1345
        %v1376 = vunpack.c.2.s8 %v1345
        %v1377 = vunpack.c.3.s8 %v1345
        %v1378 = vunpack.c.0.s8 %v1346
        %v1379 = vunpack.c.1.s8 %v1346
        %v1380 = vunpack.c.2.s8 %v1346
        %v1381 = vunpack.c.3.s8 %v1346
        %v1382 = vunpack.c.0.s8 %v1347
        %v1383 = vunpack.c.1.s8 %v1347
        %v1384 = vunpack.c.2.s8 %v1347
        %v1385 = vunpack.c.3.s8 %v1347
        %v1386 = vunpack.c.0.s8 %v1348
        %v1387 = vunpack.c.1.s8 %v1348
        %v1388 = vunpack.c.2.s8 %v1348
        %v1389 = vunpack.c.3.s8 %v1348
        %v1390 = vunpack.c.0.s8 %v1349
        %v1391 = vunpack.c.1.s8 %v1349
        %v1392 = vunpack.c.2.s8 %v1349
        %v1393 = vunpack.c.3.s8 %v1349
        %v1394 = vunpack.c.0.s8 %v1350
        %v1395 = vunpack.c.1.s8 %v1350
        %v1396 = vunpack.c.2.s8 %v1350
        %v1397 = vunpack.c.3.s8 %v1350
        %v1398 = vunpack.c.0.s8 %v1351
        %v1399 = vunpack.c.1.s8 %v1351
        %v1400 = vunpack.c.2.s8 %v1351
        %v1401 = vunpack.c.3.s8 %v1351
        %v1402 = vunpack.c.0.s8 %v1352
        %v1403 = vunpack.c.1.s8 %v1352
        %v1404 = vunpack.c.2.s8 %v1352
        %v1405 = vunpack.c.3.s8 %v1352
        %v1406 = vunpack.c.0.s8 %v1353
        %v1407 = vunpack.c.1.s8 %v1353
        %v1408 = vunpack.c.2.s8 %v1353
        %v1409 = vunpack.c.3.s8 %v1353
        %v1410 = vcvt.s32.f32 %v1354
        %v1411 = vcvt.s32.f32 %v1355
        %v1412 = vcvt.s32.f32 %v1356
        %v1413 = vcvt.s32.f32 %v1357
        %v1414 = vcvt.s32.f32 %v1358
        %v1415 = vcvt.s32.f32 %v1359
        %v1416 = vcvt.s32.f32 %v1360
        %v1417 = vcvt.s32.f32 %v1361
        %v1418 = vcvt.s32.f32 %v1362
        %v1419 = vcvt.s32.f32 %v1363
        %v1420 = vcvt.s32.f32 %v1364
        %v1421 = vcvt.s32.f32 %v1365
        %v1422 = vcvt.s32.f32 %v1366
        %v1423 = vcvt.s32.f32 %v1367
        %v1424 = vcvt.s32.f32 %v1368
        %v1425 = vcvt.s32.f32 %v1369
        %v1426 = vcvt.s32.f32 %v1370
        %v1427 = vcvt.s32.f32 %v1371
        %v1428 = vcvt.s32.f32 %v1372
        %v1429 = vcvt.s32.f32 %v1373
        %v1430 = vcvt.s32.f32 %v1374
        %v1431 = vcvt.s32.f32 %v1375
        %v1432 = vcvt.s32.f32 %v1376
        %v1433 = vcvt.s32.f32 %v1377
        %v1434 = vcvt.s32.f32 %v1378
        %v1435 = vcvt.s32.f32 %v1379
        %v1436 = vcvt.s32.f32 %v1380
        %v1437 = vcvt.s32.f32 %v1381
        %v1438 = vcvt.s32.f32 %v1382
        %v1439 = vcvt.s32.f32 %v1383
        %v1440 = vcvt.s32.f32 %v1384
        %v1441 = vcvt.s32.f32 %v1385
        %v1442 = vcvt.s32.f32 %v1386
        %v1443 = vcvt.s32.f32 %v1387
        %v1444 = vcvt.s32.f32 %v1388
        %v1445 = vcvt.s32.f32 %v1389
        %v1446 = vcvt.s32.f32 %v1390
        %v1447 = vcvt.s32.f32 %v1391
        %v1448 = vcvt.s32.f32 %v1392
        %v1449 = vcvt.s32.f32 %v1393
        %v1450 = vcvt.s32.f32 %v1394
        %v1451 = vcvt.s32.f32 %v1395
        %v1452 = vcvt.s32.f32 %v1396
        %v1453 = vcvt.s32.f32 %v1397
        %v1454 = vcvt.s32.f32 %v1398
        %v1455 = vcvt.s32.f32 %v1399
        %v1456 = vcvt.s32.f32 %v1400
        %v1457 = vcvt.s32.f32 %v1401
        %v1458 = vcvt.s32.f32 %v1402
        %v1459 = vcvt.s32.f32 %v1403
        %v1460 = vcvt.s32.f32 %v1404
        %v1461 = vcvt.s32.f32 %v1405
        %v1462 = vcvt.s32.f32 %v1406
        %v1463 = vcvt.s32.f32 %v1407
        %v1464 = vcvt.s32.f32 %v1408
        %v1465 = vcvt.s32.f32 %v1409
        %v1466 = vpack.c.bf16 %v1411, %v1410
        %v1467 = vpack.c.bf16 %v1413, %v1412
        %v1468 = vpack.c.bf16 %v1415, %v1414
        %v1469 = vpack.c.bf16 %v1417, %v1416
        %v1470 = vpack.c.bf16 %v1419, %v1418
        %v1471 = vpack.c.bf16 %v1421, %v1420
        %v1472 = vpack.c.bf16 %v1423, %v1422
        %v1473 = vpack.c.bf16 %v1425, %v1424
        %v1474 = vpack.c.bf16 %v1427, %v1426
        %v1475 = vpack.c.bf16 %v1429, %v1428
        %v1476 = vpack.c.bf16 %v1431, %v1430
        %v1477 = vpack.c.bf16 %v1433, %v1432
        %v1478 = vpack.c.bf16 %v1435, %v1434
        %v1479 = vpack.c.bf16 %v1437, %v1436
        %v1480 = vpack.c.bf16 %v1439, %v1438
        %v1481 = vpack.c.bf16 %v1441, %v1440
        %v1482 = vpack.c.bf16 %v1443, %v1442
        %v1483 = vpack.c.bf16 %v1445, %v1444
        %v1484 = vpack.c.bf16 %v1447, %v1446
        %v1485 = vpack.c.bf16 %v1449, %v1448
        %v1486 = vpack.c.bf16 %v1451, %v1450
        %v1487 = vpack.c.bf16 %v1453, %v1452
        %v1488 = vpack.c.bf16 %v1455, %v1454
        %v1489 = vpack.c.bf16 %v1457, %v1456
        %v1490 = vpack.c.bf16 %v1459, %v1458
        %v1491 = vpack.c.bf16 %v1461, %v1460
        %v1492 = vpack.c.bf16 %v1463, %v1462
        %v1493 = vpack.c.bf16 %v1465, %v1464
        %v1496 = vunpack.c.l.b16 %v1181
        %v1497 = vunpack.c.h.b16 %v1181
        %v1498 = vunpack.c.l.b16 %v1182
        %v1499 = vunpack.c.h.b16 %v1182
        %v1500 = vpack.c.b16 %v1496, %v1496
        %v1501 = vpack.c.b16 %v1497, %v1497
        %v1502 = vpack.c.b16 %v1498, %v1498
        %v1503 = vpack.c.b16 %v1499, %v1499
        %v1504 = vrot.slane %v1500, 1
        %v1505 = vrot.slane %v1501, 1
        %v1506 = vrot.slane %v1502, 1
        %v1507 = vrot.slane %v1503, 1
        %vm1511 = vcmask 523264
        %v1513 = vsel %vm1511, %v1507, 0
        %1515 = vmatpush.bf16.msra.mxu0 %v1473
        %1516 = vmatpush.bf16.msra.mxu0 %v1472
        %1517 = vmatpush.bf16.msra.mxu0 %v1471
        %1518 = vmatpush.bf16.msra.mxu0 %v1470
        %1519 = vmatpush.bf16.msra.mxu0 %v1469
        %1520 = vmatpush.bf16.msra.mxu0 %v1468
        %1521 = vmatpush.bf16.msra.mxu0 %v1467
        %1522 = vmatpush.bf16.msra.mxu0 %v1466
        %1523 = vmatmul.bf16.gmra.mxu0 %v1504
        %v1524 = vpop.f32.mrf.mxu0
        %v1525 = vadd.f32 0.0, %v1524
        %v1526 = vpop.f32.mrf.mxu0
        %1527 = vdwg.mxu0
        %1528 = vmatpush.bf16.msra.mxu0 %v1481
        %1529 = vmatpush.bf16.msra.mxu0 %v1480
        %1530 = vmatpush.bf16.msra.mxu0 %v1479
        %1531 = vmatpush.bf16.msra.mxu0 %v1478
        %1532 = vmatpush.bf16.msra.mxu0 %v1477
        %1533 = vmatpush.bf16.msra.mxu0 %v1476
        %1534 = vmatpush.bf16.msra.mxu0 %v1475
        %1535 = vmatpush.bf16.msra.mxu0 %v1474
        %1536 = vmatmul.bf16.gmra.mxu0 %v1505
        %v1537 = vpop.f32.mrf.mxu0
        %v1538 = vadd.f32 %v1525, %v1537
        %v1539 = vpop.f32.mrf.mxu0
        %1540 = vdwg.mxu0
        %1541 = vmatpush.bf16.msra.mxu0 %v1489
        %1542 = vmatpush.bf16.msra.mxu0 %v1488
        %1543 = vmatpush.bf16.msra.mxu0 %v1487
        %1544 = vmatpush.bf16.msra.mxu0 %v1486
        %1545 = vmatpush.bf16.msra.mxu0 %v1485
        %1546 = vmatpush.bf16.msra.mxu0 %v1484
        %1547 = vmatpush.bf16.msra.mxu0 %v1483
        %1548 = vmatpush.bf16.msra.mxu0 %v1482
        %1549 = vmatmul.bf16.gmra.mxu0 %v1506
        %v1550 = vpop.f32.mrf.mxu0
        %v1551 = vadd.f32 %v1538, %v1550
        %v1552 = vpop.f32.mrf.mxu0
        %1553 = vdwg.mxu0
        %1554 = vmatpush.bf16.msra.mxu0 0
        %1555 = vmatpush.bf16.msra.mxu0 0
        %1556 = vmatpush.bf16.msra.mxu0 0
        %1557 = vmatpush.bf16.msra.mxu0 0
        %1558 = vmatpush.bf16.msra.mxu0 %v1493
        %1559 = vmatpush.bf16.msra.mxu0 %v1492
        %1560 = vmatpush.bf16.msra.mxu0 %v1491
        %1561 = vmatpush.bf16.msra.mxu0 %v1490
        %1562 = vmatmul.bf16.gmra.mxu0 %v1513
        %v1563 = vpop.f32.mrf.mxu0
        %v1564 = vadd.f32 %v1551, %v1563
        %v1565 = vpop.f32.mrf.mxu0
        %1566 = vdwg.mxu0
        %v1571 = vsel %vm1511, %v1503, 0
        %1573 = vmatpush.bf16.msra.mxu0 %v1318
        %1574 = vmatpush.bf16.msra.mxu0 %v1317
        %1575 = vmatpush.bf16.msra.mxu0 %v1316
        %1576 = vmatpush.bf16.msra.mxu0 %v1315
        %1577 = vmatpush.bf16.msra.mxu0 %v1314
        %1578 = vmatpush.bf16.msra.mxu0 %v1313
        %1579 = vmatpush.bf16.msra.mxu0 %v1312
        %1580 = vmatpush.bf16.msra.mxu0 %v1311
        %1581 = vmatmul.bf16.gmra.mxu0 %v1500
        %v1582 = vpop.f32.mrf.mxu0
        %v1583 = vadd.f32 %v1564, %v1582
        %v1584 = vpop.f32.mrf.mxu0
        %1585 = vdwg.mxu0
        %1586 = vmatpush.bf16.msra.mxu0 %v1326
        %1587 = vmatpush.bf16.msra.mxu0 %v1325
        %1588 = vmatpush.bf16.msra.mxu0 %v1324
        %1589 = vmatpush.bf16.msra.mxu0 %v1323
        %1590 = vmatpush.bf16.msra.mxu0 %v1322
        %1591 = vmatpush.bf16.msra.mxu0 %v1321
        %1592 = vmatpush.bf16.msra.mxu0 %v1320
        %1593 = vmatpush.bf16.msra.mxu0 %v1319
        %1594 = vmatmul.bf16.gmra.mxu0 %v1501
        %v1595 = vpop.f32.mrf.mxu0
        %v1596 = vadd.f32 %v1583, %v1595
        %v1597 = vpop.f32.mrf.mxu0
        %1598 = vdwg.mxu0
        %1599 = vmatpush.bf16.msra.mxu0 %v1334
        %1600 = vmatpush.bf16.msra.mxu0 %v1333
        %1601 = vmatpush.bf16.msra.mxu0 %v1332
        %1602 = vmatpush.bf16.msra.mxu0 %v1331
        %1603 = vmatpush.bf16.msra.mxu0 %v1330
        %1604 = vmatpush.bf16.msra.mxu0 %v1329
        %1605 = vmatpush.bf16.msra.mxu0 %v1328
        %1606 = vmatpush.bf16.msra.mxu0 %v1327
        %1607 = vmatmul.bf16.gmra.mxu0 %v1502
        %v1608 = vpop.f32.mrf.mxu0
        %v1609 = vadd.f32 %v1596, %v1608
        %v1610 = vpop.f32.mrf.mxu0
        %1611 = vdwg.mxu0
        %1612 = vmatpush.bf16.msra.mxu0 0
        %1613 = vmatpush.bf16.msra.mxu0 0
        %1614 = vmatpush.bf16.msra.mxu0 0
        %1615 = vmatpush.bf16.msra.mxu0 0
        %1616 = vmatpush.bf16.msra.mxu0 %v1338
        %1617 = vmatpush.bf16.msra.mxu0 %v1337
        %1618 = vmatpush.bf16.msra.mxu0 %v1336
        %1619 = vmatpush.bf16.msra.mxu0 %v1335
        %1620 = vmatmul.bf16.gmra.mxu0 %v1571
        %v1621 = vpop.f32.mrf.mxu0
        %v1622 = vadd.f32 %v1609, %v1621
        %v1623 = vpop.f32.mrf.mxu0
        %1624 = vdwg.mxu0
        %s1625 = scalar_lea.vmem %s336, 224 [#allocation5]
        %v1626 = vld [vmem:[%s1625] sm:$0xff]
        %v1627 = vld [vmem:[%s1625 + $0x8] sm:$0xff]
        %v1628 = vld [vmem:[%s1625 + $0x10] sm:$0xff]
        %v1629 = vld [vmem:[%s1625 + $0x18] sm:$0xff]
        %v1630 = vld [vmem:[%s1625 + $0x20] sm:$0xff]
        %v1631 = vld [vmem:[%s1625 + $0x28] sm:$0xff]
        %v1632 = vld [vmem:[%s1625 + $0x30] sm:$0xff]
        %v1633 = vld [vmem:[%s1625 + $0x38] sm:$0xff]
        %v1634 = vld [vmem:[%s1625 + $0x40] sm:$0xff]
        %v1635 = vld [vmem:[%s1625 + $0x48] sm:$0xff]
        %v1636 = vld [vmem:[%s1625 + $0x50] sm:$0xff]
        %v1637 = vld [vmem:[%s1625 + $0x58] sm:$0xff]
        %v1638 = vld [vmem:[%s1625 + $0x60] sm:$0xff]
        %v1639 = vld [vmem:[%s1625 + $0x68] sm:$0xff]
        %v1640 = vunpack.c.0.s8 %v1626
        %v1641 = vunpack.c.1.s8 %v1626
        %v1642 = vunpack.c.2.s8 %v1626
        %v1643 = vunpack.c.3.s8 %v1626
        %v1644 = vunpack.c.0.s8 %v1627
        %v1645 = vunpack.c.1.s8 %v1627
        %v1646 = vunpack.c.2.s8 %v1627
        %v1647 = vunpack.c.3.s8 %v1627
        %v1648 = vunpack.c.0.s8 %v1628
        %v1649 = vunpack.c.1.s8 %v1628
        %v1650 = vunpack.c.2.s8 %v1628
        %v1651 = vunpack.c.3.s8 %v1628
        %v1652 = vunpack.c.0.s8 %v1629
        %v1653 = vunpack.c.1.s8 %v1629
        %v1654 = vunpack.c.2.s8 %v1629
        %v1655 = vunpack.c.3.s8 %v1629
        %v1656 = vunpack.c.0.s8 %v1630
        %v1657 = vunpack.c.1.s8 %v1630
        %v1658 = vunpack.c.2.s8 %v1630
        %v1659 = vunpack.c.3.s8 %v1630
        %v1660 = vunpack.c.0.s8 %v1631
        %v1661 = vunpack.c.1.s8 %v1631
        %v1662 = vunpack.c.2.s8 %v1631
        %v1663 = vunpack.c.3.s8 %v1631
        %v1664 = vunpack.c.0.s8 %v1632
        %v1665 = vunpack.c.1.s8 %v1632
        %v1666 = vunpack.c.2.s8 %v1632
        %v1667 = vunpack.c.3.s8 %v1632
        %v1668 = vunpack.c.0.s8 %v1633
        %v1669 = vunpack.c.1.s8 %v1633
        %v1670 = vunpack.c.2.s8 %v1633
        %v1671 = vunpack.c.3.s8 %v1633
        %v1672 = vunpack.c.0.s8 %v1634
        %v1673 = vunpack.c.1.s8 %v1634
        %v1674 = vunpack.c.2.s8 %v1634
        %v1675 = vunpack.c.3.s8 %v1634
        %v1676 = vunpack.c.0.s8 %v1635
        %v1677 = vunpack.c.1.s8 %v1635
        %v1678 = vunpack.c.2.s8 %v1635
        %v1679 = vunpack.c.3.s8 %v1635
        %v1680 = vunpack.c.0.s8 %v1636
        %v1681 = vunpack.c.1.s8 %v1636
        %v1682 = vunpack.c.2.s8 %v1636
        %v1683 = vunpack.c.3.s8 %v1636
        %v1684 = vunpack.c.0.s8 %v1637
        %v1685 = vunpack.c.1.s8 %v1637
        %v1686 = vunpack.c.2.s8 %v1637
        %v1687 = vunpack.c.3.s8 %v1637
        %v1688 = vunpack.c.0.s8 %v1638
        %v1689 = vunpack.c.1.s8 %v1638
        %v1690 = vunpack.c.2.s8 %v1638
        %v1691 = vunpack.c.3.s8 %v1638
        %v1692 = vunpack.c.0.s8 %v1639
        %v1693 = vunpack.c.1.s8 %v1639
        %v1694 = vunpack.c.2.s8 %v1639
        %v1695 = vunpack.c.3.s8 %v1639
        %v1696 = vcvt.s32.f32 %v1640
        %v1697 = vcvt.s32.f32 %v1641
        %v1698 = vcvt.s32.f32 %v1642
        %v1699 = vcvt.s32.f32 %v1643
        %v1700 = vcvt.s32.f32 %v1644
        %v1701 = vcvt.s32.f32 %v1645
        %v1702 = vcvt.s32.f32 %v1646
        %v1703 = vcvt.s32.f32 %v1647
        %v1704 = vcvt.s32.f32 %v1648
        %v1705 = vcvt.s32.f32 %v1649
        %v1706 = vcvt.s32.f32 %v1650
        %v1707 = vcvt.s32.f32 %v1651
        %v1708 = vcvt.s32.f32 %v1652
        %v1709 = vcvt.s32.f32 %v1653
        %v1710 = vcvt.s32.f32 %v1654
        %v1711 = vcvt.s32.f32 %v1655
        %v1712 = vcvt.s32.f32 %v1656
        %v1713 = vcvt.s32.f32 %v1657
        %v1714 = vcvt.s32.f32 %v1658
        %v1715 = vcvt.s32.f32 %v1659
        %v1716 = vcvt.s32.f32 %v1660
        %v1717 = vcvt.s32.f32 %v1661
        %v1718 = vcvt.s32.f32 %v1662
        %v1719 = vcvt.s32.f32 %v1663
        %v1720 = vcvt.s32.f32 %v1664
        %v1721 = vcvt.s32.f32 %v1665
        %v1722 = vcvt.s32.f32 %v1666
        %v1723 = vcvt.s32.f32 %v1667
        %v1724 = vcvt.s32.f32 %v1668
        %v1725 = vcvt.s32.f32 %v1669
        %v1726 = vcvt.s32.f32 %v1670
        %v1727 = vcvt.s32.f32 %v1671
        %v1728 = vcvt.s32.f32 %v1672
        %v1729 = vcvt.s32.f32 %v1673
        %v1730 = vcvt.s32.f32 %v1674
        %v1731 = vcvt.s32.f32 %v1675
        %v1732 = vcvt.s32.f32 %v1676
        %v1733 = vcvt.s32.f32 %v1677
        %v1734 = vcvt.s32.f32 %v1678
        %v1735 = vcvt.s32.f32 %v1679
        %v1736 = vcvt.s32.f32 %v1680
        %v1737 = vcvt.s32.f32 %v1681
        %v1738 = vcvt.s32.f32 %v1682
        %v1739 = vcvt.s32.f32 %v1683
        %v1740 = vcvt.s32.f32 %v1684
        %v1741 = vcvt.s32.f32 %v1685
        %v1742 = vcvt.s32.f32 %v1686
        %v1743 = vcvt.s32.f32 %v1687
        %v1744 = vcvt.s32.f32 %v1688
        %v1745 = vcvt.s32.f32 %v1689
        %v1746 = vcvt.s32.f32 %v1690
        %v1747 = vcvt.s32.f32 %v1691
        %v1748 = vcvt.s32.f32 %v1692
        %v1749 = vcvt.s32.f32 %v1693
        %v1750 = vcvt.s32.f32 %v1694
        %v1751 = vcvt.s32.f32 %v1695
        %v1752 = vpack.c.bf16 %v1697, %v1696
        %v1753 = vpack.c.bf16 %v1699, %v1698
        %v1754 = vpack.c.bf16 %v1701, %v1700
        %v1755 = vpack.c.bf16 %v1703, %v1702
        %v1756 = vpack.c.bf16 %v1705, %v1704
        %v1757 = vpack.c.bf16 %v1707, %v1706
        %v1758 = vpack.c.bf16 %v1709, %v1708
        %v1759 = vpack.c.bf16 %v1711, %v1710
        %v1760 = vpack.c.bf16 %v1713, %v1712
        %v1761 = vpack.c.bf16 %v1715, %v1714
        %v1762 = vpack.c.bf16 %v1717, %v1716
        %v1763 = vpack.c.bf16 %v1719, %v1718
        %v1764 = vpack.c.bf16 %v1721, %v1720
        %v1765 = vpack.c.bf16 %v1723, %v1722
        %v1766 = vpack.c.bf16 %v1725, %v1724
        %v1767 = vpack.c.bf16 %v1727, %v1726
        %v1768 = vpack.c.bf16 %v1729, %v1728
        %v1769 = vpack.c.bf16 %v1731, %v1730
        %v1770 = vpack.c.bf16 %v1733, %v1732
        %v1771 = vpack.c.bf16 %v1735, %v1734
        %v1772 = vpack.c.bf16 %v1737, %v1736
        %v1773 = vpack.c.bf16 %v1739, %v1738
        %v1774 = vpack.c.bf16 %v1741, %v1740
        %v1775 = vpack.c.bf16 %v1743, %v1742
        %v1776 = vpack.c.bf16 %v1745, %v1744
        %v1777 = vpack.c.bf16 %v1747, %v1746
        %v1778 = vpack.c.bf16 %v1749, %v1748
        %v1779 = vpack.c.bf16 %v1751, %v1750
        %v1780 = vrot.slane %v1500, 2
        %v1781 = vrot.slane %v1501, 2
        %v1782 = vrot.slane %v1502, 2
        %v1783 = vrot.slane %v1503, 2
        %v1788 = vsel %vm1511, %v1783, 0
        %1790 = vmatpush.bf16.msra.mxu0 %v1759
        %1791 = vmatpush.bf16.msra.mxu0 %v1758
        %1792 = vmatpush.bf16.msra.mxu0 %v1757
        %1793 = vmatpush.bf16.msra.mxu0 %v1756
        %1794 = vmatpush.bf16.msra.mxu0 %v1755
        %1795 = vmatpush.bf16.msra.mxu0 %v1754
        %1796 = vmatpush.bf16.msra.mxu0 %v1753
        %1797 = vmatpush.bf16.msra.mxu0 %v1752
        %1798 = vmatmul.bf16.gmra.mxu0 %v1780
        %v1799 = vpop.f32.mrf.mxu0
        %v1800 = vadd.f32 0.0, %v1799
        %v1801 = vpop.f32.mrf.mxu0
        %1802 = vdwg.mxu0
        %1803 = vmatpush.bf16.msra.mxu0 %v1767
        %1804 = vmatpush.bf16.msra.mxu0 %v1766
        %1805 = vmatpush.bf16.msra.mxu0 %v1765
        %1806 = vmatpush.bf16.msra.mxu0 %v1764
        %1807 = vmatpush.bf16.msra.mxu0 %v1763
        %1808 = vmatpush.bf16.msra.mxu0 %v1762
        %1809 = vmatpush.bf16.msra.mxu0 %v1761
        %1810 = vmatpush.bf16.msra.mxu0 %v1760
        %1811 = vmatmul.bf16.gmra.mxu0 %v1781
        %v1812 = vpop.f32.mrf.mxu0
        %v1813 = vadd.f32 %v1800, %v1812
        %v1814 = vpop.f32.mrf.mxu0
        %1815 = vdwg.mxu0
        %1816 = vmatpush.bf16.msra.mxu0 %v1775
        %1817 = vmatpush.bf16.msra.mxu0 %v1774
        %1818 = vmatpush.bf16.msra.mxu0 %v1773
        %1819 = vmatpush.bf16.msra.mxu0 %v1772
        %1820 = vmatpush.bf16.msra.mxu0 %v1771
        %1821 = vmatpush.bf16.msra.mxu0 %v1770
        %1822 = vmatpush.bf16.msra.mxu0 %v1769
        %1823 = vmatpush.bf16.msra.mxu0 %v1768
        %1824 = vmatmul.bf16.gmra.mxu0 %v1782
        %v1825 = vpop.f32.mrf.mxu0
        %v1826 = vadd.f32 %v1813, %v1825
        %v1827 = vpop.f32.mrf.mxu0
        %1828 = vdwg.mxu0
        %1829 = vmatpush.bf16.msra.mxu0 0
        %1830 = vmatpush.bf16.msra.mxu0 0
        %1831 = vmatpush.bf16.msra.mxu0 0
        %1832 = vmatpush.bf16.msra.mxu0 0
        %1833 = vmatpush.bf16.msra.mxu0 %v1779
        %1834 = vmatpush.bf16.msra.mxu0 %v1778
        %1835 = vmatpush.bf16.msra.mxu0 %v1777
        %1836 = vmatpush.bf16.msra.mxu0 %v1776
        %1837 = vmatmul.bf16.gmra.mxu0 %v1788
        %v1838 = vpop.f32.mrf.mxu0
        %v1839 = vadd.f32 %v1826, %v1838
        %v1840 = vpop.f32.mrf.mxu0
        %1841 = vdwg.mxu0
        %v1842 = vadd.f32 %v1622, %v1839
        %s1843 = scalar_lea.vmem %s336, 336 [#allocation5]
        %v1844 = vld [vmem:[%s1843] sm:$0xff]
        %v1845 = vld [vmem:[%s1843 + $0x8] sm:$0xff]
        %v1846 = vld [vmem:[%s1843 + $0x10] sm:$0xff]
        %v1847 = vld [vmem:[%s1843 + $0x18] sm:$0xff]
        %v1848 = vld [vmem:[%s1843 + $0x20] sm:$0xff]
        %v1849 = vld [vmem:[%s1843 + $0x28] sm:$0xff]
        %v1850 = vld [vmem:[%s1843 + $0x30] sm:$0xff]
        %v1851 = vld [vmem:[%s1843 + $0x38] sm:$0xff]
        %v1852 = vld [vmem:[%s1843 + $0x40] sm:$0xff]
        %v1853 = vld [vmem:[%s1843 + $0x48] sm:$0xff]
        %v1854 = vld [vmem:[%s1843 + $0x50] sm:$0xff]
        %v1855 = vld [vmem:[%s1843 + $0x58] sm:$0xff]
        %v1856 = vld [vmem:[%s1843 + $0x60] sm:$0xff]
        %v1857 = vld [vmem:[%s1843 + $0x68] sm:$0xff]
        %v1858 = vunpack.c.0.s8 %v1844
        %v1859 = vunpack.c.1.s8 %v1844
        %v1860 = vunpack.c.2.s8 %v1844
        %v1861 = vunpack.c.3.s8 %v1844
        %v1862 = vunpack.c.0.s8 %v1845
        %v1863 = vunpack.c.1.s8 %v1845
        %v1864 = vunpack.c.2.s8 %v1845
        %v1865 = vunpack.c.3.s8 %v1845
        %v1866 = vunpack.c.0.s8 %v1846
        %v1867 = vunpack.c.1.s8 %v1846
        %v1868 = vunpack.c.2.s8 %v1846
        %v1869 = vunpack.c.3.s8 %v1846
        %v1870 = vunpack.c.0.s8 %v1847
        %v1871 = vunpack.c.1.s8 %v1847
        %v1872 = vunpack.c.2.s8 %v1847
        %v1873 = vunpack.c.3.s8 %v1847
        %v1874 = vunpack.c.0.s8 %v1848
        %v1875 = vunpack.c.1.s8 %v1848
        %v1876 = vunpack.c.2.s8 %v1848
        %v1877 = vunpack.c.3.s8 %v1848
        %v1878 = vunpack.c.0.s8 %v1849
        %v1879 = vunpack.c.1.s8 %v1849
        %v1880 = vunpack.c.2.s8 %v1849
        %v1881 = vunpack.c.3.s8 %v1849
        %v1882 = vunpack.c.0.s8 %v1850
        %v1883 = vunpack.c.1.s8 %v1850
        %v1884 = vunpack.c.2.s8 %v1850
        %v1885 = vunpack.c.3.s8 %v1850
        %v1886 = vunpack.c.0.s8 %v1851
        %v1887 = vunpack.c.1.s8 %v1851
        %v1888 = vunpack.c.2.s8 %v1851
        %v1889 = vunpack.c.3.s8 %v1851
        %v1890 = vunpack.c.0.s8 %v1852
        %v1891 = vunpack.c.1.s8 %v1852
        %v1892 = vunpack.c.2.s8 %v1852
        %v1893 = vunpack.c.3.s8 %v1852
        %v1894 = vunpack.c.0.s8 %v1853
        %v1895 = vunpack.c.1.s8 %v1853
        %v1896 = vunpack.c.2.s8 %v1853
        %v1897 = vunpack.c.3.s8 %v1853
        %v1898 = vunpack.c.0.s8 %v1854
        %v1899 = vunpack.c.1.s8 %v1854
        %v1900 = vunpack.c.2.s8 %v1854
        %v1901 = vunpack.c.3.s8 %v1854
        %v1902 = vunpack.c.0.s8 %v1855
        %v1903 = vunpack.c.1.s8 %v1855
        %v1904 = vunpack.c.2.s8 %v1855
        %v1905 = vunpack.c.3.s8 %v1855
        %v1906 = vunpack.c.0.s8 %v1856
        %v1907 = vunpack.c.1.s8 %v1856
        %v1908 = vunpack.c.2.s8 %v1856
        %v1909 = vunpack.c.3.s8 %v1856
        %v1910 = vunpack.c.0.s8 %v1857
        %v1911 = vunpack.c.1.s8 %v1857
        %v1912 = vunpack.c.2.s8 %v1857
        %v1913 = vunpack.c.3.s8 %v1857
        %v1914 = vcvt.s32.f32 %v1858
        %v1915 = vcvt.s32.f32 %v1859
        %v1916 = vcvt.s32.f32 %v1860
        %v1917 = vcvt.s32.f32 %v1861
        %v1918 = vcvt.s32.f32 %v1862
        %v1919 = vcvt.s32.f32 %v1863
        %v1920 = vcvt.s32.f32 %v1864
        %v1921 = vcvt.s32.f32 %v1865
        %v1922 = vcvt.s32.f32 %v1866
        %v1923 = vcvt.s32.f32 %v1867
        %v1924 = vcvt.s32.f32 %v1868
        %v1925 = vcvt.s32.f32 %v1869
        %v1926 = vcvt.s32.f32 %v1870
        %v1927 = vcvt.s32.f32 %v1871
        %v1928 = vcvt.s32.f32 %v1872
        %v1929 = vcvt.s32.f32 %v1873
        %v1930 = vcvt.s32.f32 %v1874
        %v1931 = vcvt.s32.f32 %v1875
        %v1932 = vcvt.s32.f32 %v1876
        %v1933 = vcvt.s32.f32 %v1877
        %v1934 = vcvt.s32.f32 %v1878
        %v1935 = vcvt.s32.f32 %v1879
        %v1936 = vcvt.s32.f32 %v1880
        %v1937 = vcvt.s32.f32 %v1881
        %v1938 = vcvt.s32.f32 %v1882
        %v1939 = vcvt.s32.f32 %v1883
        %v1940 = vcvt.s32.f32 %v1884
        %v1941 = vcvt.s32.f32 %v1885
        %v1942 = vcvt.s32.f32 %v1886
        %v1943 = vcvt.s32.f32 %v1887
        %v1944 = vcvt.s32.f32 %v1888
        %v1945 = vcvt.s32.f32 %v1889
        %v1946 = vcvt.s32.f32 %v1890
        %v1947 = vcvt.s32.f32 %v1891
        %v1948 = vcvt.s32.f32 %v1892
        %v1949 = vcvt.s32.f32 %v1893
        %v1950 = vcvt.s32.f32 %v1894
        %v1951 = vcvt.s32.f32 %v1895
        %v1952 = vcvt.s32.f32 %v1896
        %v1953 = vcvt.s32.f32 %v1897
        %v1954 = vcvt.s32.f32 %v1898
        %v1955 = vcvt.s32.f32 %v1899
        %v1956 = vcvt.s32.f32 %v1900
        %v1957 = vcvt.s32.f32 %v1901
        %v1958 = vcvt.s32.f32 %v1902
        %v1959 = vcvt.s32.f32 %v1903
        %v1960 = vcvt.s32.f32 %v1904
        %v1961 = vcvt.s32.f32 %v1905
        %v1962 = vcvt.s32.f32 %v1906
        %v1963 = vcvt.s32.f32 %v1907
        %v1964 = vcvt.s32.f32 %v1908
        %v1965 = vcvt.s32.f32 %v1909
        %v1966 = vcvt.s32.f32 %v1910
        %v1967 = vcvt.s32.f32 %v1911
        %v1968 = vcvt.s32.f32 %v1912
        %v1969 = vcvt.s32.f32 %v1913
        %v1970 = vpack.c.bf16 %v1915, %v1914
        %v1971 = vpack.c.bf16 %v1917, %v1916
        %v1972 = vpack.c.bf16 %v1919, %v1918
        %v1973 = vpack.c.bf16 %v1921, %v1920
        %v1974 = vpack.c.bf16 %v1923, %v1922
        %v1975 = vpack.c.bf16 %v1925, %v1924
        %v1976 = vpack.c.bf16 %v1927, %v1926
        %v1977 = vpack.c.bf16 %v1929, %v1928
        %v1978 = vpack.c.bf16 %v1931, %v1930
        %v1979 = vpack.c.bf16 %v1933, %v1932
        %v1980 = vpack.c.bf16 %v1935, %v1934
        %v1981 = vpack.c.bf16 %v1937, %v1936
        %v1982 = vpack.c.bf16 %v1939, %v1938
        %v1983 = vpack.c.bf16 %v1941, %v1940
        %v1984 = vpack.c.bf16 %v1943, %v1942
        %v1985 = vpack.c.bf16 %v1945, %v1944
        %v1986 = vpack.c.bf16 %v1947, %v1946
        %v1987 = vpack.c.bf16 %v1949, %v1948
        %v1988 = vpack.c.bf16 %v1951, %v1950
        %v1989 = vpack.c.bf16 %v1953, %v1952
        %v1990 = vpack.c.bf16 %v1955, %v1954
        %v1991 = vpack.c.bf16 %v1957, %v1956
        %v1992 = vpack.c.bf16 %v1959, %v1958
        %v1993 = vpack.c.bf16 %v1961, %v1960
        %v1994 = vpack.c.bf16 %v1963, %v1962
        %v1995 = vpack.c.bf16 %v1965, %v1964
        %v1996 = vpack.c.bf16 %v1967, %v1966
        %v1997 = vpack.c.bf16 %v1969, %v1968
        %v1998 = vrot.slane %v1500, 3
        %v1999 = vrot.slane %v1501, 3
        %v2000 = vrot.slane %v1502, 3
        %v2001 = vrot.slane %v1503, 3
        %v2006 = vsel %vm1511, %v2001, 0
        %2008 = vmatpush.bf16.msra.mxu0 %v1977
        %2009 = vmatpush.bf16.msra.mxu0 %v1976
        %2010 = vmatpush.bf16.msra.mxu0 %v1975
        %2011 = vmatpush.bf16.msra.mxu0 %v1974
        %2012 = vmatpush.bf16.msra.mxu0 %v1973
        %2013 = vmatpush.bf16.msra.mxu0 %v1972
        %2014 = vmatpush.bf16.msra.mxu0 %v1971
        %2015 = vmatpush.bf16.msra.mxu0 %v1970
        %2016 = vmatmul.bf16.gmra.mxu0 %v1998
        %v2017 = vpop.f32.mrf.mxu0
        %v2018 = vadd.f32 0.0, %v2017
        %v2019 = vpop.f32.mrf.mxu0
        %2020 = vdwg.mxu0
        %2021 = vmatpush.bf16.msra.mxu0 %v1985
        %2022 = vmatpush.bf16.msra.mxu0 %v1984
        %2023 = vmatpush.bf16.msra.mxu0 %v1983
        %2024 = vmatpush.bf16.msra.mxu0 %v1982
        %2025 = vmatpush.bf16.msra.mxu0 %v1981
        %2026 = vmatpush.bf16.msra.mxu0 %v1980
        %2027 = vmatpush.bf16.msra.mxu0 %v1979
        %2028 = vmatpush.bf16.msra.mxu0 %v1978
        %2029 = vmatmul.bf16.gmra.mxu0 %v1999
        %v2030 = vpop.f32.mrf.mxu0
        %v2031 = vadd.f32 %v2018, %v2030
        %v2032 = vpop.f32.mrf.mxu0
        %2033 = vdwg.mxu0
        %2034 = vmatpush.bf16.msra.mxu0 %v1993
        %2035 = vmatpush.bf16.msra.mxu0 %v1992
        %2036 = vmatpush.bf16.msra.mxu0 %v1991
        %2037 = vmatpush.bf16.msra.mxu0 %v1990
        %2038 = vmatpush.bf16.msra.mxu0 %v1989
        %2039 = vmatpush.bf16.msra.mxu0 %v1988
        %2040 = vmatpush.bf16.msra.mxu0 %v1987
        %2041 = vmatpush.bf16.msra.mxu0 %v1986
        %2042 = vmatmul.bf16.gmra.mxu0 %v2000
        %v2043 = vpop.f32.mrf.mxu0
        %v2044 = vadd.f32 %v2031, %v2043
        %v2045 = vpop.f32.mrf.mxu0
        %2046 = vdwg.mxu0
        %2047 = vmatpush.bf16.msra.mxu0 0
        %2048 = vmatpush.bf16.msra.mxu0 0
        %2049 = vmatpush.bf16.msra.mxu0 0
        %2050 = vmatpush.bf16.msra.mxu0 0
        %2051 = vmatpush.bf16.msra.mxu0 %v1997
        %2052 = vmatpush.bf16.msra.mxu0 %v1996
        %2053 = vmatpush.bf16.msra.mxu0 %v1995
        %2054 = vmatpush.bf16.msra.mxu0 %v1994
        %2055 = vmatmul.bf16.gmra.mxu0 %v2006
        %v2056 = vpop.f32.mrf.mxu0
        %v2057 = vadd.f32 %v2044, %v2056
        %v2058 = vpop.f32.mrf.mxu0
        %2059 = vdwg.mxu0
        %v2060 = vadd.f32 %v1842, %v2057
        %s2061 = scalar_lea.vmem %s336, 448 [#allocation5]
        %v2062 = vld [vmem:[%s2061] sm:$0xff]
        %v2063 = vld [vmem:[%s2061 + $0x8] sm:$0xff]
        %v2064 = vld [vmem:[%s2061 + $0x10] sm:$0xff]
        %v2065 = vld [vmem:[%s2061 + $0x18] sm:$0xff]
        %v2066 = vld [vmem:[%s2061 + $0x20] sm:$0xff]
        %v2067 = vld [vmem:[%s2061 + $0x28] sm:$0xff]
        %v2068 = vld [vmem:[%s2061 + $0x30] sm:$0xff]
        %v2069 = vld [vmem:[%s2061 + $0x38] sm:$0xff]
        %v2070 = vld [vmem:[%s2061 + $0x40] sm:$0xff]
        %v2071 = vld [vmem:[%s2061 + $0x48] sm:$0xff]
        %v2072 = vld [vmem:[%s2061 + $0x50] sm:$0xff]
        %v2073 = vld [vmem:[%s2061 + $0x58] sm:$0xff]
        %v2074 = vld [vmem:[%s2061 + $0x60] sm:$0xff]
        %v2075 = vld [vmem:[%s2061 + $0x68] sm:$0xff]
        %v2076 = vunpack.c.0.s8 %v2062
        %v2077 = vunpack.c.1.s8 %v2062
        %v2078 = vunpack.c.2.s8 %v2062
        %v2079 = vunpack.c.3.s8 %v2062
        %v2080 = vunpack.c.0.s8 %v2063
        %v2081 = vunpack.c.1.s8 %v2063
        %v2082 = vunpack.c.2.s8 %v2063
        %v2083 = vunpack.c.3.s8 %v2063
        %v2084 = vunpack.c.0.s8 %v2064
        %v2085 = vunpack.c.1.s8 %v2064
        %v2086 = vunpack.c.2.s8 %v2064
        %v2087 = vunpack.c.3.s8 %v2064
        %v2088 = vunpack.c.0.s8 %v2065
        %v2089 = vunpack.c.1.s8 %v2065
        %v2090 = vunpack.c.2.s8 %v2065
        %v2091 = vunpack.c.3.s8 %v2065
        %v2092 = vunpack.c.0.s8 %v2066
        %v2093 = vunpack.c.1.s8 %v2066
        %v2094 = vunpack.c.2.s8 %v2066
        %v2095 = vunpack.c.3.s8 %v2066
        %v2096 = vunpack.c.0.s8 %v2067
        %v2097 = vunpack.c.1.s8 %v2067
        %v2098 = vunpack.c.2.s8 %v2067
        %v2099 = vunpack.c.3.s8 %v2067
        %v2100 = vunpack.c.0.s8 %v2068
        %v2101 = vunpack.c.1.s8 %v2068
        %v2102 = vunpack.c.2.s8 %v2068
        %v2103 = vunpack.c.3.s8 %v2068
        %v2104 = vunpack.c.0.s8 %v2069
        %v2105 = vunpack.c.1.s8 %v2069
        %v2106 = vunpack.c.2.s8 %v2069
        %v2107 = vunpack.c.3.s8 %v2069
        %v2108 = vunpack.c.0.s8 %v2070
        %v2109 = vunpack.c.1.s8 %v2070
        %v2110 = vunpack.c.2.s8 %v2070
        %v2111 = vunpack.c.3.s8 %v2070
        %v2112 = vunpack.c.0.s8 %v2071
        %v2113 = vunpack.c.1.s8 %v2071
        %v2114 = vunpack.c.2.s8 %v2071
        %v2115 = vunpack.c.3.s8 %v2071
        %v2116 = vunpack.c.0.s8 %v2072
        %v2117 = vunpack.c.1.s8 %v2072
        %v2118 = vunpack.c.2.s8 %v2072
        %v2119 = vunpack.c.3.s8 %v2072
        %v2120 = vunpack.c.0.s8 %v2073
        %v2121 = vunpack.c.1.s8 %v2073
        %v2122 = vunpack.c.2.s8 %v2073
        %v2123 = vunpack.c.3.s8 %v2073
        %v2124 = vunpack.c.0.s8 %v2074
        %v2125 = vunpack.c.1.s8 %v2074
        %v2126 = vunpack.c.2.s8 %v2074
        %v2127 = vunpack.c.3.s8 %v2074
        %v2128 = vunpack.c.0.s8 %v2075
        %v2129 = vunpack.c.1.s8 %v2075
        %v2130 = vunpack.c.2.s8 %v2075
        %v2131 = vunpack.c.3.s8 %v2075
        %v2132 = vcvt.s32.f32 %v2076
        %v2133 = vcvt.s32.f32 %v2077
        %v2134 = vcvt.s32.f32 %v2078
        %v2135 = vcvt.s32.f32 %v2079
        %v2136 = vcvt.s32.f32 %v2080
        %v2137 = vcvt.s32.f32 %v2081
        %v2138 = vcvt.s32.f32 %v2082
        %v2139 = vcvt.s32.f32 %v2083
        %v2140 = vcvt.s32.f32 %v2084
        %v2141 = vcvt.s32.f32 %v2085
        %v2142 = vcvt.s32.f32 %v2086
        %v2143 = vcvt.s32.f32 %v2087
        %v2144 = vcvt.s32.f32 %v2088
        %v2145 = vcvt.s32.f32 %v2089
        %v2146 = vcvt.s32.f32 %v2090
        %v2147 = vcvt.s32.f32 %v2091
        %v2148 = vcvt.s32.f32 %v2092
        %v2149 = vcvt.s32.f32 %v2093
        %v2150 = vcvt.s32.f32 %v2094
        %v2151 = vcvt.s32.f32 %v2095
        %v2152 = vcvt.s32.f32 %v2096
        %v2153 = vcvt.s32.f32 %v2097
        %v2154 = vcvt.s32.f32 %v2098
        %v2155 = vcvt.s32.f32 %v2099
        %v2156 = vcvt.s32.f32 %v2100
        %v2157 = vcvt.s32.f32 %v2101
        %v2158 = vcvt.s32.f32 %v2102
        %v2159 = vcvt.s32.f32 %v2103
        %v2160 = vcvt.s32.f32 %v2104
        %v2161 = vcvt.s32.f32 %v2105
        %v2162 = vcvt.s32.f32 %v2106
        %v2163 = vcvt.s32.f32 %v2107
        %v2164 = vcvt.s32.f32 %v2108
        %v2165 = vcvt.s32.f32 %v2109
        %v2166 = vcvt.s32.f32 %v2110
        %v2167 = vcvt.s32.f32 %v2111
        %v2168 = vcvt.s32.f32 %v2112
        %v2169 = vcvt.s32.f32 %v2113
        %v2170 = vcvt.s32.f32 %v2114
        %v2171 = vcvt.s32.f32 %v2115
        %v2172 = vcvt.s32.f32 %v2116
        %v2173 = vcvt.s32.f32 %v2117
        %v2174 = vcvt.s32.f32 %v2118
        %v2175 = vcvt.s32.f32 %v2119
        %v2176 = vcvt.s32.f32 %v2120
        %v2177 = vcvt.s32.f32 %v2121
        %v2178 = vcvt.s32.f32 %v2122
        %v2179 = vcvt.s32.f32 %v2123
        %v2180 = vcvt.s32.f32 %v2124
        %v2181 = vcvt.s32.f32 %v2125
        %v2182 = vcvt.s32.f32 %v2126
        %v2183 = vcvt.s32.f32 %v2127
        %v2184 = vcvt.s32.f32 %v2128
        %v2185 = vcvt.s32.f32 %v2129
        %v2186 = vcvt.s32.f32 %v2130
        %v2187 = vcvt.s32.f32 %v2131
        %v2188 = vpack.c.bf16 %v2133, %v2132
        %v2189 = vpack.c.bf16 %v2135, %v2134
        %v2190 = vpack.c.bf16 %v2137, %v2136
        %v2191 = vpack.c.bf16 %v2139, %v2138
        %v2192 = vpack.c.bf16 %v2141, %v2140
        %v2193 = vpack.c.bf16 %v2143, %v2142
        %v2194 = vpack.c.bf16 %v2145, %v2144
        %v2195 = vpack.c.bf16 %v2147, %v2146
        %v2196 = vpack.c.bf16 %v2149, %v2148
        %v2197 = vpack.c.bf16 %v2151, %v2150
        %v2198 = vpack.c.bf16 %v2153, %v2152
        %v2199 = vpack.c.bf16 %v2155, %v2154
        %v2200 = vpack.c.bf16 %v2157, %v2156
        %v2201 = vpack.c.bf16 %v2159, %v2158
        %v2202 = vpack.c.bf16 %v2161, %v2160
        %v2203 = vpack.c.bf16 %v2163, %v2162
        %v2204 = vpack.c.bf16 %v2165, %v2164
        %v2205 = vpack.c.bf16 %v2167, %v2166
        %v2206 = vpack.c.bf16 %v2169, %v2168
        %v2207 = vpack.c.bf16 %v2171, %v2170
        %v2208 = vpack.c.bf16 %v2173, %v2172
        %v2209 = vpack.c.bf16 %v2175, %v2174
        %v2210 = vpack.c.bf16 %v2177, %v2176
        %v2211 = vpack.c.bf16 %v2179, %v2178
        %v2212 = vpack.c.bf16 %v2181, %v2180
        %v2213 = vpack.c.bf16 %v2183, %v2182
        %v2214 = vpack.c.bf16 %v2185, %v2184
        %v2215 = vpack.c.bf16 %v2187, %v2186
        %v2218 = vunpack.c.l.b16 %v1183
        %v2219 = vunpack.c.h.b16 %v1183
        %v2220 = vunpack.c.l.b16 %v1184
        %v2221 = vunpack.c.h.b16 %v1184
        %v2222 = vpack.c.b16 %v2218, %v2218
        %v2223 = vpack.c.b16 %v2219, %v2219
        %v2224 = vpack.c.b16 %v2220, %v2220
        %v2225 = vpack.c.b16 %v2221, %v2221
        %v2230 = vsel %vm1511, %v2225, 0
        %2232 = vmatpush.bf16.msra.mxu0 %v2195
        %2233 = vmatpush.bf16.msra.mxu0 %v2194
        %2234 = vmatpush.bf16.msra.mxu0 %v2193
        %2235 = vmatpush.bf16.msra.mxu0 %v2192
        %2236 = vmatpush.bf16.msra.mxu0 %v2191
        %2237 = vmatpush.bf16.msra.mxu0 %v2190
        %2238 = vmatpush.bf16.msra.mxu0 %v2189
        %2239 = vmatpush.bf16.msra.mxu0 %v2188
        %2240 = vmatmul.bf16.gmra.mxu0 %v2222
        %v2241 = vpop.f32.mrf.mxu0
        %v2242 = vadd.f32 0.0, %v2241
        %v2243 = vpop.f32.mrf.mxu0
        %2244 = vdwg.mxu0
        %2245 = vmatpush.bf16.msra.mxu0 %v2203
        %2246 = vmatpush.bf16.msra.mxu0 %v2202
        %2247 = vmatpush.bf16.msra.mxu0 %v2201
        %2248 = vmatpush.bf16.msra.mxu0 %v2200
        %2249 = vmatpush.bf16.msra.mxu0 %v2199
        %2250 = vmatpush.bf16.msra.mxu0 %v2198
        %2251 = vmatpush.bf16.msra.mxu0 %v2197
        %2252 = vmatpush.bf16.msra.mxu0 %v2196
        %2253 = vmatmul.bf16.gmra.mxu0 %v2223
        %v2254 = vpop.f32.mrf.mxu0
        %v2255 = vadd.f32 %v2242, %v2254
        %v2256 = vpop.f32.mrf.mxu0
        %2257 = vdwg.mxu0
        %2258 = vmatpush.bf16.msra.mxu0 %v2211
        %2259 = vmatpush.bf16.msra.mxu0 %v2210
        %2260 = vmatpush.bf16.msra.mxu0 %v2209
        %2261 = vmatpush.bf16.msra.mxu0 %v2208
        %2262 = vmatpush.bf16.msra.mxu0 %v2207
        %2263 = vmatpush.bf16.msra.mxu0 %v2206
        %2264 = vmatpush.bf16.msra.mxu0 %v2205
        %2265 = vmatpush.bf16.msra.mxu0 %v2204
        %2266 = vmatmul.bf16.gmra.mxu0 %v2224
        %v2267 = vpop.f32.mrf.mxu0
        %v2268 = vadd.f32 %v2255, %v2267
        %v2269 = vpop.f32.mrf.mxu0
        %2270 = vdwg.mxu0
        %2271 = vmatpush.bf16.msra.mxu0 0
        %2272 = vmatpush.bf16.msra.mxu0 0
        %2273 = vmatpush.bf16.msra.mxu0 0
        %2274 = vmatpush.bf16.msra.mxu0 0
        %2275 = vmatpush.bf16.msra.mxu0 %v2215
        %2276 = vmatpush.bf16.msra.mxu0 %v2214
        %2277 = vmatpush.bf16.msra.mxu0 %v2213
        %2278 = vmatpush.bf16.msra.mxu0 %v2212
        %2279 = vmatmul.bf16.gmra.mxu0 %v2230
        %v2280 = vpop.f32.mrf.mxu0
        %v2281 = vadd.f32 %v2268, %v2280
        %v2282 = vpop.f32.mrf.mxu0
        %2283 = vdwg.mxu0
        %v2284 = vadd.f32 %v2060, %v2281
        %s2285 = scalar_lea.vmem %s336, 560 [#allocation5]
        %v2286 = vld [vmem:[%s2285] sm:$0xff]
        %v2287 = vld [vmem:[%s2285 + $0x8] sm:$0xff]
        %v2288 = vld [vmem:[%s2285 + $0x10] sm:$0xff]
        %v2289 = vld [vmem:[%s2285 + $0x18] sm:$0xff]
        %v2290 = vld [vmem:[%s2285 + $0x20] sm:$0xff]
        %v2291 = vld [vmem:[%s2285 + $0x28] sm:$0xff]
        %v2292 = vld [vmem:[%s2285 + $0x30] sm:$0xff]
        %v2293 = vld [vmem:[%s2285 + $0x38] sm:$0xff]
        %v2294 = vld [vmem:[%s2285 + $0x40] sm:$0xff]
        %v2295 = vld [vmem:[%s2285 + $0x48] sm:$0xff]
        %v2296 = vld [vmem:[%s2285 + $0x50] sm:$0xff]
        %v2297 = vld [vmem:[%s2285 + $0x58] sm:$0xff]
        %v2298 = vld [vmem:[%s2285 + $0x60] sm:$0xff]
        %v2299 = vld [vmem:[%s2285 + $0x68] sm:$0xff]
        %v2300 = vunpack.c.0.s8 %v2286
        %v2301 = vunpack.c.1.s8 %v2286
        %v2302 = vunpack.c.2.s8 %v2286
        %v2303 = vunpack.c.3.s8 %v2286
        %v2304 = vunpack.c.0.s8 %v2287
        %v2305 = vunpack.c.1.s8 %v2287
        %v2306 = vunpack.c.2.s8 %v2287
        %v2307 = vunpack.c.3.s8 %v2287
        %v2308 = vunpack.c.0.s8 %v2288
        %v2309 = vunpack.c.1.s8 %v2288
        %v2310 = vunpack.c.2.s8 %v2288
        %v2311 = vunpack.c.3.s8 %v2288
        %v2312 = vunpack.c.0.s8 %v2289
        %v2313 = vunpack.c.1.s8 %v2289
        %v2314 = vunpack.c.2.s8 %v2289
        %v2315 = vunpack.c.3.s8 %v2289
        %v2316 = vunpack.c.0.s8 %v2290
        %v2317 = vunpack.c.1.s8 %v2290
        %v2318 = vunpack.c.2.s8 %v2290
        %v2319 = vunpack.c.3.s8 %v2290
        %v2320 = vunpack.c.0.s8 %v2291
        %v2321 = vunpack.c.1.s8 %v2291
        %v2322 = vunpack.c.2.s8 %v2291
        %v2323 = vunpack.c.3.s8 %v2291
        %v2324 = vunpack.c.0.s8 %v2292
        %v2325 = vunpack.c.1.s8 %v2292
        %v2326 = vunpack.c.2.s8 %v2292
        %v2327 = vunpack.c.3.s8 %v2292
        %v2328 = vunpack.c.0.s8 %v2293
        %v2329 = vunpack.c.1.s8 %v2293
        %v2330 = vunpack.c.2.s8 %v2293
        %v2331 = vunpack.c.3.s8 %v2293
        %v2332 = vunpack.c.0.s8 %v2294
        %v2333 = vunpack.c.1.s8 %v2294
        %v2334 = vunpack.c.2.s8 %v2294
        %v2335 = vunpack.c.3.s8 %v2294
        %v2336 = vunpack.c.0.s8 %v2295
        %v2337 = vunpack.c.1.s8 %v2295
        %v2338 = vunpack.c.2.s8 %v2295
        %v2339 = vunpack.c.3.s8 %v2295
        %v2340 = vunpack.c.0.s8 %v2296
        %v2341 = vunpack.c.1.s8 %v2296
        %v2342 = vunpack.c.2.s8 %v2296
        %v2343 = vunpack.c.3.s8 %v2296
        %v2344 = vunpack.c.0.s8 %v2297
        %v2345 = vunpack.c.1.s8 %v2297
        %v2346 = vunpack.c.2.s8 %v2297
        %v2347 = vunpack.c.3.s8 %v2297
        %v2348 = vunpack.c.0.s8 %v2298
        %v2349 = vunpack.c.1.s8 %v2298
        %v2350 = vunpack.c.2.s8 %v2298
        %v2351 = vunpack.c.3.s8 %v2298
        %v2352 = vunpack.c.0.s8 %v2299
        %v2353 = vunpack.c.1.s8 %v2299
        %v2354 = vunpack.c.2.s8 %v2299
        %v2355 = vunpack.c.3.s8 %v2299
        %v2356 = vcvt.s32.f32 %v2300
        %v2357 = vcvt.s32.f32 %v2301
        %v2358 = vcvt.s32.f32 %v2302
        %v2359 = vcvt.s32.f32 %v2303
        %v2360 = vcvt.s32.f32 %v2304
        %v2361 = vcvt.s32.f32 %v2305
        %v2362 = vcvt.s32.f32 %v2306
        %v2363 = vcvt.s32.f32 %v2307
        %v2364 = vcvt.s32.f32 %v2308
        %v2365 = vcvt.s32.f32 %v2309
        %v2366 = vcvt.s32.f32 %v2310
        %v2367 = vcvt.s32.f32 %v2311
        %v2368 = vcvt.s32.f32 %v2312
        %v2369 = vcvt.s32.f32 %v2313
        %v2370 = vcvt.s32.f32 %v2314
        %v2371 = vcvt.s32.f32 %v2315
        %v2372 = vcvt.s32.f32 %v2316
        %v2373 = vcvt.s32.f32 %v2317
        %v2374 = vcvt.s32.f32 %v2318
        %v2375 = vcvt.s32.f32 %v2319
        %v2376 = vcvt.s32.f32 %v2320
        %v2377 = vcvt.s32.f32 %v2321
        %v2378 = vcvt.s32.f32 %v2322
        %v2379 = vcvt.s32.f32 %v2323
        %v2380 = vcvt.s32.f32 %v2324
        %v2381 = vcvt.s32.f32 %v2325
        %v2382 = vcvt.s32.f32 %v2326
        %v2383 = vcvt.s32.f32 %v2327
        %v2384 = vcvt.s32.f32 %v2328
        %v2385 = vcvt.s32.f32 %v2329
        %v2386 = vcvt.s32.f32 %v2330
        %v2387 = vcvt.s32.f32 %v2331
        %v2388 = vcvt.s32.f32 %v2332
        %v2389 = vcvt.s32.f32 %v2333
        %v2390 = vcvt.s32.f32 %v2334
        %v2391 = vcvt.s32.f32 %v2335
        %v2392 = vcvt.s32.f32 %v2336
        %v2393 = vcvt.s32.f32 %v2337
        %v2394 = vcvt.s32.f32 %v2338
        %v2395 = vcvt.s32.f32 %v2339
        %v2396 = vcvt.s32.f32 %v2340
        %v2397 = vcvt.s32.f32 %v2341
        %v2398 = vcvt.s32.f32 %v2342
        %v2399 = vcvt.s32.f32 %v2343
        %v2400 = vcvt.s32.f32 %v2344
        %v2401 = vcvt.s32.f32 %v2345
        %v2402 = vcvt.s32.f32 %v2346
        %v2403 = vcvt.s32.f32 %v2347
        %v2404 = vcvt.s32.f32 %v2348
        %v2405 = vcvt.s32.f32 %v2349
        %v2406 = vcvt.s32.f32 %v2350
        %v2407 = vcvt.s32.f32 %v2351
        %v2408 = vcvt.s32.f32 %v2352
        %v2409 = vcvt.s32.f32 %v2353
        %v2410 = vcvt.s32.f32 %v2354
        %v2411 = vcvt.s32.f32 %v2355
        %v2412 = vpack.c.bf16 %v2357, %v2356
        %v2413 = vpack.c.bf16 %v2359, %v2358
        %v2414 = vpack.c.bf16 %v2361, %v2360
        %v2415 = vpack.c.bf16 %v2363, %v2362
        %v2416 = vpack.c.bf16 %v2365, %v2364
        %v2417 = vpack.c.bf16 %v2367, %v2366
        %v2418 = vpack.c.bf16 %v2369, %v2368
        %v2419 = vpack.c.bf16 %v2371, %v2370
        %v2420 = vpack.c.bf16 %v2373, %v2372
        %v2421 = vpack.c.bf16 %v2375, %v2374
        %v2422 = vpack.c.bf16 %v2377, %v2376
        %v2423 = vpack.c.bf16 %v2379, %v2378
        %v2424 = vpack.c.bf16 %v2381, %v2380
        %v2425 = vpack.c.bf16 %v2383, %v2382
        %v2426 = vpack.c.bf16 %v2385, %v2384
        %v2427 = vpack.c.bf16 %v2387, %v2386
        %v2428 = vpack.c.bf16 %v2389, %v2388
        %v2429 = vpack.c.bf16 %v2391, %v2390
        %v2430 = vpack.c.bf16 %v2393, %v2392
        %v2431 = vpack.c.bf16 %v2395, %v2394
        %v2432 = vpack.c.bf16 %v2397, %v2396
        %v2433 = vpack.c.bf16 %v2399, %v2398
        %v2434 = vpack.c.bf16 %v2401, %v2400
        %v2435 = vpack.c.bf16 %v2403, %v2402
        %v2436 = vpack.c.bf16 %v2405, %v2404
        %v2437 = vpack.c.bf16 %v2407, %v2406
        %v2438 = vpack.c.bf16 %v2409, %v2408
        %v2439 = vpack.c.bf16 %v2411, %v2410
        %v2440 = vrot.slane %v2222, 1
        %v2441 = vrot.slane %v2223, 1
        %v2442 = vrot.slane %v2224, 1
        %v2443 = vrot.slane %v2225, 1
        %v2448 = vsel %vm1511, %v2443, 0
        %2450 = vmatpush.bf16.msra.mxu0 %v2419
        %2451 = vmatpush.bf16.msra.mxu0 %v2418
        %2452 = vmatpush.bf16.msra.mxu0 %v2417
        %2453 = vmatpush.bf16.msra.mxu0 %v2416
        %2454 = vmatpush.bf16.msra.mxu0 %v2415
        %2455 = vmatpush.bf16.msra.mxu0 %v2414
        %2456 = vmatpush.bf16.msra.mxu0 %v2413
        %2457 = vmatpush.bf16.msra.mxu0 %v2412
        %2458 = vmatmul.bf16.gmra.mxu0 %v2440
        %v2459 = vpop.f32.mrf.mxu0
        %v2460 = vadd.f32 0.0, %v2459
        %v2461 = vpop.f32.mrf.mxu0
        %2462 = vdwg.mxu0
        %2463 = vmatpush.bf16.msra.mxu0 %v2427
        %2464 = vmatpush.bf16.msra.mxu0 %v2426
        %2465 = vmatpush.bf16.msra.mxu0 %v2425
        %2466 = vmatpush.bf16.msra.mxu0 %v2424
        %2467 = vmatpush.bf16.msra.mxu0 %v2423
        %2468 = vmatpush.bf16.msra.mxu0 %v2422
        %2469 = vmatpush.bf16.msra.mxu0 %v2421
        %2470 = vmatpush.bf16.msra.mxu0 %v2420
        %2471 = vmatmul.bf16.gmra.mxu0 %v2441
        %v2472 = vpop.f32.mrf.mxu0
        %v2473 = vadd.f32 %v2460, %v2472
        %v2474 = vpop.f32.mrf.mxu0
        %2475 = vdwg.mxu0
        %2476 = vmatpush.bf16.msra.mxu0 %v2435
        %2477 = vmatpush.bf16.msra.mxu0 %v2434
        %2478 = vmatpush.bf16.msra.mxu0 %v2433
        %2479 = vmatpush.bf16.msra.mxu0 %v2432
        %2480 = vmatpush.bf16.msra.mxu0 %v2431
        %2481 = vmatpush.bf16.msra.mxu0 %v2430
        %2482 = vmatpush.bf16.msra.mxu0 %v2429
        %2483 = vmatpush.bf16.msra.mxu0 %v2428
        %2484 = vmatmul.bf16.gmra.mxu0 %v2442
        %v2485 = vpop.f32.mrf.mxu0
        %v2486 = vadd.f32 %v2473, %v2485
        %v2487 = vpop.f32.mrf.mxu0
        %2488 = vdwg.mxu0
        %2489 = vmatpush.bf16.msra.mxu0 0
        %2490 = vmatpush.bf16.msra.mxu0 0
        %2491 = vmatpush.bf16.msra.mxu0 0
        %2492 = vmatpush.bf16.msra.mxu0 0
        %2493 = vmatpush.bf16.msra.mxu0 %v2439
        %2494 = vmatpush.bf16.msra.mxu0 %v2438
        %2495 = vmatpush.bf16.msra.mxu0 %v2437
        %2496 = vmatpush.bf16.msra.mxu0 %v2436
        %2497 = vmatmul.bf16.gmra.mxu0 %v2448
        %v2498 = vpop.f32.mrf.mxu0
        %v2499 = vadd.f32 %v2486, %v2498
        %v2500 = vpop.f32.mrf.mxu0
        %2501 = vdwg.mxu0
        %v2502 = vadd.f32 %v2284, %v2499
        %s2503 = scalar_lea.vmem %s336, 672 [#allocation5]
        %v2504 = vld [vmem:[%s2503] sm:$0xff]
        %v2505 = vld [vmem:[%s2503 + $0x8] sm:$0xff]
        %v2506 = vld [vmem:[%s2503 + $0x10] sm:$0xff]
        %v2507 = vld [vmem:[%s2503 + $0x18] sm:$0xff]
        %v2508 = vld [vmem:[%s2503 + $0x20] sm:$0xff]
        %v2509 = vld [vmem:[%s2503 + $0x28] sm:$0xff]
        %v2510 = vld [vmem:[%s2503 + $0x30] sm:$0xff]
        %v2511 = vld [vmem:[%s2503 + $0x38] sm:$0xff]
        %v2512 = vld [vmem:[%s2503 + $0x40] sm:$0xff]
        %v2513 = vld [vmem:[%s2503 + $0x48] sm:$0xff]
        %v2514 = vld [vmem:[%s2503 + $0x50] sm:$0xff]
        %v2515 = vld [vmem:[%s2503 + $0x58] sm:$0xff]
        %v2516 = vld [vmem:[%s2503 + $0x60] sm:$0xff]
        %v2517 = vld [vmem:[%s2503 + $0x68] sm:$0xff]
        %v2518 = vunpack.c.0.s8 %v2504
        %v2519 = vunpack.c.1.s8 %v2504
        %v2520 = vunpack.c.2.s8 %v2504
        %v2521 = vunpack.c.3.s8 %v2504
        %v2522 = vunpack.c.0.s8 %v2505
        %v2523 = vunpack.c.1.s8 %v2505
        %v2524 = vunpack.c.2.s8 %v2505
        %v2525 = vunpack.c.3.s8 %v2505
        %v2526 = vunpack.c.0.s8 %v2506
        %v2527 = vunpack.c.1.s8 %v2506
        %v2528 = vunpack.c.2.s8 %v2506
        %v2529 = vunpack.c.3.s8 %v2506
        %v2530 = vunpack.c.0.s8 %v2507
        %v2531 = vunpack.c.1.s8 %v2507
        %v2532 = vunpack.c.2.s8 %v2507
        %v2533 = vunpack.c.3.s8 %v2507
        %v2534 = vunpack.c.0.s8 %v2508
        %v2535 = vunpack.c.1.s8 %v2508
        %v2536 = vunpack.c.2.s8 %v2508
        %v2537 = vunpack.c.3.s8 %v2508
        %v2538 = vunpack.c.0.s8 %v2509
        %v2539 = vunpack.c.1.s8 %v2509
        %v2540 = vunpack.c.2.s8 %v2509
        %v2541 = vunpack.c.3.s8 %v2509
        %v2542 = vunpack.c.0.s8 %v2510
        %v2543 = vunpack.c.1.s8 %v2510
        %v2544 = vunpack.c.2.s8 %v2510
        %v2545 = vunpack.c.3.s8 %v2510
        %v2546 = vunpack.c.0.s8 %v2511
        %v2547 = vunpack.c.1.s8 %v2511
        %v2548 = vunpack.c.2.s8 %v2511
        %v2549 = vunpack.c.3.s8 %v2511
        %v2550 = vunpack.c.0.s8 %v2512
        %v2551 = vunpack.c.1.s8 %v2512
        %v2552 = vunpack.c.2.s8 %v2512
        %v2553 = vunpack.c.3.s8 %v2512
        %v2554 = vunpack.c.0.s8 %v2513
        %v2555 = vunpack.c.1.s8 %v2513
        %v2556 = vunpack.c.2.s8 %v2513
        %v2557 = vunpack.c.3.s8 %v2513
        %v2558 = vunpack.c.0.s8 %v2514
        %v2559 = vunpack.c.1.s8 %v2514
        %v2560 = vunpack.c.2.s8 %v2514
        %v2561 = vunpack.c.3.s8 %v2514
        %v2562 = vunpack.c.0.s8 %v2515
        %v2563 = vunpack.c.1.s8 %v2515
        %v2564 = vunpack.c.2.s8 %v2515
        %v2565 = vunpack.c.3.s8 %v2515
        %v2566 = vunpack.c.0.s8 %v2516
        %v2567 = vunpack.c.1.s8 %v2516
        %v2568 = vunpack.c.2.s8 %v2516
        %v2569 = vunpack.c.3.s8 %v2516
        %v2570 = vunpack.c.0.s8 %v2517
        %v2571 = vunpack.c.1.s8 %v2517
        %v2572 = vunpack.c.2.s8 %v2517
        %v2573 = vunpack.c.3.s8 %v2517
        %v2574 = vcvt.s32.f32 %v2518
        %v2575 = vcvt.s32.f32 %v2519
        %v2576 = vcvt.s32.f32 %v2520
        %v2577 = vcvt.s32.f32 %v2521
        %v2578 = vcvt.s32.f32 %v2522
        %v2579 = vcvt.s32.f32 %v2523
        %v2580 = vcvt.s32.f32 %v2524
        %v2581 = vcvt.s32.f32 %v2525
        %v2582 = vcvt.s32.f32 %v2526
        %v2583 = vcvt.s32.f32 %v2527
        %v2584 = vcvt.s32.f32 %v2528
        %v2585 = vcvt.s32.f32 %v2529
        %v2586 = vcvt.s32.f32 %v2530
        %v2587 = vcvt.s32.f32 %v2531
        %v2588 = vcvt.s32.f32 %v2532
        %v2589 = vcvt.s32.f32 %v2533
        %v2590 = vcvt.s32.f32 %v2534
        %v2591 = vcvt.s32.f32 %v2535
        %v2592 = vcvt.s32.f32 %v2536
        %v2593 = vcvt.s32.f32 %v2537
        %v2594 = vcvt.s32.f32 %v2538
        %v2595 = vcvt.s32.f32 %v2539
        %v2596 = vcvt.s32.f32 %v2540
        %v2597 = vcvt.s32.f32 %v2541
        %v2598 = vcvt.s32.f32 %v2542
        %v2599 = vcvt.s32.f32 %v2543
        %v2600 = vcvt.s32.f32 %v2544
        %v2601 = vcvt.s32.f32 %v2545
        %v2602 = vcvt.s32.f32 %v2546
        %v2603 = vcvt.s32.f32 %v2547
        %v2604 = vcvt.s32.f32 %v2548
        %v2605 = vcvt.s32.f32 %v2549
        %v2606 = vcvt.s32.f32 %v2550
        %v2607 = vcvt.s32.f32 %v2551
        %v2608 = vcvt.s32.f32 %v2552
        %v2609 = vcvt.s32.f32 %v2553
        %v2610 = vcvt.s32.f32 %v2554
        %v2611 = vcvt.s32.f32 %v2555
        %v2612 = vcvt.s32.f32 %v2556
        %v2613 = vcvt.s32.f32 %v2557
        %v2614 = vcvt.s32.f32 %v2558
        %v2615 = vcvt.s32.f32 %v2559
        %v2616 = vcvt.s32.f32 %v2560
        %v2617 = vcvt.s32.f32 %v2561
        %v2618 = vcvt.s32.f32 %v2562
        %v2619 = vcvt.s32.f32 %v2563
        %v2620 = vcvt.s32.f32 %v2564
        %v2621 = vcvt.s32.f32 %v2565
        %v2622 = vcvt.s32.f32 %v2566
        %v2623 = vcvt.s32.f32 %v2567
        %v2624 = vcvt.s32.f32 %v2568
        %v2625 = vcvt.s32.f32 %v2569
        %v2626 = vcvt.s32.f32 %v2570
        %v2627 = vcvt.s32.f32 %v2571
        %v2628 = vcvt.s32.f32 %v2572
        %v2629 = vcvt.s32.f32 %v2573
        %v2630 = vpack.c.bf16 %v2575, %v2574
        %v2631 = vpack.c.bf16 %v2577, %v2576
        %v2632 = vpack.c.bf16 %v2579, %v2578
        %v2633 = vpack.c.bf16 %v2581, %v2580
        %v2634 = vpack.c.bf16 %v2583, %v2582
        %v2635 = vpack.c.bf16 %v2585, %v2584
        %v2636 = vpack.c.bf16 %v2587, %v2586
        %v2637 = vpack.c.bf16 %v2589, %v2588
        %v2638 = vpack.c.bf16 %v2591, %v2590
        %v2639 = vpack.c.bf16 %v2593, %v2592
        %v2640 = vpack.c.bf16 %v2595, %v2594
        %v2641 = vpack.c.bf16 %v2597, %v2596
        %v2642 = vpack.c.bf16 %v2599, %v2598
        %v2643 = vpack.c.bf16 %v2601, %v2600
        %v2644 = vpack.c.bf16 %v2603, %v2602
        %v2645 = vpack.c.bf16 %v2605, %v2604
        %v2646 = vpack.c.bf16 %v2607, %v2606
        %v2647 = vpack.c.bf16 %v2609, %v2608
        %v2648 = vpack.c.bf16 %v2611, %v2610
        %v2649 = vpack.c.bf16 %v2613, %v2612
        %v2650 = vpack.c.bf16 %v2615, %v2614
        %v2651 = vpack.c.bf16 %v2617, %v2616
        %v2652 = vpack.c.bf16 %v2619, %v2618
        %v2653 = vpack.c.bf16 %v2621, %v2620
        %v2654 = vpack.c.bf16 %v2623, %v2622
        %v2655 = vpack.c.bf16 %v2625, %v2624
        %v2656 = vpack.c.bf16 %v2627, %v2626
        %v2657 = vpack.c.bf16 %v2629, %v2628
        %v2658 = vrot.slane %v2222, 2
        %v2659 = vrot.slane %v2223, 2
        %v2660 = vrot.slane %v2224, 2
        %v2661 = vrot.slane %v2225, 2
        %v2666 = vsel %vm1511, %v2661, 0
        %2668 = vmatpush.bf16.msra.mxu0 %v2637
        %2669 = vmatpush.bf16.msra.mxu0 %v2636
        %2670 = vmatpush.bf16.msra.mxu0 %v2635
        %2671 = vmatpush.bf16.msra.mxu0 %v2634
        %2672 = vmatpush.bf16.msra.mxu0 %v2633
        %2673 = vmatpush.bf16.msra.mxu0 %v2632
        %2674 = vmatpush.bf16.msra.mxu0 %v2631
        %2675 = vmatpush.bf16.msra.mxu0 %v2630
        %2676 = vmatmul.bf16.gmra.mxu0 %v2658
        %v2677 = vpop.f32.mrf.mxu0
        %v2678 = vadd.f32 0.0, %v2677
        %v2679 = vpop.f32.mrf.mxu0
        %2680 = vdwg.mxu0
        %2681 = vmatpush.bf16.msra.mxu0 %v2645
        %2682 = vmatpush.bf16.msra.mxu0 %v2644
        %2683 = vmatpush.bf16.msra.mxu0 %v2643
        %2684 = vmatpush.bf16.msra.mxu0 %v2642
        %2685 = vmatpush.bf16.msra.mxu0 %v2641
        %2686 = vmatpush.bf16.msra.mxu0 %v2640
        %2687 = vmatpush.bf16.msra.mxu0 %v2639
        %2688 = vmatpush.bf16.msra.mxu0 %v2638
        %2689 = vmatmul.bf16.gmra.mxu0 %v2659
        %v2690 = vpop.f32.mrf.mxu0
        %v2691 = vadd.f32 %v2678, %v2690
        %v2692 = vpop.f32.mrf.mxu0
        %2693 = vdwg.mxu0
        %2694 = vmatpush.bf16.msra.mxu0 %v2653
        %2695 = vmatpush.bf16.msra.mxu0 %v2652
        %2696 = vmatpush.bf16.msra.mxu0 %v2651
        %2697 = vmatpush.bf16.msra.mxu0 %v2650
        %2698 = vmatpush.bf16.msra.mxu0 %v2649
        %2699 = vmatpush.bf16.msra.mxu0 %v2648
        %2700 = vmatpush.bf16.msra.mxu0 %v2647
        %2701 = vmatpush.bf16.msra.mxu0 %v2646
        %2702 = vmatmul.bf16.gmra.mxu0 %v2660
        %v2703 = vpop.f32.mrf.mxu0
        %v2704 = vadd.f32 %v2691, %v2703
        %v2705 = vpop.f32.mrf.mxu0
        %2706 = vdwg.mxu0
        %2707 = vmatpush.bf16.msra.mxu0 0
        %2708 = vmatpush.bf16.msra.mxu0 0
        %2709 = vmatpush.bf16.msra.mxu0 0
        %2710 = vmatpush.bf16.msra.mxu0 0
        %2711 = vmatpush.bf16.msra.mxu0 %v2657
        %2712 = vmatpush.bf16.msra.mxu0 %v2656
        %2713 = vmatpush.bf16.msra.mxu0 %v2655
        %2714 = vmatpush.bf16.msra.mxu0 %v2654
        %2715 = vmatmul.bf16.gmra.mxu0 %v2666
        %v2716 = vpop.f32.mrf.mxu0
        %v2717 = vadd.f32 %v2704, %v2716
        %v2718 = vpop.f32.mrf.mxu0
        %2719 = vdwg.mxu0
        %v2720 = vadd.f32 %v2502, %v2717
        %v2721 = vld [vmem:[#allocation4] sm:$0x3]
        %v2722 = vadd.f32 %v2721, %v2720
        %2723 = vst [vmem:[#allocation4] sm:$0x3] %v2722
        %p2724 = scmp.eq.s32.totalorder %s25, 1
        // Predicated region
        $region69: #{dqn_forward.1} parent=59 // pred_check
          %p2725 = pneg %p2724
        $region70: #{dqn_forward.1} parent=59 // pred_check_branch
          %2727 = sbr.rel (%p2725) target = $region72
        $region71: #{dqn_forward.1} parent=59 // pred_region
          %v2728 = vld [vmem:[#allocation4] sm:$0x3]
          %v2729 = vld [vmem:[%s4] sm:$0x1]
          %v2731 = vperm.slane %v2729, 0
          %v2733 = vmul.f32 %v2728, %v2731
          %v2734 = vld [vmem:[%s5] sm:$0x1]
          %v2736 = vperm.slane %v2734, 0
          %v2738 = vadd.f32 %v2733, %v2736
          %v2739 = vmax.f32 %v2738, 0.0
          %v2740 = vld [vmem:[%s6] sm:$0xff]
          %v2741 = vld [vmem:[%s6 + $0x8] sm:$0xff]
          %v2742 = vld [vmem:[%s6 + $0x10] sm:$0xff]
          %v2743 = vld [vmem:[%s6 + $0x18] sm:$0xff]
          %v2744 = vld [vmem:[%s6 + $0x20] sm:$0xff]
          %v2745 = vld [vmem:[%s6 + $0x28] sm:$0xff]
          %v2746 = vld [vmem:[%s6 + $0x30] sm:$0xff]
          %v2747 = vld [vmem:[%s6 + $0x38] sm:$0xff]
          %v2748 = vld [vmem:[%s6 + $0x40] sm:$0xff]
          %v2749 = vld [vmem:[%s6 + $0x48] sm:$0xff]
          %v2750 = vld [vmem:[%s6 + $0x50] sm:$0xff]
          %v2751 = vld [vmem:[%s6 + $0x58] sm:$0xff]
          %v2752 = vld [vmem:[%s6 + $0x60] sm:$0xff]
          %v2753 = vld [vmem:[%s6 + $0x68] sm:$0xff]
          %v2754 = vld [vmem:[%s6 + $0x70] sm:$0xff]
          %v2755 = vld [vmem:[%s6 + $0x78] sm:$0xff]
          %v2756 = vld [vmem:[%s7] sm:$0x1]
          %v2758 = vperm.slane %v2756, 0
          %2760 = vmatpush.msra.mxu0 %v2755
          %2761 = vmatpush.msra.mxu0 %v2754
          %2762 = vmatpush.msra.mxu0 %v2753
          %2763 = vmatpush.msra.mxu0 %v2752
          %2764 = vmatpush.msra.mxu0 %v2751
          %2765 = vmatpush.msra.mxu0 %v2750
          %2766 = vmatpush.msra.mxu0 %v2749
          %2767 = vmatpush.msra.mxu0 %v2748
          %2768 = vmatpush.msra.mxu0 %v2747
          %2769 = vmatpush.msra.mxu0 %v2746
          %2770 = vmatpush.msra.mxu0 %v2745
          %2771 = vmatpush.msra.mxu0 %v2744
          %2772 = vmatpush.msra.mxu0 %v2743
          %2773 = vmatpush.msra.mxu0 %v2742
          %2774 = vmatpush.msra.mxu0 %v2741
          %2775 = vmatpush.msra.mxu0 %v2740
          %2776 = vmatmul.f32.gmra.mxu0 %v2739
          %v2777 = vpop.f32.mrf.mxu0
          %v2778 = vadd.f32 %v2758, %v2777
          %2779 = vdwg.mxu0
          %v2780 = vmax.f32 %v2778, 0.0
          %v2781 = vld [vmem:[%s8] sm:$0xff]
          %v2782 = vld [vmem:[%s8 + $0x8] sm:$0xff]
          %v2783 = vld [vmem:[%s8 + $0x10] sm:$0xff]
          %v2784 = vld [vmem:[%s8 + $0x18] sm:$0xff]
          %v2785 = vld [vmem:[%s8 + $0x20] sm:$0xff]
          %v2786 = vld [vmem:[%s8 + $0x28] sm:$0xff]
          %v2787 = vld [vmem:[%s8 + $0x30] sm:$0xff]
          %v2788 = vld [vmem:[%s8 + $0x38] sm:$0xff]
          %v2789 = vld [vmem:[%s9] sm:$0x1]
          %v2791 = vperm.slane %v2789, 0
          %v2794 = vsel %vm1511, %v2780, 0
          %2796 = vmatpush.msra.mxu0 0.0
          %2797 = vmatpush.msra.mxu0 0.0
          %2798 = vmatpush.msra.mxu0 0.0
          %2799 = vmatpush.msra.mxu0 0.0
          %2800 = vmatpush.msra.mxu0 0.0
          %2801 = vmatpush.msra.mxu0 0.0
          %2802 = vmatpush.msra.mxu0 0.0
          %2803 = vmatpush.msra.mxu0 0.0
          %2804 = vmatpush.msra.mxu0 %v2788
          %2805 = vmatpush.msra.mxu0 %v2787
          %2806 = vmatpush.msra.mxu0 %v2786
          %2807 = vmatpush.msra.mxu0 %v2785
          %2808 = vmatpush.msra.mxu0 %v2784
          %2809 = vmatpush.msra.mxu0 %v2783
          %2810 = vmatpush.msra.mxu0 %v2782
          %2811 = vmatpush.msra.mxu0 %v2781
          %2812 = vmatmul.f32.gmra.mxu0 %v2794
          %v2813 = vpop.f32.mrf.mxu0
          %v2814 = vadd.f32 %v2791, %v2813
          %2815 = vdwg.mxu0
          %2816 = vst [vmem:[#allocation8] sm:$0x3] %v2814
        $region72: #{dqn_forward.1} parent=59 // pred_fallthru
          _
        // Predicated region
        $region73: #{dqn_forward.1} parent=59 // pred_check
          %p2817 = pneg %p253
        $region74: #{dqn_forward.1} parent=59 // pred_check_branch
          %2819 = sbr.rel (%p2817) target = $region76
        $region75: #{dqn_forward.1} parent=59 // pred_region
          %2821 = vsyncadd [#allocation7], 0
          %s2823 = sshll.u32 [#allocation8], 4
          %s2824 = int_to_ptr.vmem [resolvable:$true] %s2823
          %s2825 = sshll.u32 %s10, 4
          %s2826 = int_to_ptr.hbm [resolvable:$true] %s2825
          %2828 = dma.vmem_to_hbm [thread:$0]  %s2824, 32, %s2826, [#allocation7]
        $region76: #{dqn_forward.1} parent=59 // pred_fallthru
          _
        // Predicated region
        $region77: #{dqn_forward.1} parent=59 // pred_check
          %p2829 = pneg %p253
        $region78: #{dqn_forward.1} parent=59 // pred_check_branch
          %2831 = sbr.rel (%p2829) target = $region80
        $region79: #{dqn_forward.1} parent=59 // pred_region
          %2833 = dma.done [#allocation7], 32
        $region80: #{dqn_forward.1} parent=59 // pred_fallthru
          _
      $region60: #{dqn_forward.1} parent=5 // pred_fallthru
        _
      %p2834 = scmp.le.s32.totalorder 2, %s20
      // Predicated region
      $region81: #{dqn_forward.1} parent=5 // pred_check
        %p2835 = pneg %p2834
      $region82: #{dqn_forward.1} parent=5 // pred_check_branch
        %2837 = sbr.rel (%p2835) target = $region84
      $region83: #{dqn_forward.1} parent=5 // pred_region
        %s2838 = ssub.s32 %s20, 2
      $region84: #{dqn_forward.1} parent=5 // pred_fallthru
        _
    $region6: #{dqn_forward.1} parent=1 // loop_footer
      %s24 = sadd.s32 1, %s20
    $region7: #{dqn_forward.1} parent=1 // loop_footer_branch
      %19 = sbr.rel target = $region3
    $region8: #{dqn_forward.1} parent=1 // loop_exit
      _
    %2839 = vsyncpa [#allocation6], 1
    %s2840 = scalar_lea.sflag [#allocation6], 1
    %2841 = vsyncpa %s2840, 1
    %2842 = vsyncpa [#allocation7], 1
    %s2843 = scalar_lea.sflag [#allocation7], 1
    %2844 = vsyncpa %s2843, 1

</llo_original>
